<compile_context>
chip_gen: v6e
topology: v6e:2x2x1
jax: 0.10.0
libtpu: 0.0.40
codegen_flags: <defaults>
</compile_context>

<pallas_src>
import jax
import jax.numpy as jnp
from jax.experimental import pallas as pl
from jax.experimental.pallas import tpu as pltpu


def _interp_matrix(in_size, out_size, align_corners=True):
    """(out_size, in_size) 1-D linear interpolation matrix (torch semantics)."""
    if out_size == 1:
        src = jnp.zeros((1,), jnp.float32)
    elif align_corners:
        src = jnp.arange(out_size, dtype=jnp.float32) * (
            (in_size - 1) / (out_size - 1))
    else:
        src = (jnp.arange(out_size, dtype=jnp.float32) + 0.5) * (
            in_size / out_size) - 0.5
        src = jnp.clip(src, 0.0, float(in_size - 1))
    lo = jnp.clip(jnp.floor(src).astype(jnp.int32), 0, in_size - 1)
    hi = jnp.minimum(lo + 1, in_size - 1)
    w_hi = src - lo.astype(jnp.float32)
    w_lo = 1.0 - w_hi
    rows = jnp.arange(out_size)
    m = jnp.zeros((out_size, in_size), jnp.float32)
    m = m.at[rows, lo].add(w_lo)
    m = m.at[rows, hi].add(w_hi)
    return m


def _bilinear_kernel(x_ref, wh_ref, ww_ref, o_ref):
    # x_ref : (nc_block, H_in, W_in)   -- a few (n, c) slabs
    # wh_ref: (H_out, H_in)            -- resident across all grid steps
    # ww_ref: (W_in, W_out)            -- resident across all grid steps
    # o_ref : (nc_block, H_out, W_out) -- lane-dense output block
    wh = wh_ref[...]
    ww = ww_ref[...]
    for b in range(x_ref.shape[0]):  # small static unroll (nc_block <= 4)
        x = x_ref[b].astype(jnp.float32)                                  # (H_in, W_in)
        tmp = jnp.dot(x, ww, preferred_element_type=jnp.float32)          # (H_in, W_out)
        out = jnp.dot(wh, tmp, preferred_element_type=jnp.float32)        # (H_out, W_out)
        o_ref[b] = out.astype(o_ref.dtype)


def upsample_bilinear_pallas(x, size=(480, 640), align_corners=True,
                             max_out_block_bytes=4 << 20):
    """Equivalent of Upsample(size, mode='bilinear', align_corners).forward(x)."""
    N, C, H_in, W_in = x.shape
    H_out, W_out = size
    nc = N * C

    w_h = _interp_matrix(H_in, H_out, align_corners)        # (H_out, H_in)
    w_w = _interp_matrix(W_in, W_out, align_corners).T      # (W_in, W_out)

    # Slabs per grid step: largest divisor of N*C whose output block stays
    # under ~4 MiB, so double-buffered output fits the default scoped-VMEM
    # limit on all of v5e (16 MiB) / v6e (32 MiB) / v7x (32 MiB of 64 MiB).
    slab_bytes = H_out * W_out * x.dtype.itemsize
    nc_block = 1
    for d in range(1, nc + 1):
        if nc % d == 0 and d * slab_bytes <= max_out_block_bytes:
            nc_block = d
    grid = (nc // nc_block,)

    x_flat = jnp.reshape(x, (nc, H_in, W_in))

    out_flat = pl.pallas_call(
        _bilinear_kernel,
        out_shape=jax.ShapeDtypeStruct((nc, H_out, W_out), x.dtype),
        grid_spec=pl.GridSpec(
            grid=grid,
            in_specs=[
                pl.BlockSpec((nc_block, H_in, W_in), lambda i: (i, 0, 0)),
                pl.BlockSpec((H_out, H_in), lambda i: (0, 0)),
                pl.BlockSpec((W_in, W_out), lambda i: (0, 0)),
            ],
            out_specs=pl.BlockSpec((nc_block, H_out, W_out),
                                   lambda i: (i, 0, 0)),
        ),
        compiler_params=pltpu.CompilerParams(
            dimension_semantics=("parallel",)),
    )(x_flat, w_h, w_w)

    return jnp.reshape(out_flat, (N, C, H_out, W_out))


def _upsample_ref(x, size, align_corners=True):
    """Independent gather-based bilinear reference (torch interpolate semantics)."""
    N, C, H_in, W_in = x.shape
    H_out, W_out = size

    def src(in_s, out_s):
        if out_s == 1:
            return jnp.zeros((1,), jnp.float32)
        if align_corners:
            return jnp.arange(out_s, dtype=jnp.float32) * ((in_s - 1) / (out_s - 1))
        s = (jnp.arange(out_s, dtype=jnp.float32) + 0.5) * (in_s / out_s) - 0.5
        return jnp.clip(s, 0.0, float(in_s - 1))

    sy = src(H_in, H_out)
    sx = src(W_in, W_out)
    y0 = jnp.clip(jnp.floor(sy).astype(jnp.int32), 0, H_in - 1)
    y1 = jnp.minimum(y0 + 1, H_in - 1)
    x0 = jnp.clip(jnp.floor(sx).astype(jnp.int32), 0, W_in - 1)
    x1 = jnp.minimum(x0 + 1, W_in - 1)
    wy = (sy - y0.astype(jnp.float32))[None, None, :, None]
    wx = (sx - x0.astype(jnp.float32))[None, None, None, :]

    def gather(yi, xi):
        return x[:, :, yi, :][:, :, :, xi]

    return (gather(y0, x0) * (1 - wy) * (1 - wx)
            + gather(y0, x1) * (1 - wy) * wx
            + gather(y1, x0) * wy * (1 - wx)
            + gather(y1, x1) * wy * wx)


if __name__ == "__main__":
    key = jax.random.PRNGKey(0)
    # Small NCHW input; output size is the module's default (480, 640).
    x = jax.random.normal(key, (2, 4, 16, 16), dtype=jnp.float32)
    size = (480, 640)

    y = upsample_bilinear_pallas(x, size=size, align_corners=True)
    y = jax.block_until_ready(y)

    ref = _upsample_ref(x, size, align_corners=True)
    assert y.shape == (2, 4, 480, 640), y.shape
    assert y.dtype == x.dtype
    max_err = float(jnp.max(jnp.abs(y - ref)))
    assert max_err < 1e-4, max_err

    # TODO(synk): only 4-D NCHW 'bilinear' is implemented; other interpolate
    # modes ('nearest', 'bicubic', 'trilinear') are not covered by this kernel.
    print("KERNEL_OK")
</pallas_src>

<mosaic_0001>
module attributes {stable_mosaic.version = 11 : i64} {
  func.func @_bilinear_kernel(%arg0: i32, %arg1: memref<2x16x16xf32, #tpu.memory_space<vmem>>, %arg2: memref<480x16xf32, #tpu.memory_space<vmem>>, %arg3: memref<16x640xf32, #tpu.memory_space<vmem>>, %arg4: memref<2x480x640xf32, #tpu.memory_space<vmem>>) attributes {dimension_semantics = [#tpu.dimension_semantics<parallel>], iteration_bounds = array<i64: 4>, scalar_prefetch = 0 : i64, scratch_operands = 0 : i64, tpu.core_type = #tpu.core_type<tc>, window_params = [{transform_indices = @transform_0, window_bounds = array<i64: 2, 16, 16>}, {pipeline_mode = #tpu.pipeline_mode<synchronous>, transform_indices = @transform_1, window_bounds = array<i64: 480, 16>}, {pipeline_mode = #tpu.pipeline_mode<synchronous>, transform_indices = @transform_2, window_bounds = array<i64: 16, 640>}, {transform_indices = @transform_3, window_bounds = array<i64: 2, 480, 640>}]} {
    %c0 = arith.constant 0 : index
    %c0_0 = arith.constant 0 : index
    %0 = vector.load %arg2[%c0, %c0_0] : memref<480x16xf32, #tpu.memory_space<vmem>>, vector<480x16xf32>
    %c0_1 = arith.constant 0 : index
    %c0_2 = arith.constant 0 : index
    %1 = vector.load %arg3[%c0_1, %c0_2] : memref<16x640xf32, #tpu.memory_space<vmem>>, vector<16x640xf32>
    %c0_3 = arith.constant 0 : index
    %c0_4 = arith.constant 0 : index
    %c0_5 = arith.constant 0 : index
    %2 = vector.load %arg1[%c0_3, %c0_4, %c0_5] : memref<2x16x16xf32, #tpu.memory_space<vmem>>, vector<1x16x16xf32>
    %3 = vector.shape_cast %2 : vector<1x16x16xf32> to vector<16x16xf32>
    %cst = arith.constant dense<0.000000e+00> : vector<16x640xf32>
    %4 = tpu.matmul %3, %1, %cst {dimension_numbers = #tpu.dot_dimension_numbers<[1], [0], [0], [1], [0, 0, 1, 1], [], []>} : vector<16x16xf32>, vector<16x640xf32>, vector<16x640xf32> -> vector<16x640xf32>
    %cst_6 = arith.constant dense<0.000000e+00> : vector<480x640xf32>
    %5 = tpu.matmul %0, %4, %cst_6 {dimension_numbers = #tpu.dot_dimension_numbers<[1], [0], [0], [1], [0, 0, 1, 1], [], []>} : vector<480x16xf32>, vector<16x640xf32>, vector<480x640xf32> -> vector<480x640xf32>
    %c0_7 = arith.constant 0 : index
    %c0_8 = arith.constant 0 : index
    %c0_9 = arith.constant 0 : index
    %6 = vector.load %arg4[%c0_7, %c0_8, %c0_9] : memref<2x480x640xf32, #tpu.memory_space<vmem>>, vector<1x480x640xf32>
    %7 = vector.shape_cast %6 : vector<1x480x640xf32> to vector<480x640xf32>
    %8 = vector.shape_cast %5 : vector<480x640xf32> to vector<1x480x640xf32>
    tpu.vector_store %arg4[%c0_7, %c0_8, %c0_9], %8 {strides = array<i32>} : memref<2x480x640xf32, #tpu.memory_space<vmem>>, vector<1x480x640xf32>,
    %c1 = arith.constant 1 : index
    %c0_10 = arith.constant 0 : index
    %c0_11 = arith.constant 0 : index
    %9 = vector.load %arg1[%c1, %c0_10, %c0_11] : memref<2x16x16xf32, #tpu.memory_space<vmem>>, vector<1x16x16xf32>
    %10 = vector.shape_cast %9 : vector<1x16x16xf32> to vector<16x16xf32>
    %cst_12 = arith.constant dense<0.000000e+00> : vector<16x640xf32>
    %11 = tpu.matmul %10, %1, %cst_12 {dimension_numbers = #tpu.dot_dimension_numbers<[1], [0], [0], [1], [0, 0, 1, 1], [], []>} : vector<16x16xf32>, vector<16x640xf32>, vector<16x640xf32> -> vector<16x640xf32>
    %cst_13 = arith.constant dense<0.000000e+00> : vector<480x640xf32>
    %12 = tpu.matmul %0, %11, %cst_13 {dimension_numbers = #tpu.dot_dimension_numbers<[1], [0], [0], [1], [0, 0, 1, 1], [], []>} : vector<480x16xf32>, vector<16x640xf32>, vector<480x640xf32> -> vector<480x640xf32>
    %c1_14 = arith.constant 1 : index
    %c0_15 = arith.constant 0 : index
    %c0_16 = arith.constant 0 : index
    %13 = vector.load %arg4[%c1_14, %c0_15, %c0_16] : memref<2x480x640xf32, #tpu.memory_space<vmem>>, vector<1x480x640xf32>
    %14 = vector.shape_cast %13 : vector<1x480x640xf32> to vector<480x640xf32>
    %15 = vector.shape_cast %12 : vector<480x640xf32> to vector<1x480x640xf32>
    tpu.vector_store %arg4[%c1_14, %c0_15, %c0_16], %15 {strides = array<i32>} : memref<2x480x640xf32, #tpu.memory_space<vmem>>, vector<1x480x640xf32>,
    return
  }
  func.func @transform_0(%arg0: i32) -> (i32, i32, i32) {
    %c0_i32 = arith.constant 0 : i32
    %c0_i32_0 = arith.constant 0 : i32
    %c0_i32_1 = arith.constant 0 : i32
    return %arg0, %c0_i32, %c0_i32_0 : i32, i32, i32
  }
  func.func @transform_1(%arg0: i32) -> (i32, i32) {
    %c0_i32 = arith.constant 0 : i32
    %c0_i32_0 = arith.constant 0 : i32
    %c0_i32_1 = arith.constant 0 : i32
    return %c0_i32, %c0_i32_0 : i32, i32
  }
  func.func @transform_2(%arg0: i32) -> (i32, i32) {
    %c0_i32 = arith.constant 0 : i32
    %c0_i32_0 = arith.constant 0 : i32
    %c0_i32_1 = arith.constant 0 : i32
    return %c0_i32, %c0_i32_0 : i32, i32
  }
  func.func @transform_3(%arg0: i32) -> (i32, i32, i32) {
    %c0_i32 = arith.constant 0 : i32
    %c0_i32_0 = arith.constant 0 : i32
    %c0_i32_1 = arith.constant 0 : i32
    return %arg0, %c0_i32, %c0_i32_0 : i32, i32, i32
  }
}

</mosaic_0001>

<llo_original>
// kernel: tpu_custom_call.1
$region0: #{tpu_custom_call.1}
  #allocation0 [shape = 'u32[]', space=smem, size = 0x4, offset = 0x4, fixed_abs, tag = 'smem constant byte address 0x4 - core index']
  #allocation1 [shape = 'u32[144,128]{1,0:T(1,128)}', space=vmem, size = 0x12000, scoped, tag = 'internal scratch']
  %s0 = inlined_call_operand.hbm [shape: f32[8,16,16], index: 0, kind: input, shape index: {}]
  %s1 = inlined_call_operand.vmem [shape: f32[480,16], index: 1, kind: input, shape index: {}]
  %s2 = inlined_call_operand.hbm [shape: f32[16,640], index: 2, kind: input, shape index: {}]
  %s3 = inlined_call_operand.hbm [shape: f32[8,480,640], index: 3, kind: output, shape index: {}]
  %s4 = sld [smem:[#allocation0]]
  $region53: #{tpu_custom_call.1} parent=0
    _
  %s6 = ssub.s32 1, %s4
  %s7 = scalar_select 0, %s6, %s4
  $region1: #{tpu_custom_call.1} parent=0
    #allocation2 [shape = 'u8[32768]{0}', space=vmem, size = 0x8000, scoped, tag = 'input window, operand 0']
    #allocation3 [shape = 's32[2]{0}', space=sflag, size = 0x8, scoped, tag = 'scoped memory for tpu_custom_call.1']
    #allocation4 [shape = 's32[2]{0}', space=sflag, size = 0x8, scoped, tag = 'scoped memory for tpu_custom_call.1']
    #allocation5 [shape = 'u8[40960]{0}', space=vmem, size = 0xa000, scoped, tag = 'input window, operand 2, single buffered']
    #allocation6 [shape = 's32[1]{0}', space=sflag, size = 0x4, scoped, tag = 'scoped memory for tpu_custom_call.1']
    #allocation7 [shape = 'u8[4915200]{0}', space=vmem, size = 0x4b0000, scoped, tag = 'output window, operand 0']
    %8 = vsyncpa [#allocation3], 0
    %s9 = scalar_lea.sflag [#allocation3], 1
    %10 = vsyncpa %s9, 0
    %11 = vsyncpa [#allocation6], 0
    %12 = vsyncpa [#allocation4], 0
    %s13 = scalar_lea.sflag [#allocation4], 1
    %14 = vsyncpa %s13, 0
    loop: start=0, step=1, limit=6
    $region2: #{tpu_custom_call.1} parent=1 // loop_pre_header
      _
    $region3: #{tpu_custom_call.1} parent=1 // loop_header
      %s16 = sphi 0, %s20
      %p17 = scmp.ge.s32.totalorder %s16, 6
      %s26 = sphi 0, %s28
      %s29 = sphi 0, %s26
      %s30 = sphi 0, %s29
      %s46 = sphi 0, %s30
      %s50 = sphi 0, %s50
      %s52 = sphi 0, %s50
      %s53 = sphi 0, %s52
      %s67 = sphi 0, %s53
      %s71 = sphi 0, %s71
      %s73 = sphi 0, %s71
      %s74 = sphi 0, %s73
      %s88 = sphi 0, %s74
      %s94 = sphi 0, %s96
      %s97 = sphi 0, %s94
      %s98 = sphi 0, %s97
      %s114 = sphi 0, %s98
    $region4: #{tpu_custom_call.1} parent=1 // loop_header_branch
      %19 = sbr.rel (%p17) target = $region8
    $region5: #{tpu_custom_call.1} parent=1 // loop_body
      %s21 = ssub.s32 %s16, 1
      %s22 = ssub.s32 %s16, 2
      %s23 = sadd.s32 %s16, 1
      %s24 = ssub.s32 %s16, %s23
      %p25 = scmp.eq.s32.totalorder %s24, 0
      %s27 = sadd.s32 %s26, 1
      %s28 = scalar_select %p25, %s26, %s27
      %p31 = pneg %p25
      %p32 = scmp.eq.s32.totalorder %s16, 3
      %p33 = por %p31, %p32
      %p34 = scmp.ne.s32.totalorder %s26, %s29
      %p35 = scmp.eq.s32.totalorder %s16, 0
      %p36 = por %p34, %p35
      %p37 = scmp.ne.s32.totalorder %s26, %s29
      %p38 = scmp.eq.s32.totalorder %s21, 3
      %p39 = por %p37, %p38
      %p40 = scmp.ne.s32.totalorder %s29, %s30
      %p41 = scmp.eq.s32.totalorder %s21, 0
      %p42 = por %p40, %p41
      %p43 = scmp.ne.s32.totalorder %s29, %s30
      %p44 = scmp.eq.s32.totalorder %s22, 3
      %p45 = por %p43, %p44
      %p47 = scmp.ne.s32.totalorder %s30, %s46
      %p48 = scmp.eq.s32.totalorder %s22, 0
      %p49 = por %p47, %p48
      %s51 = sadd.s32 %s50, 1
      %p54 = scmp.eq.s32.totalorder %s16, 3
      %p55 = scmp.ne.s32.totalorder %s50, %s52
      %p56 = scmp.eq.s32.totalorder %s16, 0
      %p57 = por %p55, %p56
      %p58 = scmp.ne.s32.totalorder %s50, %s52
      %p59 = scmp.eq.s32.totalorder %s21, 3
      %p60 = por %p58, %p59
      %p61 = scmp.ne.s32.totalorder %s52, %s53
      %p62 = scmp.eq.s32.totalorder %s21, 0
      %p63 = por %p61, %p62
      %p64 = scmp.ne.s32.totalorder %s52, %s53
      %p65 = scmp.eq.s32.totalorder %s22, 3
      %p66 = por %p64, %p65
      %p68 = scmp.ne.s32.totalorder %s53, %s67
      %p69 = scmp.eq.s32.totalorder %s22, 0
      %p70 = por %p68, %p69
      %s72 = sadd.s32 %s71, 1
      %p75 = scmp.eq.s32.totalorder %s16, 3
      %p76 = scmp.ne.s32.totalorder %s71, %s73
      %p77 = scmp.eq.s32.totalorder %s16, 0
      %p78 = por %p76, %p77
      %p79 = scmp.ne.s32.totalorder %s71, %s73
      %p80 = scmp.eq.s32.totalorder %s21, 3
      %p81 = por %p79, %p80
      %p82 = scmp.ne.s32.totalorder %s73, %s74
      %p83 = scmp.eq.s32.totalorder %s21, 0
      %p84 = por %p82, %p83
      %p85 = scmp.ne.s32.totalorder %s73, %s74
      %p86 = scmp.eq.s32.totalorder %s22, 3
      %p87 = por %p85, %p86
      %p89 = scmp.ne.s32.totalorder %s74, %s88
      %p90 = scmp.eq.s32.totalorder %s22, 0
      %p91 = por %p89, %p90
      %s92 = ssub.s32 %s16, %s23
      %p93 = scmp.eq.s32.totalorder %s92, 0
      %s95 = sadd.s32 %s94, 1
      %s96 = scalar_select %p93, %s94, %s95
      %p99 = pneg %p93
      %p100 = scmp.eq.s32.totalorder %s16, 3
      %p101 = por %p99, %p100
      %p102 = scmp.ne.s32.totalorder %s94, %s97
      %p103 = scmp.eq.s32.totalorder %s16, 0
      %p104 = por %p102, %p103
      %p105 = scmp.ne.s32.totalorder %s94, %s97
      %p106 = scmp.eq.s32.totalorder %s21, 3
      %p107 = por %p105, %p106
      %p108 = scmp.ne.s32.totalorder %s97, %s98
      %p109 = scmp.eq.s32.totalorder %s21, 0
      %p110 = por %p108, %p109
      %p111 = scmp.ne.s32.totalorder %s97, %s98
      %p112 = scmp.eq.s32.totalorder %s22, 3
      %p113 = por %p111, %p112
      %p115 = scmp.ne.s32.totalorder %s98, %s114
      %p116 = scmp.eq.s32.totalorder %s22, 0
      %p117 = por %p115, %p116
      %p118 = scmp.le.s32.totalorder 1, %s16
      %p119 = scmp.lt.s32.totalorder %s16, 5
      %p120 = pnand %p118, %p119
      %p121 = pneg %p120
      // Predicated region
      $region9: #{tpu_custom_call.1} parent=5 // pred_check
        _
      $region10: #{tpu_custom_call.1} parent=5 // pred_check_branch
        %123 = sbr.rel (%p120) target = $region12
      $region11: #{tpu_custom_call.1} parent=5 // pred_region
        %s124 = ssub.s32 %s16, 1
        // Predicated region
        $region13: #{tpu_custom_call.1} parent=11 // pred_check
          %p125 = pneg %p63
        $region14: #{tpu_custom_call.1} parent=11 // pred_check_branch
          %127 = sbr.rel (%p125) target = $region16
        $region15: #{tpu_custom_call.1} parent=11 // pred_region
          _
        $region16: #{tpu_custom_call.1} parent=11 // pred_fallthru
          _
        // Predicated region
        $region17: #{tpu_custom_call.1} parent=11 // pred_check
          %p128 = pneg %p84
        $region18: #{tpu_custom_call.1} parent=11 // pred_check_branch
          %130 = sbr.rel (%p128) target = $region20
        $region19: #{tpu_custom_call.1} parent=11 // pred_region
          %s132 = ssub.s32 1280, 1280
          %133 = vsyncadd [#allocation6], %s132
          %s134 = sshll.u32 [#allocation5], 4
          %s135 = int_to_ptr.vmem [resolvable:$true] %s134
          %140 = dma.hbm_to_vmem [thread:$0]  %s2, 1280, %s135, [#allocation6], 640, 640, 40
        $region20: #{tpu_custom_call.1} parent=11 // pred_fallthru
          _
      $region12: #{tpu_custom_call.1} parent=5 // pred_fallthru
        _
      %p141 = scmp.lt.s32.totalorder %s16, 4
      // Predicated region
      $region21: #{tpu_custom_call.1} parent=5 // pred_check
        %p142 = pneg %p141
      $region22: #{tpu_custom_call.1} parent=5 // pred_check_branch
        %144 = sbr.rel (%p142) target = $region24
      $region23: #{tpu_custom_call.1} parent=5 // pred_region
        // Predicated region
        $region25: #{tpu_custom_call.1} parent=23 // pred_check
          %p145 = pneg %p36
        $region26: #{tpu_custom_call.1} parent=23 // pred_check_branch
          %147 = sbr.rel (%p145) target = $region28
        $region27: #{tpu_custom_call.1} parent=23 // pred_region
          %s148 = sand.u32 %s26, 1
          %s149 = scalar_lea.sflag [#allocation3], %s148
          %s150 = sand.u32 %s26, 1
          %s151 = smul.addr %s150, 32
          %s152 = scalar_lea.vmem [#allocation2], %s151
          %s153 = smul.u32 2, %s16
          %s155 = ssub.s32 512, 512
          %156 = vsyncadd %s149, %s155
          %s157 = smul.addr %s153, 2
          %s158 = smul.addr %s157, 128
          %s159 = scalar_lea.hbm %s0, %s158
          %s160 = sshll.u32 %s152, 4
          %s161 = int_to_ptr.vmem [resolvable:$true] %s160
          %166 = dma.hbm_to_vmem [thread:$0]  %s159, 512, %s161, %s149, 128, 128, 8
        $region28: #{tpu_custom_call.1} parent=23 // pred_fallthru
          _
      $region24: #{tpu_custom_call.1} parent=5 // pred_fallthru
        _
      %p167 = scmp.le.s32.totalorder 1, %s16
      %p168 = scmp.lt.s32.totalorder %s16, 5
      %p169 = pnand %p167, %p168
      %p170 = pneg %p169
      // Predicated region
      $region29: #{tpu_custom_call.1} parent=5 // pred_check
        _
      $region30: #{tpu_custom_call.1} parent=5 // pred_check_branch
        %172 = sbr.rel (%p169) target = $region32
      $region31: #{tpu_custom_call.1} parent=5 // pred_region
        %s173 = ssub.s32 %s16, 1
        %s174 = sand.u32 %s29, 1
        %s175 = scalar_lea.sflag [#allocation3], %s174
        %s176 = sand.u32 %s29, 1
        %s177 = smul.addr %s176, 32
        %s178 = scalar_lea.vmem [#allocation2], %s177
        // Predicated region
        $region33: #{tpu_custom_call.1} parent=31 // pred_check
          %p179 = pneg %p42
        $region34: #{tpu_custom_call.1} parent=31 // pred_check_branch
          %181 = sbr.rel (%p179) target = $region36
        $region35: #{tpu_custom_call.1} parent=31 // pred_region
          %182 = dma.done %s175, 512
        $region36: #{tpu_custom_call.1} parent=31 // pred_fallthru
          _
        // Predicated region
        $region37: #{tpu_custom_call.1} parent=31 // pred_check
          %p183 = pneg %p84
        $region38: #{tpu_custom_call.1} parent=31 // pred_check_branch
          %185 = sbr.rel (%p183) target = $region40
        $region39: #{tpu_custom_call.1} parent=31 // pred_region
          %186 = dma.done [#allocation6], 1280
        $region40: #{tpu_custom_call.1} parent=31 // pred_fallthru
          _
        %s187 = sand.u32 %s29, 1
        %s188 = scalar_lea.sflag [#allocation3], %s187
        %s189 = sand.u32 %s29, 1
        %s190 = smul.addr %s189, 32
        %s191 = scalar_lea.vmem [#allocation2], %s190
        %p192 = pneg %p42
        %p193 = pneg %p39
        %p194 = pneg %p63
        %p195 = pneg %p60
        %p196 = pneg %p84
        %p197 = pneg %p81
        %p198 = pneg %p110
        %p199 = pneg %p107
        %s200 = sand.u32 %s97, 1
        %s201 = scalar_lea.sflag [#allocation4], %s200
        %s202 = sand.u32 %s97, 1
        %s203 = smul.addr %s202, 4800
        %s204 = scalar_lea.vmem [#allocation7], %s203
        %s205 = smul.u32 2, %s21
        %s206 = smul.u32 2, %s21
        %v207 = vld [vmem:[%s1] sm:$0xff]
        %v208 = vld [vmem:[%s1 + $0x8] sm:$0xff]
        %v209 = vld [vmem:[%s1 + $0x10] sm:$0xff]
        %v210 = vld [vmem:[%s1 + $0x18] sm:$0xff]
        %v211 = vld [vmem:[%s1 + $0x20] sm:$0xff]
        %v212 = vld [vmem:[%s1 + $0x28] sm:$0xff]
        %v213 = vld [vmem:[%s1 + $0x30] sm:$0xff]
        %v214 = vld [vmem:[%s1 + $0x38] sm:$0xff]
        %v215 = vld [vmem:[%s1 + $0x40] sm:$0xff]
        %v216 = vld [vmem:[%s1 + $0x48] sm:$0xff]
        %v217 = vld [vmem:[%s1 + $0x50] sm:$0xff]
        %v218 = vld [vmem:[%s1 + $0x58] sm:$0xff]
        %v219 = vld [vmem:[%s1 + $0x60] sm:$0xff]
        %v220 = vld [vmem:[%s1 + $0x68] sm:$0xff]
        %v221 = vld [vmem:[%s1 + $0x70] sm:$0xff]
        %v222 = vld [vmem:[%s1 + $0x78] sm:$0xff]
        %v223 = vld [vmem:[%s1 + $0x80] sm:$0xff]
        %v224 = vld [vmem:[%s1 + $0x88] sm:$0xff]
        %v225 = vld [vmem:[%s1 + $0x90] sm:$0xff]
        %v226 = vld [vmem:[%s1 + $0x98] sm:$0xff]
        %v227 = vld [vmem:[%s1 + $0xa0] sm:$0xff]
        %v228 = vld [vmem:[%s1 + $0xa8] sm:$0xff]
        %v229 = vld [vmem:[%s1 + $0xb0] sm:$0xff]
        %v230 = vld [vmem:[%s1 + $0xb8] sm:$0xff]
        %v231 = vld [vmem:[%s1 + $0xc0] sm:$0xff]
        %v232 = vld [vmem:[%s1 + $0xc8] sm:$0xff]
        %v233 = vld [vmem:[%s1 + $0xd0] sm:$0xff]
        %v234 = vld [vmem:[%s1 + $0xd8] sm:$0xff]
        %v235 = vld [vmem:[%s1 + $0xe0] sm:$0xff]
        %v236 = vld [vmem:[%s1 + $0xe8] sm:$0xff]
        %v237 = vld [vmem:[%s1 + $0xf0] sm:$0xff]
        %v238 = vld [vmem:[%s1 + $0xf8] sm:$0xff]
        %v239 = vld [vmem:[%s1 + $0x100] sm:$0xff]
        %v240 = vld [vmem:[%s1 + $0x108] sm:$0xff]
        %v241 = vld [vmem:[%s1 + $0x110] sm:$0xff]
        %v242 = vld [vmem:[%s1 + $0x118] sm:$0xff]
        %v243 = vld [vmem:[%s1 + $0x120] sm:$0xff]
        %v244 = vld [vmem:[%s1 + $0x128] sm:$0xff]
        %v245 = vld [vmem:[%s1 + $0x130] sm:$0xff]
        %v246 = vld [vmem:[%s1 + $0x138] sm:$0xff]
        %v247 = vld [vmem:[%s1 + $0x140] sm:$0xff]
        %v248 = vld [vmem:[%s1 + $0x148] sm:$0xff]
        %v249 = vld [vmem:[%s1 + $0x150] sm:$0xff]
        %v250 = vld [vmem:[%s1 + $0x158] sm:$0xff]
        %v251 = vld [vmem:[%s1 + $0x160] sm:$0xff]
        %v252 = vld [vmem:[%s1 + $0x168] sm:$0xff]
        %v253 = vld [vmem:[%s1 + $0x170] sm:$0xff]
        %v254 = vld [vmem:[%s1 + $0x178] sm:$0xff]
        %v255 = vld [vmem:[%s1 + $0x180] sm:$0xff]
        %v256 = vld [vmem:[%s1 + $0x188] sm:$0xff]
        %v257 = vld [vmem:[%s1 + $0x190] sm:$0xff]
        %v258 = vld [vmem:[%s1 + $0x198] sm:$0xff]
        %v259 = vld [vmem:[%s1 + $0x1a0] sm:$0xff]
        %v260 = vld [vmem:[%s1 + $0x1a8] sm:$0xff]
        %v261 = vld [vmem:[%s1 + $0x1b0] sm:$0xff]
        %v262 = vld [vmem:[%s1 + $0x1b8] sm:$0xff]
        %v263 = vld [vmem:[%s1 + $0x1c0] sm:$0xff]
        %v264 = vld [vmem:[%s1 + $0x1c8] sm:$0xff]
        %v265 = vld [vmem:[%s1 + $0x1d0] sm:$0xff]
        %v266 = vld [vmem:[%s1 + $0x1d8] sm:$0xff]
        %v267 = vld [vmem:[#allocation5] sm:$0xff]
        %v268 = vld [vmem:[#allocation5 + $0x8] sm:$0xff]
        %v269 = vld [vmem:[#allocation5 + $0x10] sm:$0xff]
        %v270 = vld [vmem:[#allocation5 + $0x18] sm:$0xff]
        %v271 = vld [vmem:[#allocation5 + $0x20] sm:$0xff]
        %v272 = vld [vmem:[#allocation5 + $0x28] sm:$0xff]
        %v273 = vld [vmem:[#allocation5 + $0x30] sm:$0xff]
        %v274 = vld [vmem:[#allocation5 + $0x38] sm:$0xff]
        %v275 = vld [vmem:[#allocation5 + $0x40] sm:$0xff]
        %v276 = vld [vmem:[#allocation5 + $0x48] sm:$0xff]
        %v277 = vld [vmem:[%s178] sm:$0xff]
        %v278 = vld [vmem:[%s178 + $0x8] sm:$0xff]
        %vm279 = vcmask 130048
        %v281 = vsel %vm279, %v277, 0
        %v284 = vsel %vm279, %v278, 0
        %286 = vmatprep.subr.mxu0 0.0
        %287 = vmatpush1.msra.mxu0 0.0
        %288 = vmatprep.subr.mxu0 0.0
        %289 = vmatpush1.msra.mxu0 0.0
        %290 = vmatprep.subr.mxu0 0.0
        %291 = vmatpush1.msra.mxu0 0.0
        %292 = vmatprep.subr.mxu0 0.0
        %293 = vmatpush1.msra.mxu0 0.0
        %294 = vmatprep.subr.mxu0 0.0
        %295 = vmatpush1.msra.mxu0 0.0
        %296 = vmatprep.subr.mxu0 0.0
        %297 = vmatpush1.msra.mxu0 0.0
        %298 = vmatprep.subr.mxu0 0.0
        %299 = vmatpush1.msra.mxu0 0.0
        %300 = vmatprep.subr.mxu0 0.0
        %301 = vmatpush1.msra.mxu0 0.0
        %302 = vmatprep.subr.mxu0 0.0
        %303 = vmatpush1.msra.mxu0 0.0
        %304 = vmatprep.subr.mxu0 0.0
        %305 = vmatpush1.msra.mxu0 0.0
        %306 = vmatprep.subr.mxu0 0.0
        %307 = vmatpush1.msra.mxu0 0.0
        %308 = vmatprep.subr.mxu0 0.0
        %309 = vmatpush1.msra.mxu0 0.0
        %310 = vmatprep.subr.mxu0 0.0
        %311 = vmatpush1.msra.mxu0 0.0
        %312 = vmatprep.subr.mxu0 0.0
        %313 = vmatpush1.msra.mxu0 0.0
        %314 = vmatprep.subr.mxu0 %v273
        %315 = vmatpush1.msra.mxu0 %v272
        %316 = vmatprep.subr.mxu0 %v268
        %317 = vmatpush1.msra.mxu0 %v267
        %318 = vmatprep.subr.mxu0 0.0
        %319 = vmatpush2.msra.mxu0 0.0
        %320 = vmatprep.subr.mxu0 0.0
        %321 = vmatpush2.msra.mxu0 0.0
        %322 = vmatprep.subr.mxu0 0.0
        %323 = vmatpush2.msra.mxu0 0.0
        %324 = vmatprep.subr.mxu0 0.0
        %325 = vmatpush2.msra.mxu0 0.0
        %326 = vmatprep.subr.mxu0 0.0
        %327 = vmatpush2.msra.mxu0 0.0
        %328 = vmatprep.subr.mxu0 0.0
        %329 = vmatpush2.msra.mxu0 0.0
        %330 = vmatprep.subr.mxu0 0.0
        %331 = vmatpush2.msra.mxu0 0.0
        %332 = vmatprep.subr.mxu0 0.0
        %333 = vmatpush2.msra.mxu0 0.0
        %334 = vmatprep.subr.mxu0 0.0
        %335 = vmatpush2.msra.mxu0 0.0
        %336 = vmatprep.subr.mxu0 0.0
        %337 = vmatpush2.msra.mxu0 0.0
        %338 = vmatprep.subr.mxu0 0.0
        %339 = vmatpush2.msra.mxu0 0.0
        %340 = vmatprep.subr.mxu0 0.0
        %341 = vmatpush2.msra.mxu0 0.0
        %342 = vmatprep.subr.mxu0 0.0
        %343 = vmatpush2.msra.mxu0 0.0
        %344 = vmatprep.subr.mxu0 0.0
        %345 = vmatpush2.msra.mxu0 0.0
        %346 = vmatprep.subr.mxu0 0.0
        %347 = vmatpush2.msra.mxu0 0.0
        %348 = vmatprep.subr.mxu0 0.0
        %349 = vmatpush2.msra.mxu0 0.0
        %350 = vmatprep.mubr.f32.mxu0 0.0
        %351 = vmatmul.mubr.f32.gmra.mxu0 %v281
        %v352 = vpop.f32.mrf.mxu0
        %v353 = vadd.f32 0.0, %v352
        %v354 = vpop.f32.mrf.mxu0
        %v355 = vadd.f32 0.0, %v354
        %356 = vmatprep.mubr.f32.mxu0 0.0
        %357 = vmatmul.mubr.f32.gmra.mxu0 %v284
        %v358 = vpop.f32.mrf.mxu0
        %v359 = vadd.f32 0.0, %v358
        %v360 = vpop.f32.mrf.mxu0
        %v361 = vadd.f32 0.0, %v360
        %362 = vdwg.mxu0
        %363 = vmatprep.subr.mxu0 0.0
        %364 = vmatpush1.msra.mxu0 0.0
        %365 = vmatprep.subr.mxu0 0.0
        %366 = vmatpush1.msra.mxu0 0.0
        %367 = vmatprep.subr.mxu0 0.0
        %368 = vmatpush1.msra.mxu0 0.0
        %369 = vmatprep.subr.mxu0 0.0
        %370 = vmatpush1.msra.mxu0 0.0
        %371 = vmatprep.subr.mxu0 0.0
        %372 = vmatpush1.msra.mxu0 0.0
        %373 = vmatprep.subr.mxu0 0.0
        %374 = vmatpush1.msra.mxu0 0.0
        %375 = vmatprep.subr.mxu0 0.0
        %376 = vmatpush1.msra.mxu0 0.0
        %377 = vmatprep.subr.mxu0 0.0
        %378 = vmatpush1.msra.mxu0 0.0
        %379 = vmatprep.subr.mxu0 0.0
        %380 = vmatpush1.msra.mxu0 0.0
        %381 = vmatprep.subr.mxu0 0.0
        %382 = vmatpush1.msra.mxu0 0.0
        %383 = vmatprep.subr.mxu0 0.0
        %384 = vmatpush1.msra.mxu0 0.0
        %385 = vmatprep.subr.mxu0 0.0
        %386 = vmatpush1.msra.mxu0 0.0
        %387 = vmatprep.subr.mxu0 0.0
        %388 = vmatpush1.msra.mxu0 0.0
        %389 = vmatprep.subr.mxu0 0.0
        %390 = vmatpush1.msra.mxu0 0.0
        %391 = vmatprep.subr.mxu0 %v275
        %392 = vmatpush1.msra.mxu0 %v274
        %393 = vmatprep.subr.mxu0 %v270
        %394 = vmatpush1.msra.mxu0 %v269
        %395 = vmatprep.subr.mxu0 0.0
        %396 = vmatpush2.msra.mxu0 0.0
        %397 = vmatprep.subr.mxu0 0.0
        %398 = vmatpush2.msra.mxu0 0.0
        %399 = vmatprep.subr.mxu0 0.0
        %400 = vmatpush2.msra.mxu0 0.0
        %401 = vmatprep.subr.mxu0 0.0
        %402 = vmatpush2.msra.mxu0 0.0
        %403 = vmatprep.subr.mxu0 0.0
        %404 = vmatpush2.msra.mxu0 0.0
        %405 = vmatprep.subr.mxu0 0.0
        %406 = vmatpush2.msra.mxu0 0.0
        %407 = vmatprep.subr.mxu0 0.0
        %408 = vmatpush2.msra.mxu0 0.0
        %409 = vmatprep.subr.mxu0 0.0
        %410 = vmatpush2.msra.mxu0 0.0
        %411 = vmatprep.subr.mxu0 0.0
        %412 = vmatpush2.msra.mxu0 0.0
        %413 = vmatprep.subr.mxu0 0.0
        %414 = vmatpush2.msra.mxu0 0.0
        %415 = vmatprep.subr.mxu0 0.0
        %416 = vmatpush2.msra.mxu0 0.0
        %417 = vmatprep.subr.mxu0 0.0
        %418 = vmatpush2.msra.mxu0 0.0
        %419 = vmatprep.subr.mxu0 0.0
        %420 = vmatpush2.msra.mxu0 0.0
        %421 = vmatprep.subr.mxu0 0.0
        %422 = vmatpush2.msra.mxu0 0.0
        %423 = vmatprep.subr.mxu0 0.0
        %424 = vmatpush2.msra.mxu0 0.0
        %425 = vmatprep.subr.mxu0 0.0
        %426 = vmatpush2.msra.mxu0 0.0
        %427 = vmatprep.mubr.f32.mxu0 0.0
        %428 = vmatmul.mubr.f32.gmra.mxu0 %v281
        %v429 = vpop.f32.mrf.mxu0
        %v430 = vadd.f32 0.0, %v429
        %v431 = vpop.f32.mrf.mxu0
        %v432 = vadd.f32 0.0, %v431
        %433 = vmatprep.mubr.f32.mxu0 0.0
        %434 = vmatmul.mubr.f32.gmra.mxu0 %v284
        %v435 = vpop.f32.mrf.mxu0
        %v436 = vadd.f32 0.0, %v435
        %v437 = vpop.f32.mrf.mxu0
        %v438 = vadd.f32 0.0, %v437
        %439 = vdwg.mxu0
        %440 = vmatprep.subr.mxu0 0.0
        %441 = vmatpush1.msra.mxu0 0.0
        %442 = vmatprep.subr.mxu0 0.0
        %443 = vmatpush1.msra.mxu0 0.0
        %444 = vmatprep.subr.mxu0 0.0
        %445 = vmatpush1.msra.mxu0 0.0
        %446 = vmatprep.subr.mxu0 0.0
        %447 = vmatpush1.msra.mxu0 0.0
        %448 = vmatprep.subr.mxu0 0.0
        %449 = vmatpush1.msra.mxu0 0.0
        %450 = vmatprep.subr.mxu0 0.0
        %451 = vmatpush1.msra.mxu0 0.0
        %452 = vmatprep.subr.mxu0 0.0
        %453 = vmatpush1.msra.mxu0 0.0
        %454 = vmatprep.subr.mxu0 0.0
        %455 = vmatpush1.msra.mxu0 0.0
        %456 = vmatprep.subr.mxu0 0.0
        %457 = vmatpush1.msra.mxu0 0.0
        %458 = vmatprep.subr.mxu0 0.0
        %459 = vmatpush1.msra.mxu0 0.0
        %460 = vmatprep.subr.mxu0 0.0
        %461 = vmatpush1.msra.mxu0 0.0
        %462 = vmatprep.subr.mxu0 0.0
        %463 = vmatpush1.msra.mxu0 0.0
        %464 = vmatprep.subr.mxu0 0.0
        %465 = vmatpush1.msra.mxu0 0.0
        %466 = vmatprep.subr.mxu0 0.0
        %467 = vmatpush1.msra.mxu0 0.0
        %468 = vmatprep.subr.mxu0 0.0
        %469 = vmatpush1.msra.mxu0 %v276
        %470 = vmatprep.subr.mxu0 0.0
        %471 = vmatpush1.msra.mxu0 %v271
        %472 = vmatprep.subr.mxu0 0.0
        %473 = vmatpush2.msra.mxu0 0.0
        %474 = vmatprep.subr.mxu0 0.0
        %475 = vmatpush2.msra.mxu0 0.0
        %476 = vmatprep.subr.mxu0 0.0
        %477 = vmatpush2.msra.mxu0 0.0
        %478 = vmatprep.subr.mxu0 0.0
        %479 = vmatpush2.msra.mxu0 0.0
        %480 = vmatprep.subr.mxu0 0.0
        %481 = vmatpush2.msra.mxu0 0.0
        %482 = vmatprep.subr.mxu0 0.0
        %483 = vmatpush2.msra.mxu0 0.0
        %484 = vmatprep.subr.mxu0 0.0
        %485 = vmatpush2.msra.mxu0 0.0
        %486 = vmatprep.subr.mxu0 0.0
        %487 = vmatpush2.msra.mxu0 0.0
        %488 = vmatprep.subr.mxu0 0.0
        %489 = vmatpush2.msra.mxu0 0.0
        %490 = vmatprep.subr.mxu0 0.0
        %491 = vmatpush2.msra.mxu0 0.0
        %492 = vmatprep.subr.mxu0 0.0
        %493 = vmatpush2.msra.mxu0 0.0
        %494 = vmatprep.subr.mxu0 0.0
        %495 = vmatpush2.msra.mxu0 0.0
        %496 = vmatprep.subr.mxu0 0.0
        %497 = vmatpush2.msra.mxu0 0.0
        %498 = vmatprep.subr.mxu0 0.0
        %499 = vmatpush2.msra.mxu0 0.0
        %500 = vmatprep.subr.mxu0 0.0
        %501 = vmatpush2.msra.mxu0 0.0
        %502 = vmatprep.subr.mxu0 0.0
        %503 = vmatpush2.msra.mxu0 0.0
        %504 = vmatprep.mubr.f32.mxu0 0.0
        %505 = vmatmul.mubr.f32.gmra.mxu0 %v281
        %v506 = vpop.f32.mrf.mxu0
        %v507 = vadd.f32 0.0, %v506
        %v508 = vpop.f32.mrf.mxu0
        %509 = vmatprep.mubr.f32.mxu0 0.0
        %510 = vmatmul.mubr.f32.gmra.mxu0 %v284
        %v511 = vpop.f32.mrf.mxu0
        %v512 = vadd.f32 0.0, %v511
        %v513 = vpop.f32.mrf.mxu0
        %514 = vdwg.mxu0
        %v516 = vsel %vm279, %v207, 0
        %v519 = vsel %vm279, %v208, 0
        %v522 = vsel %vm279, %v209, 0
        %v525 = vsel %vm279, %v210, 0
        %v528 = vsel %vm279, %v211, 0
        %v531 = vsel %vm279, %v212, 0
        %v534 = vsel %vm279, %v213, 0
        %v537 = vsel %vm279, %v214, 0
        %v540 = vsel %vm279, %v215, 0
        %v543 = vsel %vm279, %v216, 0
        %v546 = vsel %vm279, %v217, 0
        %v549 = vsel %vm279, %v218, 0
        %v552 = vsel %vm279, %v219, 0
        %v555 = vsel %vm279, %v220, 0
        %v558 = vsel %vm279, %v221, 0
        %v561 = vsel %vm279, %v222, 0
        %v564 = vsel %vm279, %v223, 0
        %v567 = vsel %vm279, %v224, 0
        %v570 = vsel %vm279, %v225, 0
        %v573 = vsel %vm279, %v226, 0
        %v576 = vsel %vm279, %v227, 0
        %v579 = vsel %vm279, %v228, 0
        %v582 = vsel %vm279, %v229, 0
        %v585 = vsel %vm279, %v230, 0
        %v588 = vsel %vm279, %v231, 0
        %v591 = vsel %vm279, %v232, 0
        %v594 = vsel %vm279, %v233, 0
        %v597 = vsel %vm279, %v234, 0
        %v600 = vsel %vm279, %v235, 0
        %v603 = vsel %vm279, %v236, 0
        %v606 = vsel %vm279, %v237, 0
        %v609 = vsel %vm279, %v238, 0
        %v612 = vsel %vm279, %v239, 0
        %v615 = vsel %vm279, %v240, 0
        %v618 = vsel %vm279, %v241, 0
        %v621 = vsel %vm279, %v242, 0
        %v624 = vsel %vm279, %v243, 0
        %v627 = vsel %vm279, %v244, 0
        %v630 = vsel %vm279, %v245, 0
        %v633 = vsel %vm279, %v246, 0
        %v636 = vsel %vm279, %v247, 0
        %v639 = vsel %vm279, %v248, 0
        %v642 = vsel %vm279, %v249, 0
        %v645 = vsel %vm279, %v250, 0
        %v648 = vsel %vm279, %v251, 0
        %v651 = vsel %vm279, %v252, 0
        %v654 = vsel %vm279, %v253, 0
        %v657 = vsel %vm279, %v254, 0
        %v660 = vsel %vm279, %v255, 0
        %v663 = vsel %vm279, %v256, 0
        %v666 = vsel %vm279, %v257, 0
        %v669 = vsel %vm279, %v258, 0
        %v672 = vsel %vm279, %v259, 0
        %v675 = vsel %vm279, %v260, 0
        %v678 = vsel %vm279, %v261, 0
        %v681 = vsel %vm279, %v262, 0
        %v684 = vsel %vm279, %v263, 0
        %v687 = vsel %vm279, %v264, 0
        %v690 = vsel %vm279, %v265, 0
        %v693 = vsel %vm279, %v266, 0
        %695 = vmatprep.subr.mxu0 0.0
        %696 = vmatpush1.msra.mxu0 0.0
        %697 = vmatprep.subr.mxu0 0.0
        %698 = vmatpush1.msra.mxu0 0.0
        %699 = vmatprep.subr.mxu0 0.0
        %700 = vmatpush1.msra.mxu0 0.0
        %701 = vmatprep.subr.mxu0 0.0
        %702 = vmatpush1.msra.mxu0 0.0
        %703 = vmatprep.subr.mxu0 0.0
        %704 = vmatpush1.msra.mxu0 0.0
        %705 = vmatprep.subr.mxu0 0.0
        %706 = vmatpush1.msra.mxu0 0.0
        %707 = vmatprep.subr.mxu0 0.0
        %708 = vmatpush1.msra.mxu0 0.0
        %709 = vmatprep.subr.mxu0 0.0
        %710 = vmatpush1.msra.mxu0 0.0
        %711 = vmatprep.subr.mxu0 0.0
        %712 = vmatpush1.msra.mxu0 0.0
        %713 = vmatprep.subr.mxu0 0.0
        %714 = vmatpush1.msra.mxu0 0.0
        %715 = vmatprep.subr.mxu0 0.0
        %716 = vmatpush1.msra.mxu0 0.0
        %717 = vmatprep.subr.mxu0 0.0
        %718 = vmatpush1.msra.mxu0 0.0
        %719 = vmatprep.subr.mxu0 0.0
        %720 = vmatpush1.msra.mxu0 0.0
        %721 = vmatprep.subr.mxu0 0.0
        %722 = vmatpush1.msra.mxu0 0.0
        %723 = vmatprep.subr.mxu0 %v361
        %724 = vmatpush1.msra.mxu0 %v359
        %725 = vmatprep.subr.mxu0 %v355
        %726 = vmatpush1.msra.mxu0 %v353
        %727 = vmatprep.subr.mxu0 0.0
        %728 = vmatpush2.msra.mxu0 0.0
        %729 = vmatprep.subr.mxu0 0.0
        %730 = vmatpush2.msra.mxu0 0.0
        %731 = vmatprep.subr.mxu0 0.0
        %732 = vmatpush2.msra.mxu0 0.0
        %733 = vmatprep.subr.mxu0 0.0
        %734 = vmatpush2.msra.mxu0 0.0
        %735 = vmatprep.subr.mxu0 0.0
        %736 = vmatpush2.msra.mxu0 0.0
        %737 = vmatprep.subr.mxu0 0.0
        %738 = vmatpush2.msra.mxu0 0.0
        %739 = vmatprep.subr.mxu0 0.0
        %740 = vmatpush2.msra.mxu0 0.0
        %741 = vmatprep.subr.mxu0 0.0
        %742 = vmatpush2.msra.mxu0 0.0
        %743 = vmatprep.subr.mxu0 0.0
        %744 = vmatpush2.msra.mxu0 0.0
        %745 = vmatprep.subr.mxu0 0.0
        %746 = vmatpush2.msra.mxu0 0.0
        %747 = vmatprep.subr.mxu0 0.0
        %748 = vmatpush2.msra.mxu0 0.0
        %749 = vmatprep.subr.mxu0 0.0
        %750 = vmatpush2.msra.mxu0 0.0
        %751 = vmatprep.subr.mxu0 0.0
        %752 = vmatpush2.msra.mxu0 0.0
        %753 = vmatprep.subr.mxu0 0.0
        %754 = vmatpush2.msra.mxu0 0.0
        %755 = vmatprep.subr.mxu0 0.0
        %756 = vmatpush2.msra.mxu0 0.0
        %757 = vmatprep.subr.mxu0 0.0
        %758 = vmatpush2.msra.mxu0 0.0
        %759 = vmatprep.mubr.f32.mxu0 0.0
        %760 = vmatmul.mubr.f32.gmra.mxu0 %v516
        %v761 = vpop.f32.mrf.mxu0
        %v762 = vadd.f32 0.0, %v761
        %v763 = vpop.f32.mrf.mxu0
        %v764 = vadd.f32 0.0, %v763
        %765 = vmatprep.mubr.f32.mxu0 0.0
        %766 = vmatmul.mubr.f32.gmra.mxu0 %v519
        %v767 = vpop.f32.mrf.mxu0
        %v768 = vadd.f32 0.0, %v767
        %v769 = vpop.f32.mrf.mxu0
        %v770 = vadd.f32 0.0, %v769
        %771 = vmatprep.mubr.f32.mxu0 0.0
        %772 = vmatmul.mubr.f32.gmra.mxu0 %v522
        %v773 = vpop.f32.mrf.mxu0
        %v774 = vadd.f32 0.0, %v773
        %v775 = vpop.f32.mrf.mxu0
        %v776 = vadd.f32 0.0, %v775
        %777 = vmatprep.mubr.f32.mxu0 0.0
        %778 = vmatmul.mubr.f32.gmra.mxu0 %v525
        %v779 = vpop.f32.mrf.mxu0
        %v780 = vadd.f32 0.0, %v779
        %v781 = vpop.f32.mrf.mxu0
        %v782 = vadd.f32 0.0, %v781
        %783 = vmatprep.mubr.f32.mxu0 0.0
        %784 = vmatmul.mubr.f32.gmra.mxu0 %v528
        %v785 = vpop.f32.mrf.mxu0
        %v786 = vadd.f32 0.0, %v785
        %v787 = vpop.f32.mrf.mxu0
        %v788 = vadd.f32 0.0, %v787
        %789 = vmatprep.mubr.f32.mxu0 0.0
        %790 = vmatmul.mubr.f32.gmra.mxu0 %v531
        %v791 = vpop.f32.mrf.mxu0
        %v792 = vadd.f32 0.0, %v791
        %v793 = vpop.f32.mrf.mxu0
        %v794 = vadd.f32 0.0, %v793
        %795 = vmatprep.mubr.f32.mxu0 0.0
        %796 = vmatmul.mubr.f32.gmra.mxu0 %v534
        %v797 = vpop.f32.mrf.mxu0
        %v798 = vadd.f32 0.0, %v797
        %v799 = vpop.f32.mrf.mxu0
        %v800 = vadd.f32 0.0, %v799
        %801 = vmatprep.mubr.f32.mxu0 0.0
        %802 = vmatmul.mubr.f32.gmra.mxu0 %v537
        %v803 = vpop.f32.mrf.mxu0
        %v804 = vadd.f32 0.0, %v803
        %v805 = vpop.f32.mrf.mxu0
        %v806 = vadd.f32 0.0, %v805
        %807 = vmatprep.mubr.f32.mxu0 0.0
        %808 = vmatmul.mubr.f32.gmra.mxu0 %v540
        %v809 = vpop.f32.mrf.mxu0
        %v810 = vadd.f32 0.0, %v809
        %v811 = vpop.f32.mrf.mxu0
        %v812 = vadd.f32 0.0, %v811
        %813 = vmatprep.mubr.f32.mxu0 0.0
        %814 = vmatmul.mubr.f32.gmra.mxu0 %v543
        %v815 = vpop.f32.mrf.mxu0
        %v816 = vadd.f32 0.0, %v815
        %v817 = vpop.f32.mrf.mxu0
        %v818 = vadd.f32 0.0, %v817
        %819 = vmatprep.mubr.f32.mxu0 0.0
        %820 = vmatmul.mubr.f32.gmra.mxu0 %v546
        %v821 = vpop.f32.mrf.mxu0
        %v822 = vadd.f32 0.0, %v821
        %v823 = vpop.f32.mrf.mxu0
        %v824 = vadd.f32 0.0, %v823
        %825 = vmatprep.mubr.f32.mxu0 0.0
        %826 = vmatmul.mubr.f32.gmra.mxu0 %v549
        %v827 = vpop.f32.mrf.mxu0
        %v828 = vadd.f32 0.0, %v827
        %v829 = vpop.f32.mrf.mxu0
        %v830 = vadd.f32 0.0, %v829
        %831 = vmatprep.mubr.f32.mxu0 0.0
        %832 = vmatmul.mubr.f32.gmra.mxu0 %v552
        %v833 = vpop.f32.mrf.mxu0
        %v834 = vadd.f32 0.0, %v833
        %v835 = vpop.f32.mrf.mxu0
        %v836 = vadd.f32 0.0, %v835
        %837 = vmatprep.mubr.f32.mxu0 0.0
        %838 = vmatmul.mubr.f32.gmra.mxu0 %v555
        %v839 = vpop.f32.mrf.mxu0
        %v840 = vadd.f32 0.0, %v839
        %v841 = vpop.f32.mrf.mxu0
        %v842 = vadd.f32 0.0, %v841
        %843 = vmatprep.mubr.f32.mxu0 0.0
        %844 = vmatmul.mubr.f32.gmra.mxu0 %v558
        %v845 = vpop.f32.mrf.mxu0
        %v846 = vadd.f32 0.0, %v845
        %v847 = vpop.f32.mrf.mxu0
        %v848 = vadd.f32 0.0, %v847
        %849 = vmatprep.mubr.f32.mxu0 0.0
        %850 = vmatmul.mubr.f32.gmra.mxu0 %v561
        %v851 = vpop.f32.mrf.mxu0
        %v852 = vadd.f32 0.0, %v851
        %v853 = vpop.f32.mrf.mxu0
        %v854 = vadd.f32 0.0, %v853
        %855 = vmatprep.mubr.f32.mxu0 0.0
        %856 = vmatmul.mubr.f32.gmra.mxu0 %v564
        %v857 = vpop.f32.mrf.mxu0
        %v858 = vadd.f32 0.0, %v857
        %v859 = vpop.f32.mrf.mxu0
        %v860 = vadd.f32 0.0, %v859
        %861 = vmatprep.mubr.f32.mxu0 0.0
        %862 = vmatmul.mubr.f32.gmra.mxu0 %v567
        %v863 = vpop.f32.mrf.mxu0
        %v864 = vadd.f32 0.0, %v863
        %v865 = vpop.f32.mrf.mxu0
        %v866 = vadd.f32 0.0, %v865
        %867 = vmatprep.mubr.f32.mxu0 0.0
        %868 = vmatmul.mubr.f32.gmra.mxu0 %v570
        %v869 = vpop.f32.mrf.mxu0
        %v870 = vadd.f32 0.0, %v869
        %v871 = vpop.f32.mrf.mxu0
        %v872 = vadd.f32 0.0, %v871
        %873 = vmatprep.mubr.f32.mxu0 0.0
        %874 = vmatmul.mubr.f32.gmra.mxu0 %v573
        %v875 = vpop.f32.mrf.mxu0
        %v876 = vadd.f32 0.0, %v875
        %v877 = vpop.f32.mrf.mxu0
        %v878 = vadd.f32 0.0, %v877
        %879 = vmatprep.mubr.f32.mxu0 0.0
        %880 = vmatmul.mubr.f32.gmra.mxu0 %v576
        %v881 = vpop.f32.mrf.mxu0
        %v882 = vadd.f32 0.0, %v881
        %v883 = vpop.f32.mrf.mxu0
        %v884 = vadd.f32 0.0, %v883
        %885 = vmatprep.mubr.f32.mxu0 0.0
        %886 = vmatmul.mubr.f32.gmra.mxu0 %v579
        %v887 = vpop.f32.mrf.mxu0
        %v888 = vadd.f32 0.0, %v887
        %v889 = vpop.f32.mrf.mxu0
        %v890 = vadd.f32 0.0, %v889
        %891 = vmatprep.mubr.f32.mxu0 0.0
        %892 = vmatmul.mubr.f32.gmra.mxu0 %v582
        %v893 = vpop.f32.mrf.mxu0
        %v894 = vadd.f32 0.0, %v893
        %v895 = vpop.f32.mrf.mxu0
        %v896 = vadd.f32 0.0, %v895
        %897 = vmatprep.mubr.f32.mxu0 0.0
        %898 = vmatmul.mubr.f32.gmra.mxu0 %v585
        %v899 = vpop.f32.mrf.mxu0
        %v900 = vadd.f32 0.0, %v899
        %v901 = vpop.f32.mrf.mxu0
        %v902 = vadd.f32 0.0, %v901
        %903 = vmatprep.mubr.f32.mxu0 0.0
        %904 = vmatmul.mubr.f32.gmra.mxu0 %v588
        %v905 = vpop.f32.mrf.mxu0
        %v906 = vadd.f32 0.0, %v905
        %v907 = vpop.f32.mrf.mxu0
        %v908 = vadd.f32 0.0, %v907
        %909 = vmatprep.mubr.f32.mxu0 0.0
        %910 = vmatmul.mubr.f32.gmra.mxu0 %v591
        %v911 = vpop.f32.mrf.mxu0
        %v912 = vadd.f32 0.0, %v911
        %v913 = vpop.f32.mrf.mxu0
        %v914 = vadd.f32 0.0, %v913
        %915 = vmatprep.mubr.f32.mxu0 0.0
        %916 = vmatmul.mubr.f32.gmra.mxu0 %v594
        %v917 = vpop.f32.mrf.mxu0
        %v918 = vadd.f32 0.0, %v917
        %v919 = vpop.f32.mrf.mxu0
        %v920 = vadd.f32 0.0, %v919
        %921 = vmatprep.mubr.f32.mxu0 0.0
        %922 = vmatmul.mubr.f32.gmra.mxu0 %v597
        %v923 = vpop.f32.mrf.mxu0
        %v924 = vadd.f32 0.0, %v923
        %v925 = vpop.f32.mrf.mxu0
        %v926 = vadd.f32 0.0, %v925
        %927 = vmatprep.mubr.f32.mxu0 0.0
        %928 = vmatmul.mubr.f32.gmra.mxu0 %v600
        %v929 = vpop.f32.mrf.mxu0
        %v930 = vadd.f32 0.0, %v929
        %v931 = vpop.f32.mrf.mxu0
        %v932 = vadd.f32 0.0, %v931
        %933 = vmatprep.mubr.f32.mxu0 0.0
        %934 = vmatmul.mubr.f32.gmra.mxu0 %v603
        %v935 = vpop.f32.mrf.mxu0
        %v936 = vadd.f32 0.0, %v935
        %v937 = vpop.f32.mrf.mxu0
        %v938 = vadd.f32 0.0, %v937
        %939 = vmatprep.mubr.f32.mxu0 0.0
        %940 = vmatmul.mubr.f32.gmra.mxu0 %v606
        %v941 = vpop.f32.mrf.mxu0
        %v942 = vadd.f32 0.0, %v941
        %v943 = vpop.f32.mrf.mxu0
        %v944 = vadd.f32 0.0, %v943
        %945 = vmatprep.mubr.f32.mxu0 0.0
        %946 = vmatmul.mubr.f32.gmra.mxu0 %v609
        %v947 = vpop.f32.mrf.mxu0
        %v948 = vadd.f32 0.0, %v947
        %v949 = vpop.f32.mrf.mxu0
        %v950 = vadd.f32 0.0, %v949
        %951 = vmatprep.mubr.f32.mxu0 0.0
        %952 = vmatmul.mubr.f32.gmra.mxu0 %v612
        %v953 = vpop.f32.mrf.mxu0
        %v954 = vadd.f32 0.0, %v953
        %v955 = vpop.f32.mrf.mxu0
        %v956 = vadd.f32 0.0, %v955
        %957 = vmatprep.mubr.f32.mxu0 0.0
        %958 = vmatmul.mubr.f32.gmra.mxu0 %v615
        %v959 = vpop.f32.mrf.mxu0
        %v960 = vadd.f32 0.0, %v959
        %v961 = vpop.f32.mrf.mxu0
        %v962 = vadd.f32 0.0, %v961
        %963 = vmatprep.mubr.f32.mxu0 0.0
        %964 = vmatmul.mubr.f32.gmra.mxu0 %v618
        %v965 = vpop.f32.mrf.mxu0
        %v966 = vadd.f32 0.0, %v965
        %v967 = vpop.f32.mrf.mxu0
        %v968 = vadd.f32 0.0, %v967
        %969 = vmatprep.mubr.f32.mxu0 0.0
        %970 = vmatmul.mubr.f32.gmra.mxu0 %v621
        %v971 = vpop.f32.mrf.mxu0
        %v972 = vadd.f32 0.0, %v971
        %v973 = vpop.f32.mrf.mxu0
        %v974 = vadd.f32 0.0, %v973
        %975 = vmatprep.mubr.f32.mxu0 0.0
        %976 = vmatmul.mubr.f32.gmra.mxu0 %v624
        %v977 = vpop.f32.mrf.mxu0
        %v978 = vadd.f32 0.0, %v977
        %v979 = vpop.f32.mrf.mxu0
        %v980 = vadd.f32 0.0, %v979
        %981 = vmatprep.mubr.f32.mxu0 0.0
        %982 = vmatmul.mubr.f32.gmra.mxu0 %v627
        %v983 = vpop.f32.mrf.mxu0
        %v984 = vadd.f32 0.0, %v983
        %v985 = vpop.f32.mrf.mxu0
        %v986 = vadd.f32 0.0, %v985
        %987 = vmatprep.mubr.f32.mxu0 0.0
        %988 = vmatmul.mubr.f32.gmra.mxu0 %v630
        %v989 = vpop.f32.mrf.mxu0
        %v990 = vadd.f32 0.0, %v989
        %v991 = vpop.f32.mrf.mxu0
        %v992 = vadd.f32 0.0, %v991
        %993 = vmatprep.mubr.f32.mxu0 0.0
        %994 = vmatmul.mubr.f32.gmra.mxu0 %v633
        %v995 = vpop.f32.mrf.mxu0
        %v996 = vadd.f32 0.0, %v995
        %v997 = vpop.f32.mrf.mxu0
        %v998 = vadd.f32 0.0, %v997
        %999 = vmatprep.mubr.f32.mxu0 0.0
        %1000 = vmatmul.mubr.f32.gmra.mxu0 %v636
        %v1001 = vpop.f32.mrf.mxu0
        %v1002 = vadd.f32 0.0, %v1001
        %v1003 = vpop.f32.mrf.mxu0
        %v1004 = vadd.f32 0.0, %v1003
        %1005 = vmatprep.mubr.f32.mxu0 0.0
        %1006 = vmatmul.mubr.f32.gmra.mxu0 %v639
        %v1007 = vpop.f32.mrf.mxu0
        %v1008 = vadd.f32 0.0, %v1007
        %v1009 = vpop.f32.mrf.mxu0
        %v1010 = vadd.f32 0.0, %v1009
        %1011 = vmatprep.mubr.f32.mxu0 0.0
        %1012 = vmatmul.mubr.f32.gmra.mxu0 %v642
        %v1013 = vpop.f32.mrf.mxu0
        %v1014 = vadd.f32 0.0, %v1013
        %v1015 = vpop.f32.mrf.mxu0
        %v1016 = vadd.f32 0.0, %v1015
        %1017 = vmatprep.mubr.f32.mxu0 0.0
        %1018 = vmatmul.mubr.f32.gmra.mxu0 %v645
        %v1019 = vpop.f32.mrf.mxu0
        %v1020 = vadd.f32 0.0, %v1019
        %v1021 = vpop.f32.mrf.mxu0
        %v1022 = vadd.f32 0.0, %v1021
        %1023 = vmatprep.mubr.f32.mxu0 0.0
        %1024 = vmatmul.mubr.f32.gmra.mxu0 %v648
        %v1025 = vpop.f32.mrf.mxu0
        %v1026 = vadd.f32 0.0, %v1025
        %v1027 = vpop.f32.mrf.mxu0
        %v1028 = vadd.f32 0.0, %v1027
        %1029 = vmatprep.mubr.f32.mxu0 0.0
        %1030 = vmatmul.mubr.f32.gmra.mxu0 %v651
        %v1031 = vpop.f32.mrf.mxu0
        %v1032 = vadd.f32 0.0, %v1031
        %v1033 = vpop.f32.mrf.mxu0
        %v1034 = vadd.f32 0.0, %v1033
        %1035 = vmatprep.mubr.f32.mxu0 0.0
        %1036 = vmatmul.mubr.f32.gmra.mxu0 %v654
        %v1037 = vpop.f32.mrf.mxu0
        %v1038 = vadd.f32 0.0, %v1037
        %v1039 = vpop.f32.mrf.mxu0
        %v1040 = vadd.f32 0.0, %v1039
        %1041 = vmatprep.mubr.f32.mxu0 0.0
        %1042 = vmatmul.mubr.f32.gmra.mxu0 %v657
        %v1043 = vpop.f32.mrf.mxu0
        %v1044 = vadd.f32 0.0, %v1043
        %v1045 = vpop.f32.mrf.mxu0
        %v1046 = vadd.f32 0.0, %v1045
        %1047 = vmatprep.mubr.f32.mxu0 0.0
        %1048 = vmatmul.mubr.f32.gmra.mxu0 %v660
        %v1049 = vpop.f32.mrf.mxu0
        %v1050 = vadd.f32 0.0, %v1049
        %v1051 = vpop.f32.mrf.mxu0
        %v1052 = vadd.f32 0.0, %v1051
        %1053 = vmatprep.mubr.f32.mxu0 0.0
        %1054 = vmatmul.mubr.f32.gmra.mxu0 %v663
        %v1055 = vpop.f32.mrf.mxu0
        %v1056 = vadd.f32 0.0, %v1055
        %v1057 = vpop.f32.mrf.mxu0
        %v1058 = vadd.f32 0.0, %v1057
        %1059 = vmatprep.mubr.f32.mxu0 0.0
        %1060 = vmatmul.mubr.f32.gmra.mxu0 %v666
        %v1061 = vpop.f32.mrf.mxu0
        %v1062 = vadd.f32 0.0, %v1061
        %v1063 = vpop.f32.mrf.mxu0
        %v1064 = vadd.f32 0.0, %v1063
        %1065 = vmatprep.mubr.f32.mxu0 0.0
        %1066 = vmatmul.mubr.f32.gmra.mxu0 %v669
        %v1067 = vpop.f32.mrf.mxu0
        %v1068 = vadd.f32 0.0, %v1067
        %v1069 = vpop.f32.mrf.mxu0
        %v1070 = vadd.f32 0.0, %v1069
        %1071 = vmatprep.mubr.f32.mxu0 0.0
        %1072 = vmatmul.mubr.f32.gmra.mxu0 %v672
        %v1073 = vpop.f32.mrf.mxu0
        %v1074 = vadd.f32 0.0, %v1073
        %v1075 = vpop.f32.mrf.mxu0
        %v1076 = vadd.f32 0.0, %v1075
        %1077 = vmatprep.mubr.f32.mxu0 0.0
        %1078 = vmatmul.mubr.f32.gmra.mxu0 %v675
        %v1079 = vpop.f32.mrf.mxu0
        %v1080 = vadd.f32 0.0, %v1079
        %v1081 = vpop.f32.mrf.mxu0
        %v1082 = vadd.f32 0.0, %v1081
        %1083 = vmatprep.mubr.f32.mxu0 0.0
        %1084 = vmatmul.mubr.f32.gmra.mxu0 %v678
        %v1085 = vpop.f32.mrf.mxu0
        %v1086 = vadd.f32 0.0, %v1085
        %v1087 = vpop.f32.mrf.mxu0
        %v1088 = vadd.f32 0.0, %v1087
        %1089 = vmatprep.mubr.f32.mxu0 0.0
        %1090 = vmatmul.mubr.f32.gmra.mxu0 %v681
        %v1091 = vpop.f32.mrf.mxu0
        %v1092 = vadd.f32 0.0, %v1091
        %v1093 = vpop.f32.mrf.mxu0
        %v1094 = vadd.f32 0.0, %v1093
        %1095 = vmatprep.mubr.f32.mxu0 0.0
        %1096 = vmatmul.mubr.f32.gmra.mxu0 %v684
        %v1097 = vpop.f32.mrf.mxu0
        %v1098 = vadd.f32 0.0, %v1097
        %v1099 = vpop.f32.mrf.mxu0
        %v1100 = vadd.f32 0.0, %v1099
        %1101 = vmatprep.mubr.f32.mxu0 0.0
        %1102 = vmatmul.mubr.f32.gmra.mxu0 %v687
        %v1103 = vpop.f32.mrf.mxu0
        %v1104 = vadd.f32 0.0, %v1103
        %v1105 = vpop.f32.mrf.mxu0
        %v1106 = vadd.f32 0.0, %v1105
        %1107 = vmatprep.mubr.f32.mxu0 0.0
        %1108 = vmatmul.mubr.f32.gmra.mxu0 %v690
        %v1109 = vpop.f32.mrf.mxu0
        %v1110 = vadd.f32 0.0, %v1109
        %v1111 = vpop.f32.mrf.mxu0
        %v1112 = vadd.f32 0.0, %v1111
        %1113 = vmatprep.mubr.f32.mxu0 0.0
        %1114 = vmatmul.mubr.f32.gmra.mxu0 %v693
        %v1115 = vpop.f32.mrf.mxu0
        %v1116 = vadd.f32 0.0, %v1115
        %v1117 = vpop.f32.mrf.mxu0
        %v1118 = vadd.f32 0.0, %v1117
        %1119 = vdwg.mxu0
        %1120 = vmatprep.subr.mxu0 0.0
        %1121 = vmatpush1.msra.mxu0 0.0
        %1122 = vmatprep.subr.mxu0 0.0
        %1123 = vmatpush1.msra.mxu0 0.0
        %1124 = vmatprep.subr.mxu0 0.0
        %1125 = vmatpush1.msra.mxu0 0.0
        %1126 = vmatprep.subr.mxu0 0.0
        %1127 = vmatpush1.msra.mxu0 0.0
        %1128 = vmatprep.subr.mxu0 0.0
        %1129 = vmatpush1.msra.mxu0 0.0
        %1130 = vmatprep.subr.mxu0 0.0
        %1131 = vmatpush1.msra.mxu0 0.0
        %1132 = vmatprep.subr.mxu0 0.0
        %1133 = vmatpush1.msra.mxu0 0.0
        %1134 = vmatprep.subr.mxu0 0.0
        %1135 = vmatpush1.msra.mxu0 0.0
        %1136 = vmatprep.subr.mxu0 0.0
        %1137 = vmatpush1.msra.mxu0 0.0
        %1138 = vmatprep.subr.mxu0 0.0
        %1139 = vmatpush1.msra.mxu0 0.0
        %1140 = vmatprep.subr.mxu0 0.0
        %1141 = vmatpush1.msra.mxu0 0.0
        %1142 = vmatprep.subr.mxu0 0.0
        %1143 = vmatpush1.msra.mxu0 0.0
        %1144 = vmatprep.subr.mxu0 0.0
        %1145 = vmatpush1.msra.mxu0 0.0
        %1146 = vmatprep.subr.mxu0 0.0
        %1147 = vmatpush1.msra.mxu0 0.0
        %1148 = vmatprep.subr.mxu0 %v438
        %1149 = vmatpush1.msra.mxu0 %v436
        %1150 = vmatprep.subr.mxu0 %v432
        %1151 = vmatpush1.msra.mxu0 %v430
        %1152 = vmatprep.subr.mxu0 0.0
        %1153 = vmatpush2.msra.mxu0 0.0
        %1154 = vmatprep.subr.mxu0 0.0
        %1155 = vmatpush2.msra.mxu0 0.0
        %1156 = vmatprep.subr.mxu0 0.0
        %1157 = vmatpush2.msra.mxu0 0.0
        %1158 = vmatprep.subr.mxu0 0.0
        %1159 = vmatpush2.msra.mxu0 0.0
        %1160 = vmatprep.subr.mxu0 0.0
        %1161 = vmatpush2.msra.mxu0 0.0
        %1162 = vmatprep.subr.mxu0 0.0
        %1163 = vmatpush2.msra.mxu0 0.0
        %1164 = vmatprep.subr.mxu0 0.0
        %1165 = vmatpush2.msra.mxu0 0.0
        %1166 = vmatprep.subr.mxu0 0.0
        %1167 = vmatpush2.msra.mxu0 0.0
        %1168 = vmatprep.subr.mxu0 0.0
        %1169 = vmatpush2.msra.mxu0 0.0
        %1170 = vmatprep.subr.mxu0 0.0
        %1171 = vmatpush2.msra.mxu0 0.0
        %1172 = vmatprep.subr.mxu0 0.0
        %1173 = vmatpush2.msra.mxu0 0.0
        %1174 = vmatprep.subr.mxu0 0.0
        %1175 = vmatpush2.msra.mxu0 0.0
        %1176 = vmatprep.subr.mxu0 0.0
        %1177 = vmatpush2.msra.mxu0 0.0
        %1178 = vmatprep.subr.mxu0 0.0
        %1179 = vmatpush2.msra.mxu0 0.0
        %1180 = vmatprep.subr.mxu0 0.0
        %1181 = vmatpush2.msra.mxu0 0.0
        %1182 = vmatprep.subr.mxu0 0.0
        %1183 = vmatpush2.msra.mxu0 0.0
        %1184 = vmatprep.mubr.f32.mxu0 0.0
        %1185 = vmatmul.mubr.f32.gmra.mxu0 %v516
        %v1186 = vpop.f32.mrf.mxu0
        %v1187 = vadd.f32 0.0, %v1186
        %v1188 = vpop.f32.mrf.mxu0
        %v1189 = vadd.f32 0.0, %v1188
        %1190 = vmatprep.mubr.f32.mxu0 0.0
        %1191 = vmatmul.mubr.f32.gmra.mxu0 %v519
        %v1192 = vpop.f32.mrf.mxu0
        %v1193 = vadd.f32 0.0, %v1192
        %v1194 = vpop.f32.mrf.mxu0
        %v1195 = vadd.f32 0.0, %v1194
        %1196 = vmatprep.mubr.f32.mxu0 0.0
        %1197 = vmatmul.mubr.f32.gmra.mxu0 %v522
        %v1198 = vpop.f32.mrf.mxu0
        %v1199 = vadd.f32 0.0, %v1198
        %v1200 = vpop.f32.mrf.mxu0
        %v1201 = vadd.f32 0.0, %v1200
        %1202 = vmatprep.mubr.f32.mxu0 0.0
        %1203 = vmatmul.mubr.f32.gmra.mxu0 %v525
        %v1204 = vpop.f32.mrf.mxu0
        %v1205 = vadd.f32 0.0, %v1204
        %v1206 = vpop.f32.mrf.mxu0
        %v1207 = vadd.f32 0.0, %v1206
        %1208 = vmatprep.mubr.f32.mxu0 0.0
        %1209 = vmatmul.mubr.f32.gmra.mxu0 %v528
        %v1210 = vpop.f32.mrf.mxu0
        %v1211 = vadd.f32 0.0, %v1210
        %v1212 = vpop.f32.mrf.mxu0
        %v1213 = vadd.f32 0.0, %v1212
        %1214 = vmatprep.mubr.f32.mxu0 0.0
        %1215 = vmatmul.mubr.f32.gmra.mxu0 %v531
        %v1216 = vpop.f32.mrf.mxu0
        %v1217 = vadd.f32 0.0, %v1216
        %v1218 = vpop.f32.mrf.mxu0
        %v1219 = vadd.f32 0.0, %v1218
        %1220 = vmatprep.mubr.f32.mxu0 0.0
        %1221 = vmatmul.mubr.f32.gmra.mxu0 %v534
        %v1222 = vpop.f32.mrf.mxu0
        %v1223 = vadd.f32 0.0, %v1222
        %v1224 = vpop.f32.mrf.mxu0
        %v1225 = vadd.f32 0.0, %v1224
        %1226 = vmatprep.mubr.f32.mxu0 0.0
        %1227 = vmatmul.mubr.f32.gmra.mxu0 %v537
        %v1228 = vpop.f32.mrf.mxu0
        %v1229 = vadd.f32 0.0, %v1228
        %v1230 = vpop.f32.mrf.mxu0
        %v1231 = vadd.f32 0.0, %v1230
        %1232 = vmatprep.mubr.f32.mxu0 0.0
        %1233 = vmatmul.mubr.f32.gmra.mxu0 %v540
        %v1234 = vpop.f32.mrf.mxu0
        %v1235 = vadd.f32 0.0, %v1234
        %v1236 = vpop.f32.mrf.mxu0
        %v1237 = vadd.f32 0.0, %v1236
        %1238 = vmatprep.mubr.f32.mxu0 0.0
        %1239 = vmatmul.mubr.f32.gmra.mxu0 %v543
        %v1240 = vpop.f32.mrf.mxu0
        %v1241 = vadd.f32 0.0, %v1240
        %v1242 = vpop.f32.mrf.mxu0
        %v1243 = vadd.f32 0.0, %v1242
        %1244 = vmatprep.mubr.f32.mxu0 0.0
        %1245 = vmatmul.mubr.f32.gmra.mxu0 %v546
        %v1246 = vpop.f32.mrf.mxu0
        %v1247 = vadd.f32 0.0, %v1246
        %v1248 = vpop.f32.mrf.mxu0
        %v1249 = vadd.f32 0.0, %v1248
        %1250 = vmatprep.mubr.f32.mxu0 0.0
        %1251 = vmatmul.mubr.f32.gmra.mxu0 %v549
        %v1252 = vpop.f32.mrf.mxu0
        %v1253 = vadd.f32 0.0, %v1252
        %v1254 = vpop.f32.mrf.mxu0
        %v1255 = vadd.f32 0.0, %v1254
        %1256 = vmatprep.mubr.f32.mxu0 0.0
        %1257 = vmatmul.mubr.f32.gmra.mxu0 %v552
        %v1258 = vpop.f32.mrf.mxu0
        %v1259 = vadd.f32 0.0, %v1258
        %v1260 = vpop.f32.mrf.mxu0
        %v1261 = vadd.f32 0.0, %v1260
        %1262 = vmatprep.mubr.f32.mxu0 0.0
        %1263 = vmatmul.mubr.f32.gmra.mxu0 %v555
        %v1264 = vpop.f32.mrf.mxu0
        %v1265 = vadd.f32 0.0, %v1264
        %v1266 = vpop.f32.mrf.mxu0
        %v1267 = vadd.f32 0.0, %v1266
        %1268 = vmatprep.mubr.f32.mxu0 0.0
        %1269 = vmatmul.mubr.f32.gmra.mxu0 %v558
        %v1270 = vpop.f32.mrf.mxu0
        %v1271 = vadd.f32 0.0, %v1270
        %v1272 = vpop.f32.mrf.mxu0
        %v1273 = vadd.f32 0.0, %v1272
        %1274 = vmatprep.mubr.f32.mxu0 0.0
        %1275 = vmatmul.mubr.f32.gmra.mxu0 %v561
        %v1276 = vpop.f32.mrf.mxu0
        %v1277 = vadd.f32 0.0, %v1276
        %v1278 = vpop.f32.mrf.mxu0
        %v1279 = vadd.f32 0.0, %v1278
        %1280 = vmatprep.mubr.f32.mxu0 0.0
        %1281 = vmatmul.mubr.f32.gmra.mxu0 %v564
        %v1282 = vpop.f32.mrf.mxu0
        %v1283 = vadd.f32 0.0, %v1282
        %v1284 = vpop.f32.mrf.mxu0
        %v1285 = vadd.f32 0.0, %v1284
        %1286 = vmatprep.mubr.f32.mxu0 0.0
        %1287 = vmatmul.mubr.f32.gmra.mxu0 %v567
        %v1288 = vpop.f32.mrf.mxu0
        %v1289 = vadd.f32 0.0, %v1288
        %v1290 = vpop.f32.mrf.mxu0
        %v1291 = vadd.f32 0.0, %v1290
        %1292 = vmatprep.mubr.f32.mxu0 0.0
        %1293 = vmatmul.mubr.f32.gmra.mxu0 %v570
        %v1294 = vpop.f32.mrf.mxu0
        %v1295 = vadd.f32 0.0, %v1294
        %v1296 = vpop.f32.mrf.mxu0
        %v1297 = vadd.f32 0.0, %v1296
        %1298 = vmatprep.mubr.f32.mxu0 0.0
        %1299 = vmatmul.mubr.f32.gmra.mxu0 %v573
        %v1300 = vpop.f32.mrf.mxu0
        %v1301 = vadd.f32 0.0, %v1300
        %v1302 = vpop.f32.mrf.mxu0
        %v1303 = vadd.f32 0.0, %v1302
        %1304 = vmatprep.mubr.f32.mxu0 0.0
        %1305 = vmatmul.mubr.f32.gmra.mxu0 %v576
        %v1306 = vpop.f32.mrf.mxu0
        %v1307 = vadd.f32 0.0, %v1306
        %v1308 = vpop.f32.mrf.mxu0
        %v1309 = vadd.f32 0.0, %v1308
        %1310 = vmatprep.mubr.f32.mxu0 0.0
        %1311 = vmatmul.mubr.f32.gmra.mxu0 %v579
        %v1312 = vpop.f32.mrf.mxu0
        %v1313 = vadd.f32 0.0, %v1312
        %v1314 = vpop.f32.mrf.mxu0
        %v1315 = vadd.f32 0.0, %v1314
        %1316 = vmatprep.mubr.f32.mxu0 0.0
        %1317 = vmatmul.mubr.f32.gmra.mxu0 %v582
        %v1318 = vpop.f32.mrf.mxu0
        %v1319 = vadd.f32 0.0, %v1318
        %v1320 = vpop.f32.mrf.mxu0
        %v1321 = vadd.f32 0.0, %v1320
        %1322 = vmatprep.mubr.f32.mxu0 0.0
        %1323 = vmatmul.mubr.f32.gmra.mxu0 %v585
        %v1324 = vpop.f32.mrf.mxu0
        %v1325 = vadd.f32 0.0, %v1324
        %v1326 = vpop.f32.mrf.mxu0
        %v1327 = vadd.f32 0.0, %v1326
        %1328 = vmatprep.mubr.f32.mxu0 0.0
        %1329 = vmatmul.mubr.f32.gmra.mxu0 %v588
        %v1330 = vpop.f32.mrf.mxu0
        %v1331 = vadd.f32 0.0, %v1330
        %v1332 = vpop.f32.mrf.mxu0
        %v1333 = vadd.f32 0.0, %v1332
        %1334 = vmatprep.mubr.f32.mxu0 0.0
        %1335 = vmatmul.mubr.f32.gmra.mxu0 %v591
        %v1336 = vpop.f32.mrf.mxu0
        %v1337 = vadd.f32 0.0, %v1336
        %v1338 = vpop.f32.mrf.mxu0
        %v1339 = vadd.f32 0.0, %v1338
        %1340 = vmatprep.mubr.f32.mxu0 0.0
        %1341 = vmatmul.mubr.f32.gmra.mxu0 %v594
        %v1342 = vpop.f32.mrf.mxu0
        %v1343 = vadd.f32 0.0, %v1342
        %v1344 = vpop.f32.mrf.mxu0
        %v1345 = vadd.f32 0.0, %v1344
        %1346 = vmatprep.mubr.f32.mxu0 0.0
        %1347 = vmatmul.mubr.f32.gmra.mxu0 %v597
        %v1348 = vpop.f32.mrf.mxu0
        %v1349 = vadd.f32 0.0, %v1348
        %v1350 = vpop.f32.mrf.mxu0
        %v1351 = vadd.f32 0.0, %v1350
        %1352 = vmatprep.mubr.f32.mxu0 0.0
        %1353 = vmatmul.mubr.f32.gmra.mxu0 %v600
        %v1354 = vpop.f32.mrf.mxu0
        %v1355 = vadd.f32 0.0, %v1354
        %v1356 = vpop.f32.mrf.mxu0
        %v1357 = vadd.f32 0.0, %v1356
        %1358 = vmatprep.mubr.f32.mxu0 0.0
        %1359 = vmatmul.mubr.f32.gmra.mxu0 %v603
        %v1360 = vpop.f32.mrf.mxu0
        %v1361 = vadd.f32 0.0, %v1360
        %v1362 = vpop.f32.mrf.mxu0
        %v1363 = vadd.f32 0.0, %v1362
        %1364 = vmatprep.mubr.f32.mxu0 0.0
        %1365 = vmatmul.mubr.f32.gmra.mxu0 %v606
        %v1366 = vpop.f32.mrf.mxu0
        %v1367 = vadd.f32 0.0, %v1366
        %v1368 = vpop.f32.mrf.mxu0
        %v1369 = vadd.f32 0.0, %v1368
        %1370 = vmatprep.mubr.f32.mxu0 0.0
        %1371 = vmatmul.mubr.f32.gmra.mxu0 %v609
        %v1372 = vpop.f32.mrf.mxu0
        %v1373 = vadd.f32 0.0, %v1372
        %v1374 = vpop.f32.mrf.mxu0
        %v1375 = vadd.f32 0.0, %v1374
        %1376 = vmatprep.mubr.f32.mxu0 0.0
        %1377 = vmatmul.mubr.f32.gmra.mxu0 %v612
        %v1378 = vpop.f32.mrf.mxu0
        %v1379 = vadd.f32 0.0, %v1378
        %v1380 = vpop.f32.mrf.mxu0
        %v1381 = vadd.f32 0.0, %v1380
        %1382 = vmatprep.mubr.f32.mxu0 0.0
        %1383 = vmatmul.mubr.f32.gmra.mxu0 %v615
        %v1384 = vpop.f32.mrf.mxu0
        %v1385 = vadd.f32 0.0, %v1384
        %v1386 = vpop.f32.mrf.mxu0
        %v1387 = vadd.f32 0.0, %v1386
        %1388 = vmatprep.mubr.f32.mxu0 0.0
        %1389 = vmatmul.mubr.f32.gmra.mxu0 %v618
        %v1390 = vpop.f32.mrf.mxu0
        %v1391 = vadd.f32 0.0, %v1390
        %v1392 = vpop.f32.mrf.mxu0
        %v1393 = vadd.f32 0.0, %v1392
        %1394 = vmatprep.mubr.f32.mxu0 0.0
        %1395 = vmatmul.mubr.f32.gmra.mxu0 %v621
        %v1396 = vpop.f32.mrf.mxu0
        %v1397 = vadd.f32 0.0, %v1396
        %v1398 = vpop.f32.mrf.mxu0
        %v1399 = vadd.f32 0.0, %v1398
        %1400 = vmatprep.mubr.f32.mxu0 0.0
        %1401 = vmatmul.mubr.f32.gmra.mxu0 %v624
        %v1402 = vpop.f32.mrf.mxu0
        %v1403 = vadd.f32 0.0, %v1402
        %v1404 = vpop.f32.mrf.mxu0
        %v1405 = vadd.f32 0.0, %v1404
        %1406 = vmatprep.mubr.f32.mxu0 0.0
        %1407 = vmatmul.mubr.f32.gmra.mxu0 %v627
        %v1408 = vpop.f32.mrf.mxu0
        %v1409 = vadd.f32 0.0, %v1408
        %v1410 = vpop.f32.mrf.mxu0
        %v1411 = vadd.f32 0.0, %v1410
        %1412 = vmatprep.mubr.f32.mxu0 0.0
        %1413 = vmatmul.mubr.f32.gmra.mxu0 %v630
        %v1414 = vpop.f32.mrf.mxu0
        %v1415 = vadd.f32 0.0, %v1414
        %v1416 = vpop.f32.mrf.mxu0
        %v1417 = vadd.f32 0.0, %v1416
        %1418 = vmatprep.mubr.f32.mxu0 0.0
        %1419 = vmatmul.mubr.f32.gmra.mxu0 %v633
        %v1420 = vpop.f32.mrf.mxu0
        %v1421 = vadd.f32 0.0, %v1420
        %v1422 = vpop.f32.mrf.mxu0
        %v1423 = vadd.f32 0.0, %v1422
        %1424 = vmatprep.mubr.f32.mxu0 0.0
        %1425 = vmatmul.mubr.f32.gmra.mxu0 %v636
        %v1426 = vpop.f32.mrf.mxu0
        %v1427 = vadd.f32 0.0, %v1426
        %v1428 = vpop.f32.mrf.mxu0
        %v1429 = vadd.f32 0.0, %v1428
        %1430 = vmatprep.mubr.f32.mxu0 0.0
        %1431 = vmatmul.mubr.f32.gmra.mxu0 %v639
        %v1432 = vpop.f32.mrf.mxu0
        %v1433 = vadd.f32 0.0, %v1432
        %v1434 = vpop.f32.mrf.mxu0
        %v1435 = vadd.f32 0.0, %v1434
        %1436 = vmatprep.mubr.f32.mxu0 0.0
        %1437 = vmatmul.mubr.f32.gmra.mxu0 %v642
        %v1438 = vpop.f32.mrf.mxu0
        %v1439 = vadd.f32 0.0, %v1438
        %v1440 = vpop.f32.mrf.mxu0
        %v1441 = vadd.f32 0.0, %v1440
        %1442 = vmatprep.mubr.f32.mxu0 0.0
        %1443 = vmatmul.mubr.f32.gmra.mxu0 %v645
        %v1444 = vpop.f32.mrf.mxu0
        %v1445 = vadd.f32 0.0, %v1444
        %v1446 = vpop.f32.mrf.mxu0
        %v1447 = vadd.f32 0.0, %v1446
        %1448 = vmatprep.mubr.f32.mxu0 0.0
        %1449 = vmatmul.mubr.f32.gmra.mxu0 %v648
        %v1450 = vpop.f32.mrf.mxu0
        %v1451 = vadd.f32 0.0, %v1450
        %v1452 = vpop.f32.mrf.mxu0
        %v1453 = vadd.f32 0.0, %v1452
        %1454 = vmatprep.mubr.f32.mxu0 0.0
        %1455 = vmatmul.mubr.f32.gmra.mxu0 %v651
        %v1456 = vpop.f32.mrf.mxu0
        %v1457 = vadd.f32 0.0, %v1456
        %v1458 = vpop.f32.mrf.mxu0
        %v1459 = vadd.f32 0.0, %v1458
        %1460 = vmatprep.mubr.f32.mxu0 0.0
        %1461 = vmatmul.mubr.f32.gmra.mxu0 %v654
        %v1462 = vpop.f32.mrf.mxu0
        %v1463 = vadd.f32 0.0, %v1462
        %v1464 = vpop.f32.mrf.mxu0
        %v1465 = vadd.f32 0.0, %v1464
        %1466 = vmatprep.mubr.f32.mxu0 0.0
        %1467 = vmatmul.mubr.f32.gmra.mxu0 %v657
        %v1468 = vpop.f32.mrf.mxu0
        %v1469 = vadd.f32 0.0, %v1468
        %v1470 = vpop.f32.mrf.mxu0
        %v1471 = vadd.f32 0.0, %v1470
        %1472 = vmatprep.mubr.f32.mxu0 0.0
        %1473 = vmatmul.mubr.f32.gmra.mxu0 %v660
        %v1474 = vpop.f32.mrf.mxu0
        %v1475 = vadd.f32 0.0, %v1474
        %v1476 = vpop.f32.mrf.mxu0
        %v1477 = vadd.f32 0.0, %v1476
        %1478 = vmatprep.mubr.f32.mxu0 0.0
        %1479 = vmatmul.mubr.f32.gmra.mxu0 %v663
        %v1480 = vpop.f32.mrf.mxu0
        %v1481 = vadd.f32 0.0, %v1480
        %v1482 = vpop.f32.mrf.mxu0
        %v1483 = vadd.f32 0.0, %v1482
        %1484 = vmatprep.mubr.f32.mxu0 0.0
        %1485 = vmatmul.mubr.f32.gmra.mxu0 %v666
        %v1486 = vpop.f32.mrf.mxu0
        %v1487 = vadd.f32 0.0, %v1486
        %v1488 = vpop.f32.mrf.mxu0
        %v1489 = vadd.f32 0.0, %v1488
        %1490 = vmatprep.mubr.f32.mxu0 0.0
        %1491 = vmatmul.mubr.f32.gmra.mxu0 %v669
        %v1492 = vpop.f32.mrf.mxu0
        %v1493 = vadd.f32 0.0, %v1492
        %v1494 = vpop.f32.mrf.mxu0
        %v1495 = vadd.f32 0.0, %v1494
        %1496 = vmatprep.mubr.f32.mxu0 0.0
        %1497 = vmatmul.mubr.f32.gmra.mxu0 %v672
        %v1498 = vpop.f32.mrf.mxu0
        %v1499 = vadd.f32 0.0, %v1498
        %v1500 = vpop.f32.mrf.mxu0
        %v1501 = vadd.f32 0.0, %v1500
        %1502 = vmatprep.mubr.f32.mxu0 0.0
        %1503 = vmatmul.mubr.f32.gmra.mxu0 %v675
        %v1504 = vpop.f32.mrf.mxu0
        %v1505 = vadd.f32 0.0, %v1504
        %v1506 = vpop.f32.mrf.mxu0
        %v1507 = vadd.f32 0.0, %v1506
        %1508 = vmatprep.mubr.f32.mxu0 0.0
        %1509 = vmatmul.mubr.f32.gmra.mxu0 %v678
        %v1510 = vpop.f32.mrf.mxu0
        %v1511 = vadd.f32 0.0, %v1510
        %v1512 = vpop.f32.mrf.mxu0
        %v1513 = vadd.f32 0.0, %v1512
        %1514 = vmatprep.mubr.f32.mxu0 0.0
        %1515 = vmatmul.mubr.f32.gmra.mxu0 %v681
        %v1516 = vpop.f32.mrf.mxu0
        %v1517 = vadd.f32 0.0, %v1516
        %v1518 = vpop.f32.mrf.mxu0
        %v1519 = vadd.f32 0.0, %v1518
        %1520 = vmatprep.mubr.f32.mxu0 0.0
        %1521 = vmatmul.mubr.f32.gmra.mxu0 %v684
        %v1522 = vpop.f32.mrf.mxu0
        %v1523 = vadd.f32 0.0, %v1522
        %v1524 = vpop.f32.mrf.mxu0
        %v1525 = vadd.f32 0.0, %v1524
        %1526 = vmatprep.mubr.f32.mxu0 0.0
        %1527 = vmatmul.mubr.f32.gmra.mxu0 %v687
        %v1528 = vpop.f32.mrf.mxu0
        %v1529 = vadd.f32 0.0, %v1528
        %v1530 = vpop.f32.mrf.mxu0
        %v1531 = vadd.f32 0.0, %v1530
        %1532 = vmatprep.mubr.f32.mxu0 0.0
        %1533 = vmatmul.mubr.f32.gmra.mxu0 %v690
        %v1534 = vpop.f32.mrf.mxu0
        %v1535 = vadd.f32 0.0, %v1534
        %v1536 = vpop.f32.mrf.mxu0
        %v1537 = vadd.f32 0.0, %v1536
        %1538 = vmatprep.mubr.f32.mxu0 0.0
        %1539 = vmatmul.mubr.f32.gmra.mxu0 %v693
        %v1540 = vpop.f32.mrf.mxu0
        %v1541 = vadd.f32 0.0, %v1540
        %v1542 = vpop.f32.mrf.mxu0
        %v1543 = vadd.f32 0.0, %v1542
        %1544 = vdwg.mxu0
        %1545 = vmatprep.subr.mxu0 0.0
        %1546 = vmatpush1.msra.mxu0 0.0
        %1547 = vmatprep.subr.mxu0 0.0
        %1548 = vmatpush1.msra.mxu0 0.0
        %1549 = vmatprep.subr.mxu0 0.0
        %1550 = vmatpush1.msra.mxu0 0.0
        %1551 = vmatprep.subr.mxu0 0.0
        %1552 = vmatpush1.msra.mxu0 0.0
        %1553 = vmatprep.subr.mxu0 0.0
        %1554 = vmatpush1.msra.mxu0 0.0
        %1555 = vmatprep.subr.mxu0 0.0
        %1556 = vmatpush1.msra.mxu0 0.0
        %1557 = vmatprep.subr.mxu0 0.0
        %1558 = vmatpush1.msra.mxu0 0.0
        %1559 = vmatprep.subr.mxu0 0.0
        %1560 = vmatpush1.msra.mxu0 0.0
        %1561 = vmatprep.subr.mxu0 0.0
        %1562 = vmatpush1.msra.mxu0 0.0
        %1563 = vmatprep.subr.mxu0 0.0
        %1564 = vmatpush1.msra.mxu0 0.0
        %1565 = vmatprep.subr.mxu0 0.0
        %1566 = vmatpush1.msra.mxu0 0.0
        %1567 = vmatprep.subr.mxu0 0.0
        %1568 = vmatpush1.msra.mxu0 0.0
        %1569 = vmatprep.subr.mxu0 0.0
        %1570 = vmatpush1.msra.mxu0 0.0
        %1571 = vmatprep.subr.mxu0 0.0
        %1572 = vmatpush1.msra.mxu0 0.0
        %1573 = vmatprep.subr.mxu0 0.0
        %1574 = vmatpush1.msra.mxu0 %v512
        %1575 = vmatprep.subr.mxu0 0.0
        %1576 = vmatpush1.msra.mxu0 %v507
        %1577 = vmatprep.subr.mxu0 0.0
        %1578 = vmatpush2.msra.mxu0 0.0
        %1579 = vmatprep.subr.mxu0 0.0
        %1580 = vmatpush2.msra.mxu0 0.0
        %1581 = vmatprep.subr.mxu0 0.0
        %1582 = vmatpush2.msra.mxu0 0.0
        %1583 = vmatprep.subr.mxu0 0.0
        %1584 = vmatpush2.msra.mxu0 0.0
        %1585 = vmatprep.subr.mxu0 0.0
        %1586 = vmatpush2.msra.mxu0 0.0
        %1587 = vmatprep.subr.mxu0 0.0
        %1588 = vmatpush2.msra.mxu0 0.0
        %1589 = vmatprep.subr.mxu0 0.0
        %1590 = vmatpush2.msra.mxu0 0.0
        %1591 = vmatprep.subr.mxu0 0.0
        %1592 = vmatpush2.msra.mxu0 0.0
        %1593 = vmatprep.subr.mxu0 0.0
        %1594 = vmatpush2.msra.mxu0 0.0
        %1595 = vmatprep.subr.mxu0 0.0
        %1596 = vmatpush2.msra.mxu0 0.0
        %1597 = vmatprep.subr.mxu0 0.0
        %1598 = vmatpush2.msra.mxu0 0.0
        %1599 = vmatprep.subr.mxu0 0.0
        %1600 = vmatpush2.msra.mxu0 0.0
        %1601 = vmatprep.subr.mxu0 0.0
        %1602 = vmatpush2.msra.mxu0 0.0
        %1603 = vmatprep.subr.mxu0 0.0
        %1604 = vmatpush2.msra.mxu0 0.0
        %1605 = vmatprep.subr.mxu0 0.0
        %1606 = vmatpush2.msra.mxu0 0.0
        %1607 = vmatprep.subr.mxu0 0.0
        %1608 = vmatpush2.msra.mxu0 0.0
        %1609 = vmatprep.mubr.f32.mxu0 0.0
        %1610 = vmatmul.mubr.f32.gmra.mxu0 %v516
        %v1611 = vpop.f32.mrf.mxu0
        %v1612 = vadd.f32 0.0, %v1611
        %v1613 = vpop.f32.mrf.mxu0
        %1614 = vmatprep.mubr.f32.mxu0 0.0
        %1615 = vmatmul.mubr.f32.gmra.mxu0 %v519
        %v1616 = vpop.f32.mrf.mxu0
        %v1617 = vadd.f32 0.0, %v1616
        %v1618 = vpop.f32.mrf.mxu0
        %1619 = vmatprep.mubr.f32.mxu0 0.0
        %1620 = vmatmul.mubr.f32.gmra.mxu0 %v522
        %v1621 = vpop.f32.mrf.mxu0
        %v1622 = vadd.f32 0.0, %v1621
        %v1623 = vpop.f32.mrf.mxu0
        %1624 = vmatprep.mubr.f32.mxu0 0.0
        %1625 = vmatmul.mubr.f32.gmra.mxu0 %v525
        %v1626 = vpop.f32.mrf.mxu0
        %v1627 = vadd.f32 0.0, %v1626
        %v1628 = vpop.f32.mrf.mxu0
        %1629 = vmatprep.mubr.f32.mxu0 0.0
        %1630 = vmatmul.mubr.f32.gmra.mxu0 %v528
        %v1631 = vpop.f32.mrf.mxu0
        %v1632 = vadd.f32 0.0, %v1631
        %v1633 = vpop.f32.mrf.mxu0
        %1634 = vmatprep.mubr.f32.mxu0 0.0
        %1635 = vmatmul.mubr.f32.gmra.mxu0 %v531
        %v1636 = vpop.f32.mrf.mxu0
        %v1637 = vadd.f32 0.0, %v1636
        %v1638 = vpop.f32.mrf.mxu0
        %1639 = vmatprep.mubr.f32.mxu0 0.0
        %1640 = vmatmul.mubr.f32.gmra.mxu0 %v534
        %v1641 = vpop.f32.mrf.mxu0
        %v1642 = vadd.f32 0.0, %v1641
        %v1643 = vpop.f32.mrf.mxu0
        %1644 = vmatprep.mubr.f32.mxu0 0.0
        %1645 = vmatmul.mubr.f32.gmra.mxu0 %v537
        %v1646 = vpop.f32.mrf.mxu0
        %v1647 = vadd.f32 0.0, %v1646
        %v1648 = vpop.f32.mrf.mxu0
        %1649 = vmatprep.mubr.f32.mxu0 0.0
        %1650 = vmatmul.mubr.f32.gmra.mxu0 %v540
        %v1651 = vpop.f32.mrf.mxu0
        %v1652 = vadd.f32 0.0, %v1651
        %v1653 = vpop.f32.mrf.mxu0
        %1654 = vmatprep.mubr.f32.mxu0 0.0
        %1655 = vmatmul.mubr.f32.gmra.mxu0 %v543
        %v1656 = vpop.f32.mrf.mxu0
        %v1657 = vadd.f32 0.0, %v1656
        %v1658 = vpop.f32.mrf.mxu0
        %1659 = vmatprep.mubr.f32.mxu0 0.0
        %1660 = vmatmul.mubr.f32.gmra.mxu0 %v546
        %v1661 = vpop.f32.mrf.mxu0
        %v1662 = vadd.f32 0.0, %v1661
        %v1663 = vpop.f32.mrf.mxu0
        %1664 = vmatprep.mubr.f32.mxu0 0.0
        %1665 = vmatmul.mubr.f32.gmra.mxu0 %v549
        %v1666 = vpop.f32.mrf.mxu0
        %v1667 = vadd.f32 0.0, %v1666
        %v1668 = vpop.f32.mrf.mxu0
        %1669 = vmatprep.mubr.f32.mxu0 0.0
        %1670 = vmatmul.mubr.f32.gmra.mxu0 %v552
        %v1671 = vpop.f32.mrf.mxu0
        %v1672 = vadd.f32 0.0, %v1671
        %v1673 = vpop.f32.mrf.mxu0
        %1674 = vmatprep.mubr.f32.mxu0 0.0
        %1675 = vmatmul.mubr.f32.gmra.mxu0 %v555
        %v1676 = vpop.f32.mrf.mxu0
        %v1677 = vadd.f32 0.0, %v1676
        %v1678 = vpop.f32.mrf.mxu0
        %1679 = vmatprep.mubr.f32.mxu0 0.0
        %1680 = vmatmul.mubr.f32.gmra.mxu0 %v558
        %v1681 = vpop.f32.mrf.mxu0
        %v1682 = vadd.f32 0.0, %v1681
        %v1683 = vpop.f32.mrf.mxu0
        %1684 = vmatprep.mubr.f32.mxu0 0.0
        %1685 = vmatmul.mubr.f32.gmra.mxu0 %v561
        %v1686 = vpop.f32.mrf.mxu0
        %v1687 = vadd.f32 0.0, %v1686
        %v1688 = vpop.f32.mrf.mxu0
        %1689 = vmatprep.mubr.f32.mxu0 0.0
        %1690 = vmatmul.mubr.f32.gmra.mxu0 %v564
        %v1691 = vpop.f32.mrf.mxu0
        %v1692 = vadd.f32 0.0, %v1691
        %v1693 = vpop.f32.mrf.mxu0
        %1694 = vmatprep.mubr.f32.mxu0 0.0
        %1695 = vmatmul.mubr.f32.gmra.mxu0 %v567
        %v1696 = vpop.f32.mrf.mxu0
        %v1697 = vadd.f32 0.0, %v1696
        %v1698 = vpop.f32.mrf.mxu0
        %1699 = vmatprep.mubr.f32.mxu0 0.0
        %1700 = vmatmul.mubr.f32.gmra.mxu0 %v570
        %v1701 = vpop.f32.mrf.mxu0
        %v1702 = vadd.f32 0.0, %v1701
        %v1703 = vpop.f32.mrf.mxu0
        %1704 = vmatprep.mubr.f32.mxu0 0.0
        %1705 = vmatmul.mubr.f32.gmra.mxu0 %v573
        %v1706 = vpop.f32.mrf.mxu0
        %v1707 = vadd.f32 0.0, %v1706
        %v1708 = vpop.f32.mrf.mxu0
        %1709 = vmatprep.mubr.f32.mxu0 0.0
        %1710 = vmatmul.mubr.f32.gmra.mxu0 %v576
        %v1711 = vpop.f32.mrf.mxu0
        %v1712 = vadd.f32 0.0, %v1711
        %v1713 = vpop.f32.mrf.mxu0
        %1714 = vmatprep.mubr.f32.mxu0 0.0
        %1715 = vmatmul.mubr.f32.gmra.mxu0 %v579
        %v1716 = vpop.f32.mrf.mxu0
        %v1717 = vadd.f32 0.0, %v1716
        %v1718 = vpop.f32.mrf.mxu0
        %1719 = vmatprep.mubr.f32.mxu0 0.0
        %1720 = vmatmul.mubr.f32.gmra.mxu0 %v582
        %v1721 = vpop.f32.mrf.mxu0
        %v1722 = vadd.f32 0.0, %v1721
        %v1723 = vpop.f32.mrf.mxu0
        %1724 = vmatprep.mubr.f32.mxu0 0.0
        %1725 = vmatmul.mubr.f32.gmra.mxu0 %v585
        %v1726 = vpop.f32.mrf.mxu0
        %v1727 = vadd.f32 0.0, %v1726
        %v1728 = vpop.f32.mrf.mxu0
        %1729 = vmatprep.mubr.f32.mxu0 0.0
        %1730 = vmatmul.mubr.f32.gmra.mxu0 %v588
        %v1731 = vpop.f32.mrf.mxu0
        %v1732 = vadd.f32 0.0, %v1731
        %v1733 = vpop.f32.mrf.mxu0
        %1734 = vmatprep.mubr.f32.mxu0 0.0
        %1735 = vmatmul.mubr.f32.gmra.mxu0 %v591
        %v1736 = vpop.f32.mrf.mxu0
        %v1737 = vadd.f32 0.0, %v1736
        %v1738 = vpop.f32.mrf.mxu0
        %1739 = vmatprep.mubr.f32.mxu0 0.0
        %1740 = vmatmul.mubr.f32.gmra.mxu0 %v594
        %v1741 = vpop.f32.mrf.mxu0
        %v1742 = vadd.f32 0.0, %v1741
        %v1743 = vpop.f32.mrf.mxu0
        %1744 = vmatprep.mubr.f32.mxu0 0.0
        %1745 = vmatmul.mubr.f32.gmra.mxu0 %v597
        %v1746 = vpop.f32.mrf.mxu0
        %v1747 = vadd.f32 0.0, %v1746
        %v1748 = vpop.f32.mrf.mxu0
        %1749 = vmatprep.mubr.f32.mxu0 0.0
        %1750 = vmatmul.mubr.f32.gmra.mxu0 %v600
        %v1751 = vpop.f32.mrf.mxu0
        %v1752 = vadd.f32 0.0, %v1751
        %v1753 = vpop.f32.mrf.mxu0
        %1754 = vmatprep.mubr.f32.mxu0 0.0
        %1755 = vmatmul.mubr.f32.gmra.mxu0 %v603
        %v1756 = vpop.f32.mrf.mxu0
        %v1757 = vadd.f32 0.0, %v1756
        %v1758 = vpop.f32.mrf.mxu0
        %1759 = vmatprep.mubr.f32.mxu0 0.0
        %1760 = vmatmul.mubr.f32.gmra.mxu0 %v606
        %v1761 = vpop.f32.mrf.mxu0
        %v1762 = vadd.f32 0.0, %v1761
        %v1763 = vpop.f32.mrf.mxu0
        %1764 = vmatprep.mubr.f32.mxu0 0.0
        %1765 = vmatmul.mubr.f32.gmra.mxu0 %v609
        %v1766 = vpop.f32.mrf.mxu0
        %v1767 = vadd.f32 0.0, %v1766
        %v1768 = vpop.f32.mrf.mxu0
        %1769 = vmatprep.mubr.f32.mxu0 0.0
        %1770 = vmatmul.mubr.f32.gmra.mxu0 %v612
        %v1771 = vpop.f32.mrf.mxu0
        %v1772 = vadd.f32 0.0, %v1771
        %v1773 = vpop.f32.mrf.mxu0
        %1774 = vmatprep.mubr.f32.mxu0 0.0
        %1775 = vmatmul.mubr.f32.gmra.mxu0 %v615
        %v1776 = vpop.f32.mrf.mxu0
        %v1777 = vadd.f32 0.0, %v1776
        %v1778 = vpop.f32.mrf.mxu0
        %1779 = vmatprep.mubr.f32.mxu0 0.0
        %1780 = vmatmul.mubr.f32.gmra.mxu0 %v618
        %v1781 = vpop.f32.mrf.mxu0
        %v1782 = vadd.f32 0.0, %v1781
        %v1783 = vpop.f32.mrf.mxu0
        %1784 = vmatprep.mubr.f32.mxu0 0.0
        %1785 = vmatmul.mubr.f32.gmra.mxu0 %v621
        %v1786 = vpop.f32.mrf.mxu0
        %v1787 = vadd.f32 0.0, %v1786
        %v1788 = vpop.f32.mrf.mxu0
        %1789 = vmatprep.mubr.f32.mxu0 0.0
        %1790 = vmatmul.mubr.f32.gmra.mxu0 %v624
        %v1791 = vpop.f32.mrf.mxu0
        %v1792 = vadd.f32 0.0, %v1791
        %v1793 = vpop.f32.mrf.mxu0
        %1794 = vmatprep.mubr.f32.mxu0 0.0
        %1795 = vmatmul.mubr.f32.gmra.mxu0 %v627
        %v1796 = vpop.f32.mrf.mxu0
        %v1797 = vadd.f32 0.0, %v1796
        %v1798 = vpop.f32.mrf.mxu0
        %1799 = vmatprep.mubr.f32.mxu0 0.0
        %1800 = vmatmul.mubr.f32.gmra.mxu0 %v630
        %v1801 = vpop.f32.mrf.mxu0
        %v1802 = vadd.f32 0.0, %v1801
        %v1803 = vpop.f32.mrf.mxu0
        %1804 = vmatprep.mubr.f32.mxu0 0.0
        %1805 = vmatmul.mubr.f32.gmra.mxu0 %v633
        %v1806 = vpop.f32.mrf.mxu0
        %v1807 = vadd.f32 0.0, %v1806
        %v1808 = vpop.f32.mrf.mxu0
        %1809 = vmatprep.mubr.f32.mxu0 0.0
        %1810 = vmatmul.mubr.f32.gmra.mxu0 %v636
        %v1811 = vpop.f32.mrf.mxu0
        %v1812 = vadd.f32 0.0, %v1811
        %v1813 = vpop.f32.mrf.mxu0
        %1814 = vmatprep.mubr.f32.mxu0 0.0
        %1815 = vmatmul.mubr.f32.gmra.mxu0 %v639
        %v1816 = vpop.f32.mrf.mxu0
        %v1817 = vadd.f32 0.0, %v1816
        %v1818 = vpop.f32.mrf.mxu0
        %1819 = vmatprep.mubr.f32.mxu0 0.0
        %1820 = vmatmul.mubr.f32.gmra.mxu0 %v642
        %v1821 = vpop.f32.mrf.mxu0
        %v1822 = vadd.f32 0.0, %v1821
        %v1823 = vpop.f32.mrf.mxu0
        %1824 = vmatprep.mubr.f32.mxu0 0.0
        %1825 = vmatmul.mubr.f32.gmra.mxu0 %v645
        %v1826 = vpop.f32.mrf.mxu0
        %v1827 = vadd.f32 0.0, %v1826
        %v1828 = vpop.f32.mrf.mxu0
        %1829 = vmatprep.mubr.f32.mxu0 0.0
        %1830 = vmatmul.mubr.f32.gmra.mxu0 %v648
        %v1831 = vpop.f32.mrf.mxu0
        %v1832 = vadd.f32 0.0, %v1831
        %v1833 = vpop.f32.mrf.mxu0
        %1834 = vmatprep.mubr.f32.mxu0 0.0
        %1835 = vmatmul.mubr.f32.gmra.mxu0 %v651
        %v1836 = vpop.f32.mrf.mxu0
        %v1837 = vadd.f32 0.0, %v1836
        %v1838 = vpop.f32.mrf.mxu0
        %1839 = vmatprep.mubr.f32.mxu0 0.0
        %1840 = vmatmul.mubr.f32.gmra.mxu0 %v654
        %v1841 = vpop.f32.mrf.mxu0
        %v1842 = vadd.f32 0.0, %v1841
        %v1843 = vpop.f32.mrf.mxu0
        %1844 = vmatprep.mubr.f32.mxu0 0.0
        %1845 = vmatmul.mubr.f32.gmra.mxu0 %v657
        %v1846 = vpop.f32.mrf.mxu0
        %v1847 = vadd.f32 0.0, %v1846
        %v1848 = vpop.f32.mrf.mxu0
        %1849 = vmatprep.mubr.f32.mxu0 0.0
        %1850 = vmatmul.mubr.f32.gmra.mxu0 %v660
        %v1851 = vpop.f32.mrf.mxu0
        %v1852 = vadd.f32 0.0, %v1851
        %v1853 = vpop.f32.mrf.mxu0
        %1854 = vmatprep.mubr.f32.mxu0 0.0
        %1855 = vmatmul.mubr.f32.gmra.mxu0 %v663
        %v1856 = vpop.f32.mrf.mxu0
        %v1857 = vadd.f32 0.0, %v1856
        %v1858 = vpop.f32.mrf.mxu0
        %1859 = vmatprep.mubr.f32.mxu0 0.0
        %1860 = vmatmul.mubr.f32.gmra.mxu0 %v666
        %v1861 = vpop.f32.mrf.mxu0
        %v1862 = vadd.f32 0.0, %v1861
        %v1863 = vpop.f32.mrf.mxu0
        %1864 = vmatprep.mubr.f32.mxu0 0.0
        %1865 = vmatmul.mubr.f32.gmra.mxu0 %v669
        %v1866 = vpop.f32.mrf.mxu0
        %v1867 = vadd.f32 0.0, %v1866
        %v1868 = vpop.f32.mrf.mxu0
        %1869 = vmatprep.mubr.f32.mxu0 0.0
        %1870 = vmatmul.mubr.f32.gmra.mxu0 %v672
        %v1871 = vpop.f32.mrf.mxu0
        %v1872 = vadd.f32 0.0, %v1871
        %v1873 = vpop.f32.mrf.mxu0
        %1874 = vmatprep.mubr.f32.mxu0 0.0
        %1875 = vmatmul.mubr.f32.gmra.mxu0 %v675
        %v1876 = vpop.f32.mrf.mxu0
        %v1877 = vadd.f32 0.0, %v1876
        %v1878 = vpop.f32.mrf.mxu0
        %1879 = vmatprep.mubr.f32.mxu0 0.0
        %1880 = vmatmul.mubr.f32.gmra.mxu0 %v678
        %v1881 = vpop.f32.mrf.mxu0
        %v1882 = vadd.f32 0.0, %v1881
        %v1883 = vpop.f32.mrf.mxu0
        %1884 = vmatprep.mubr.f32.mxu0 0.0
        %1885 = vmatmul.mubr.f32.gmra.mxu0 %v681
        %v1886 = vpop.f32.mrf.mxu0
        %v1887 = vadd.f32 0.0, %v1886
        %v1888 = vpop.f32.mrf.mxu0
        %1889 = vmatprep.mubr.f32.mxu0 0.0
        %1890 = vmatmul.mubr.f32.gmra.mxu0 %v684
        %v1891 = vpop.f32.mrf.mxu0
        %v1892 = vadd.f32 0.0, %v1891
        %v1893 = vpop.f32.mrf.mxu0
        %1894 = vmatprep.mubr.f32.mxu0 0.0
        %1895 = vmatmul.mubr.f32.gmra.mxu0 %v687
        %v1896 = vpop.f32.mrf.mxu0
        %v1897 = vadd.f32 0.0, %v1896
        %v1898 = vpop.f32.mrf.mxu0
        %1899 = vmatprep.mubr.f32.mxu0 0.0
        %1900 = vmatmul.mubr.f32.gmra.mxu0 %v690
        %v1901 = vpop.f32.mrf.mxu0
        %v1902 = vadd.f32 0.0, %v1901
        %v1903 = vpop.f32.mrf.mxu0
        %1904 = vmatprep.mubr.f32.mxu0 0.0
        %1905 = vmatmul.mubr.f32.gmra.mxu0 %v693
        %v1906 = vpop.f32.mrf.mxu0
        %v1907 = vadd.f32 0.0, %v1906
        %v1908 = vpop.f32.mrf.mxu0
        %1909 = vdwg.mxu0
        %1910 = vst [vmem:[%s204] sm:$0xff] %v762
        %1911 = vst [vmem:[%s204 + $0x8] sm:$0xff] %v764
        %1912 = vst [vmem:[%s204 + $0x10] sm:$0xff] %v1187
        %1913 = vst [vmem:[%s204 + $0x18] sm:$0xff] %v1189
        %1914 = vst [vmem:[%s204 + $0x20] sm:$0xff] %v1612
        %1915 = vst [vmem:[%s204 + $0x28] sm:$0xff] %v768
        %1916 = vst [vmem:[%s204 + $0x30] sm:$0xff] %v770
        %1917 = vst [vmem:[%s204 + $0x38] sm:$0xff] %v1193
        %1918 = vst [vmem:[%s204 + $0x40] sm:$0xff] %v1195
        %1919 = vst [vmem:[%s204 + $0x48] sm:$0xff] %v1617
        %1920 = vst [vmem:[%s204 + $0x50] sm:$0xff] %v774
        %1921 = vst [vmem:[%s204 + $0x58] sm:$0xff] %v776
        %1922 = vst [vmem:[%s204 + $0x60] sm:$0xff] %v1199
        %1923 = vst [vmem:[%s204 + $0x68] sm:$0xff] %v1201
        %1924 = vst [vmem:[%s204 + $0x70] sm:$0xff] %v1622
        %1925 = vst [vmem:[%s204 + $0x78] sm:$0xff] %v780
        %1926 = vst [vmem:[%s204 + $0x80] sm:$0xff] %v782
        %1927 = vst [vmem:[%s204 + $0x88] sm:$0xff] %v1205
        %1928 = vst [vmem:[%s204 + $0x90] sm:$0xff] %v1207
        %1929 = vst [vmem:[%s204 + $0x98] sm:$0xff] %v1627
        %1930 = vst [vmem:[%s204 + $0xa0] sm:$0xff] %v786
        %1931 = vst [vmem:[%s204 + $0xa8] sm:$0xff] %v788
        %1932 = vst [vmem:[%s204 + $0xb0] sm:$0xff] %v1211
        %1933 = vst [vmem:[%s204 + $0xb8] sm:$0xff] %v1213
        %1934 = vst [vmem:[%s204 + $0xc0] sm:$0xff] %v1632
        %1935 = vst [vmem:[%s204 + $0xc8] sm:$0xff] %v792
        %1936 = vst [vmem:[%s204 + $0xd0] sm:$0xff] %v794
        %1937 = vst [vmem:[%s204 + $0xd8] sm:$0xff] %v1217
        %1938 = vst [vmem:[%s204 + $0xe0] sm:$0xff] %v1219
        %1939 = vst [vmem:[%s204 + $0xe8] sm:$0xff] %v1637
        %1940 = vst [vmem:[%s204 + $0xf0] sm:$0xff] %v798
        %1941 = vst [vmem:[%s204 + $0xf8] sm:$0xff] %v800
        %1942 = vst [vmem:[%s204 + $0x100] sm:$0xff] %v1223
        %1943 = vst [vmem:[%s204 + $0x108] sm:$0xff] %v1225
        %1944 = vst [vmem:[%s204 + $0x110] sm:$0xff] %v1642
        %1945 = vst [vmem:[%s204 + $0x118] sm:$0xff] %v804
        %1946 = vst [vmem:[%s204 + $0x120] sm:$0xff] %v806
        %1947 = vst [vmem:[%s204 + $0x128] sm:$0xff] %v1229
        %1948 = vst [vmem:[%s204 + $0x130] sm:$0xff] %v1231
        %1949 = vst [vmem:[%s204 + $0x138] sm:$0xff] %v1647
        %1950 = vst [vmem:[%s204 + $0x140] sm:$0xff] %v810
        %1951 = vst [vmem:[%s204 + $0x148] sm:$0xff] %v812
        %1952 = vst [vmem:[%s204 + $0x150] sm:$0xff] %v1235
        %1953 = vst [vmem:[%s204 + $0x158] sm:$0xff] %v1237
        %1954 = vst [vmem:[%s204 + $0x160] sm:$0xff] %v1652
        %1955 = vst [vmem:[%s204 + $0x168] sm:$0xff] %v816
        %1956 = vst [vmem:[%s204 + $0x170] sm:$0xff] %v818
        %1957 = vst [vmem:[%s204 + $0x178] sm:$0xff] %v1241
        %1958 = vst [vmem:[%s204 + $0x180] sm:$0xff] %v1243
        %1959 = vst [vmem:[%s204 + $0x188] sm:$0xff] %v1657
        %1960 = vst [vmem:[%s204 + $0x190] sm:$0xff] %v822
        %1961 = vst [vmem:[%s204 + $0x198] sm:$0xff] %v824
        %1962 = vst [vmem:[%s204 + $0x1a0] sm:$0xff] %v1247
        %1963 = vst [vmem:[%s204 + $0x1a8] sm:$0xff] %v1249
        %1964 = vst [vmem:[%s204 + $0x1b0] sm:$0xff] %v1662
        %1965 = vst [vmem:[%s204 + $0x1b8] sm:$0xff] %v828
        %1966 = vst [vmem:[%s204 + $0x1c0] sm:$0xff] %v830
        %1967 = vst [vmem:[%s204 + $0x1c8] sm:$0xff] %v1253
        %1968 = vst [vmem:[%s204 + $0x1d0] sm:$0xff] %v1255
        %1969 = vst [vmem:[%s204 + $0x1d8] sm:$0xff] %v1667
        %1970 = vst [vmem:[%s204 + $0x1e0] sm:$0xff] %v834
        %1971 = vst [vmem:[%s204 + $0x1e8] sm:$0xff] %v836
        %1972 = vst [vmem:[%s204 + $0x1f0] sm:$0xff] %v1259
        %1973 = vst [vmem:[%s204 + $0x1f8] sm:$0xff] %v1261
        %1974 = vst [vmem:[%s204 + $0x200] sm:$0xff] %v1672
        %1975 = vst [vmem:[%s204 + $0x208] sm:$0xff] %v840
        %1976 = vst [vmem:[%s204 + $0x210] sm:$0xff] %v842
        %1977 = vst [vmem:[%s204 + $0x218] sm:$0xff] %v1265
        %1978 = vst [vmem:[%s204 + $0x220] sm:$0xff] %v1267
        %1979 = vst [vmem:[%s204 + $0x228] sm:$0xff] %v1677
        %1980 = vst [vmem:[%s204 + $0x230] sm:$0xff] %v846
        %1981 = vst [vmem:[%s204 + $0x238] sm:$0xff] %v848
        %1982 = vst [vmem:[%s204 + $0x240] sm:$0xff] %v1271
        %1983 = vst [vmem:[%s204 + $0x248] sm:$0xff] %v1273
        %1984 = vst [vmem:[%s204 + $0x250] sm:$0xff] %v1682
        %1985 = vst [vmem:[%s204 + $0x258] sm:$0xff] %v852
        %1986 = vst [vmem:[%s204 + $0x260] sm:$0xff] %v854
        %1987 = vst [vmem:[%s204 + $0x268] sm:$0xff] %v1277
        %1988 = vst [vmem:[%s204 + $0x270] sm:$0xff] %v1279
        %1989 = vst [vmem:[%s204 + $0x278] sm:$0xff] %v1687
        %1990 = vst [vmem:[%s204 + $0x280] sm:$0xff] %v858
        %1991 = vst [vmem:[%s204 + $0x288] sm:$0xff] %v860
        %1992 = vst [vmem:[%s204 + $0x290] sm:$0xff] %v1283
        %1993 = vst [vmem:[%s204 + $0x298] sm:$0xff] %v1285
        %1994 = vst [vmem:[%s204 + $0x2a0] sm:$0xff] %v1692
        %1995 = vst [vmem:[%s204 + $0x2a8] sm:$0xff] %v864
        %1996 = vst [vmem:[%s204 + $0x2b0] sm:$0xff] %v866
        %1997 = vst [vmem:[%s204 + $0x2b8] sm:$0xff] %v1289
        %1998 = vst [vmem:[%s204 + $0x2c0] sm:$0xff] %v1291
        %1999 = vst [vmem:[%s204 + $0x2c8] sm:$0xff] %v1697
        %2000 = vst [vmem:[%s204 + $0x2d0] sm:$0xff] %v870
        %2001 = vst [vmem:[%s204 + $0x2d8] sm:$0xff] %v872
        %2002 = vst [vmem:[%s204 + $0x2e0] sm:$0xff] %v1295
        %2003 = vst [vmem:[%s204 + $0x2e8] sm:$0xff] %v1297
        %2004 = vst [vmem:[%s204 + $0x2f0] sm:$0xff] %v1702
        %2005 = vst [vmem:[%s204 + $0x2f8] sm:$0xff] %v876
        %2006 = vst [vmem:[%s204 + $0x300] sm:$0xff] %v878
        %2007 = vst [vmem:[%s204 + $0x308] sm:$0xff] %v1301
        %2008 = vst [vmem:[%s204 + $0x310] sm:$0xff] %v1303
        %2009 = vst [vmem:[%s204 + $0x318] sm:$0xff] %v1707
        %2010 = vst [vmem:[%s204 + $0x320] sm:$0xff] %v882
        %2011 = vst [vmem:[%s204 + $0x328] sm:$0xff] %v884
        %2012 = vst [vmem:[%s204 + $0x330] sm:$0xff] %v1307
        %2013 = vst [vmem:[%s204 + $0x338] sm:$0xff] %v1309
        %2014 = vst [vmem:[%s204 + $0x340] sm:$0xff] %v1712
        %2015 = vst [vmem:[%s204 + $0x348] sm:$0xff] %v888
        %2016 = vst [vmem:[%s204 + $0x350] sm:$0xff] %v890
        %2017 = vst [vmem:[%s204 + $0x358] sm:$0xff] %v1313
        %2018 = vst [vmem:[%s204 + $0x360] sm:$0xff] %v1315
        %2019 = vst [vmem:[%s204 + $0x368] sm:$0xff] %v1717
        %2020 = vst [vmem:[%s204 + $0x370] sm:$0xff] %v894
        %2021 = vst [vmem:[%s204 + $0x378] sm:$0xff] %v896
        %2022 = vst [vmem:[%s204 + $0x380] sm:$0xff] %v1319
        %2023 = vst [vmem:[%s204 + $0x388] sm:$0xff] %v1321
        %2024 = vst [vmem:[%s204 + $0x390] sm:$0xff] %v1722
        %2025 = vst [vmem:[%s204 + $0x398] sm:$0xff] %v900
        %2026 = vst [vmem:[%s204 + $0x3a0] sm:$0xff] %v902
        %2027 = vst [vmem:[%s204 + $0x3a8] sm:$0xff] %v1325
        %2028 = vst [vmem:[%s204 + $0x3b0] sm:$0xff] %v1327
        %2029 = vst [vmem:[%s204 + $0x3b8] sm:$0xff] %v1727
        %2030 = vst [vmem:[%s204 + $0x3c0] sm:$0xff] %v906
        %2031 = vst [vmem:[%s204 + $0x3c8] sm:$0xff] %v908
        %2032 = vst [vmem:[%s204 + $0x3d0] sm:$0xff] %v1331
        %2033 = vst [vmem:[%s204 + $0x3d8] sm:$0xff] %v1333
        %2034 = vst [vmem:[%s204 + $0x3e0] sm:$0xff] %v1732
        %2035 = vst [vmem:[%s204 + $0x3e8] sm:$0xff] %v912
        %2036 = vst [vmem:[%s204 + $0x3f0] sm:$0xff] %v914
        %2037 = vst [vmem:[%s204 + $0x3f8] sm:$0xff] %v1337
        %2038 = vst [vmem:[%s204 + $0x400] sm:$0xff] %v1339
        %2039 = vst [vmem:[%s204 + $0x408] sm:$0xff] %v1737
        %2040 = vst [vmem:[%s204 + $0x410] sm:$0xff] %v918
        %2041 = vst [vmem:[%s204 + $0x418] sm:$0xff] %v920
        %2042 = vst [vmem:[%s204 + $0x420] sm:$0xff] %v1343
        %2043 = vst [vmem:[%s204 + $0x428] sm:$0xff] %v1345
        %2044 = vst [vmem:[%s204 + $0x430] sm:$0xff] %v1742
        %2045 = vst [vmem:[%s204 + $0x438] sm:$0xff] %v924
        %2046 = vst [vmem:[%s204 + $0x440] sm:$0xff] %v926
        %2047 = vst [vmem:[%s204 + $0x448] sm:$0xff] %v1349
        %2048 = vst [vmem:[%s204 + $0x450] sm:$0xff] %v1351
        %2049 = vst [vmem:[%s204 + $0x458] sm:$0xff] %v1747
        %2050 = vst [vmem:[%s204 + $0x460] sm:$0xff] %v930
        %2051 = vst [vmem:[%s204 + $0x468] sm:$0xff] %v932
        %2052 = vst [vmem:[%s204 + $0x470] sm:$0xff] %v1355
        %2053 = vst [vmem:[%s204 + $0x478] sm:$0xff] %v1357
        %2054 = vst [vmem:[%s204 + $0x480] sm:$0xff] %v1752
        %2055 = vst [vmem:[%s204 + $0x488] sm:$0xff] %v936
        %2056 = vst [vmem:[%s204 + $0x490] sm:$0xff] %v938
        %2057 = vst [vmem:[%s204 + $0x498] sm:$0xff] %v1361
        %2058 = vst [vmem:[%s204 + $0x4a0] sm:$0xff] %v1363
        %2059 = vst [vmem:[%s204 + $0x4a8] sm:$0xff] %v1757
        %2060 = vst [vmem:[%s204 + $0x4b0] sm:$0xff] %v942
        %2061 = vst [vmem:[%s204 + $0x4b8] sm:$0xff] %v944
        %2062 = vst [vmem:[%s204 + $0x4c0] sm:$0xff] %v1367
        %2063 = vst [vmem:[%s204 + $0x4c8] sm:$0xff] %v1369
        %2064 = vst [vmem:[%s204 + $0x4d0] sm:$0xff] %v1762
        %2065 = vst [vmem:[%s204 + $0x4d8] sm:$0xff] %v948
        %2066 = vst [vmem:[%s204 + $0x4e0] sm:$0xff] %v950
        %2067 = vst [vmem:[%s204 + $0x4e8] sm:$0xff] %v1373
        %2068 = vst [vmem:[%s204 + $0x4f0] sm:$0xff] %v1375
        %2069 = vst [vmem:[%s204 + $0x4f8] sm:$0xff] %v1767
        %2070 = vst [vmem:[%s204 + $0x500] sm:$0xff] %v954
        %2071 = vst [vmem:[%s204 + $0x508] sm:$0xff] %v956
        %2072 = vst [vmem:[%s204 + $0x510] sm:$0xff] %v1379
        %2073 = vst [vmem:[%s204 + $0x518] sm:$0xff] %v1381
        %2074 = vst [vmem:[%s204 + $0x520] sm:$0xff] %v1772
        %2075 = vst [vmem:[%s204 + $0x528] sm:$0xff] %v960
        %2076 = vst [vmem:[%s204 + $0x530] sm:$0xff] %v962
        %2077 = vst [vmem:[%s204 + $0x538] sm:$0xff] %v1385
        %2078 = vst [vmem:[%s204 + $0x540] sm:$0xff] %v1387
        %2079 = vst [vmem:[%s204 + $0x548] sm:$0xff] %v1777
        %2080 = vst [vmem:[%s204 + $0x550] sm:$0xff] %v966
        %2081 = vst [vmem:[%s204 + $0x558] sm:$0xff] %v968
        %2082 = vst [vmem:[%s204 + $0x560] sm:$0xff] %v1391
        %2083 = vst [vmem:[%s204 + $0x568] sm:$0xff] %v1393
        %2084 = vst [vmem:[%s204 + $0x570] sm:$0xff] %v1782
        %2085 = vst [vmem:[%s204 + $0x578] sm:$0xff] %v972
        %2086 = vst [vmem:[%s204 + $0x580] sm:$0xff] %v974
        %2087 = vst [vmem:[%s204 + $0x588] sm:$0xff] %v1397
        %2088 = vst [vmem:[%s204 + $0x590] sm:$0xff] %v1399
        %2089 = vst [vmem:[%s204 + $0x598] sm:$0xff] %v1787
        %2090 = vst [vmem:[%s204 + $0x5a0] sm:$0xff] %v978
        %2091 = vst [vmem:[%s204 + $0x5a8] sm:$0xff] %v980
        %2092 = vst [vmem:[%s204 + $0x5b0] sm:$0xff] %v1403
        %2093 = vst [vmem:[%s204 + $0x5b8] sm:$0xff] %v1405
        %2094 = vst [vmem:[%s204 + $0x5c0] sm:$0xff] %v1792
        %2095 = vst [vmem:[%s204 + $0x5c8] sm:$0xff] %v984
        %2096 = vst [vmem:[%s204 + $0x5d0] sm:$0xff] %v986
        %2097 = vst [vmem:[%s204 + $0x5d8] sm:$0xff] %v1409
        %2098 = vst [vmem:[%s204 + $0x5e0] sm:$0xff] %v1411
        %2099 = vst [vmem:[%s204 + $0x5e8] sm:$0xff] %v1797
        %2100 = vst [vmem:[%s204 + $0x5f0] sm:$0xff] %v990
        %2101 = vst [vmem:[%s204 + $0x5f8] sm:$0xff] %v992
        %2102 = vst [vmem:[%s204 + $0x600] sm:$0xff] %v1415
        %2103 = vst [vmem:[%s204 + $0x608] sm:$0xff] %v1417
        %2104 = vst [vmem:[%s204 + $0x610] sm:$0xff] %v1802
        %2105 = vst [vmem:[%s204 + $0x618] sm:$0xff] %v996
        %2106 = vst [vmem:[%s204 + $0x620] sm:$0xff] %v998
        %2107 = vst [vmem:[%s204 + $0x628] sm:$0xff] %v1421
        %2108 = vst [vmem:[%s204 + $0x630] sm:$0xff] %v1423
        %2109 = vst [vmem:[%s204 + $0x638] sm:$0xff] %v1807
        %2110 = vst [vmem:[%s204 + $0x640] sm:$0xff] %v1002
        %2111 = vst [vmem:[%s204 + $0x648] sm:$0xff] %v1004
        %2112 = vst [vmem:[%s204 + $0x650] sm:$0xff] %v1427
        %2113 = vst [vmem:[%s204 + $0x658] sm:$0xff] %v1429
        %2114 = vst [vmem:[%s204 + $0x660] sm:$0xff] %v1812
        %2115 = vst [vmem:[%s204 + $0x668] sm:$0xff] %v1008
        %2116 = vst [vmem:[%s204 + $0x670] sm:$0xff] %v1010
        %2117 = vst [vmem:[%s204 + $0x678] sm:$0xff] %v1433
        %2118 = vst [vmem:[%s204 + $0x680] sm:$0xff] %v1435
        %2119 = vst [vmem:[%s204 + $0x688] sm:$0xff] %v1817
        %2120 = vst [vmem:[%s204 + $0x690] sm:$0xff] %v1014
        %2121 = vst [vmem:[%s204 + $0x698] sm:$0xff] %v1016
        %2122 = vst [vmem:[%s204 + $0x6a0] sm:$0xff] %v1439
        %2123 = vst [vmem:[%s204 + $0x6a8] sm:$0xff] %v1441
        %2124 = vst [vmem:[%s204 + $0x6b0] sm:$0xff] %v1822
        %2125 = vst [vmem:[%s204 + $0x6b8] sm:$0xff] %v1020
        %2126 = vst [vmem:[%s204 + $0x6c0] sm:$0xff] %v1022
        %2127 = vst [vmem:[%s204 + $0x6c8] sm:$0xff] %v1445
        %2128 = vst [vmem:[%s204 + $0x6d0] sm:$0xff] %v1447
        %2129 = vst [vmem:[%s204 + $0x6d8] sm:$0xff] %v1827
        %2130 = vst [vmem:[%s204 + $0x6e0] sm:$0xff] %v1026
        %2131 = vst [vmem:[%s204 + $0x6e8] sm:$0xff] %v1028
        %2132 = vst [vmem:[%s204 + $0x6f0] sm:$0xff] %v1451
        %2133 = vst [vmem:[%s204 + $0x6f8] sm:$0xff] %v1453
        %2134 = vst [vmem:[%s204 + $0x700] sm:$0xff] %v1832
        %2135 = vst [vmem:[%s204 + $0x708] sm:$0xff] %v1032
        %2136 = vst [vmem:[%s204 + $0x710] sm:$0xff] %v1034
        %2137 = vst [vmem:[%s204 + $0x718] sm:$0xff] %v1457
        %2138 = vst [vmem:[%s204 + $0x720] sm:$0xff] %v1459
        %2139 = vst [vmem:[%s204 + $0x728] sm:$0xff] %v1837
        %2140 = vst [vmem:[%s204 + $0x730] sm:$0xff] %v1038
        %2141 = vst [vmem:[%s204 + $0x738] sm:$0xff] %v1040
        %2142 = vst [vmem:[%s204 + $0x740] sm:$0xff] %v1463
        %2143 = vst [vmem:[%s204 + $0x748] sm:$0xff] %v1465
        %2144 = vst [vmem:[%s204 + $0x750] sm:$0xff] %v1842
        %2145 = vst [vmem:[%s204 + $0x758] sm:$0xff] %v1044
        %2146 = vst [vmem:[%s204 + $0x760] sm:$0xff] %v1046
        %2147 = vst [vmem:[%s204 + $0x768] sm:$0xff] %v1469
        %2148 = vst [vmem:[%s204 + $0x770] sm:$0xff] %v1471
        %2149 = vst [vmem:[%s204 + $0x778] sm:$0xff] %v1847
        %2150 = vst [vmem:[%s204 + $0x780] sm:$0xff] %v1050
        %2151 = vst [vmem:[%s204 + $0x788] sm:$0xff] %v1052
        %2152 = vst [vmem:[%s204 + $0x790] sm:$0xff] %v1475
        %2153 = vst [vmem:[%s204 + $0x798] sm:$0xff] %v1477
        %2154 = vst [vmem:[%s204 + $0x7a0] sm:$0xff] %v1852
        %2155 = vst [vmem:[%s204 + $0x7a8] sm:$0xff] %v1056
        %2156 = vst [vmem:[%s204 + $0x7b0] sm:$0xff] %v1058
        %2157 = vst [vmem:[%s204 + $0x7b8] sm:$0xff] %v1481
        %2158 = vst [vmem:[%s204 + $0x7c0] sm:$0xff] %v1483
        %2159 = vst [vmem:[%s204 + $0x7c8] sm:$0xff] %v1857
        %2160 = vst [vmem:[%s204 + $0x7d0] sm:$0xff] %v1062
        %2161 = vst [vmem:[%s204 + $0x7d8] sm:$0xff] %v1064
        %2162 = vst [vmem:[%s204 + $0x7e0] sm:$0xff] %v1487
        %2163 = vst [vmem:[%s204 + $0x7e8] sm:$0xff] %v1489
        %2164 = vst [vmem:[%s204 + $0x7f0] sm:$0xff] %v1862
        %2165 = vst [vmem:[%s204 + $0x7f8] sm:$0xff] %v1068
        %2166 = vst [vmem:[%s204 + $0x800] sm:$0xff] %v1070
        %2167 = vst [vmem:[%s204 + $0x808] sm:$0xff] %v1493
        %2168 = vst [vmem:[%s204 + $0x810] sm:$0xff] %v1495
        %2169 = vst [vmem:[%s204 + $0x818] sm:$0xff] %v1867
        %2170 = vst [vmem:[%s204 + $0x820] sm:$0xff] %v1074
        %2171 = vst [vmem:[%s204 + $0x828] sm:$0xff] %v1076
        %2172 = vst [vmem:[%s204 + $0x830] sm:$0xff] %v1499
        %2173 = vst [vmem:[%s204 + $0x838] sm:$0xff] %v1501
        %2174 = vst [vmem:[%s204 + $0x840] sm:$0xff] %v1872
        %2175 = vst [vmem:[%s204 + $0x848] sm:$0xff] %v1080
        %2176 = vst [vmem:[%s204 + $0x850] sm:$0xff] %v1082
        %2177 = vst [vmem:[%s204 + $0x858] sm:$0xff] %v1505
        %2178 = vst [vmem:[%s204 + $0x860] sm:$0xff] %v1507
        %2179 = vst [vmem:[%s204 + $0x868] sm:$0xff] %v1877
        %2180 = vst [vmem:[%s204 + $0x870] sm:$0xff] %v1086
        %2181 = vst [vmem:[%s204 + $0x878] sm:$0xff] %v1088
        %2182 = vst [vmem:[%s204 + $0x880] sm:$0xff] %v1511
        %2183 = vst [vmem:[%s204 + $0x888] sm:$0xff] %v1513
        %2184 = vst [vmem:[%s204 + $0x890] sm:$0xff] %v1882
        %2185 = vst [vmem:[%s204 + $0x898] sm:$0xff] %v1092
        %2186 = vst [vmem:[%s204 + $0x8a0] sm:$0xff] %v1094
        %2187 = vst [vmem:[%s204 + $0x8a8] sm:$0xff] %v1517
        %2188 = vst [vmem:[%s204 + $0x8b0] sm:$0xff] %v1519
        %2189 = vst [vmem:[%s204 + $0x8b8] sm:$0xff] %v1887
        %2190 = vst [vmem:[%s204 + $0x8c0] sm:$0xff] %v1098
        %2191 = vst [vmem:[%s204 + $0x8c8] sm:$0xff] %v1100
        %2192 = vst [vmem:[%s204 + $0x8d0] sm:$0xff] %v1523
        %2193 = vst [vmem:[%s204 + $0x8d8] sm:$0xff] %v1525
        %2194 = vst [vmem:[%s204 + $0x8e0] sm:$0xff] %v1892
        %2195 = vst [vmem:[%s204 + $0x8e8] sm:$0xff] %v1104
        %2196 = vst [vmem:[%s204 + $0x8f0] sm:$0xff] %v1106
        %2197 = vst [vmem:[%s204 + $0x8f8] sm:$0xff] %v1529
        %2198 = vst [vmem:[%s204 + $0x900] sm:$0xff] %v1531
        %2199 = vst [vmem:[%s204 + $0x908] sm:$0xff] %v1897
        %2200 = vst [vmem:[%s204 + $0x910] sm:$0xff] %v1110
        %2201 = vst [vmem:[%s204 + $0x918] sm:$0xff] %v1112
        %2202 = vst [vmem:[%s204 + $0x920] sm:$0xff] %v1535
        %2203 = vst [vmem:[%s204 + $0x928] sm:$0xff] %v1537
        %2204 = vst [vmem:[%s204 + $0x930] sm:$0xff] %v1902
        %2205 = vst [vmem:[%s204 + $0x938] sm:$0xff] %v1116
        %2206 = vst [vmem:[%s204 + $0x940] sm:$0xff] %v1118
        %2207 = vst [vmem:[%s204 + $0x948] sm:$0xff] %v1541
        %2208 = vst [vmem:[%s204 + $0x950] sm:$0xff] %v1543
        %2209 = vst [vmem:[%s204 + $0x958] sm:$0xff] %v1907
        %s2210 = scalar_lea.vmem %s178, 16 [#allocation2]
        %v2211 = vld [vmem:[%s2210] sm:$0xff]
        %v2212 = vld [vmem:[%s2210 + $0x8] sm:$0xff]
        %v2214 = vsel %vm279, %v2211, 0
        %v2217 = vsel %vm279, %v2212, 0
        %2219 = vmatprep.subr.mxu0 0.0
        %2220 = vmatpush1.msra.mxu0 0.0
        %2221 = vmatprep.subr.mxu0 0.0
        %2222 = vmatpush1.msra.mxu0 0.0
        %2223 = vmatprep.subr.mxu0 0.0
        %2224 = vmatpush1.msra.mxu0 0.0
        %2225 = vmatprep.subr.mxu0 0.0
        %2226 = vmatpush1.msra.mxu0 0.0
        %2227 = vmatprep.subr.mxu0 0.0
        %2228 = vmatpush1.msra.mxu0 0.0
        %2229 = vmatprep.subr.mxu0 0.0
        %2230 = vmatpush1.msra.mxu0 0.0
        %2231 = vmatprep.subr.mxu0 0.0
        %2232 = vmatpush1.msra.mxu0 0.0
        %2233 = vmatprep.subr.mxu0 0.0
        %2234 = vmatpush1.msra.mxu0 0.0
        %2235 = vmatprep.subr.mxu0 0.0
        %2236 = vmatpush1.msra.mxu0 0.0
        %2237 = vmatprep.subr.mxu0 0.0
        %2238 = vmatpush1.msra.mxu0 0.0
        %2239 = vmatprep.subr.mxu0 0.0
        %2240 = vmatpush1.msra.mxu0 0.0
        %2241 = vmatprep.subr.mxu0 0.0
        %2242 = vmatpush1.msra.mxu0 0.0
        %2243 = vmatprep.subr.mxu0 0.0
        %2244 = vmatpush1.msra.mxu0 0.0
        %2245 = vmatprep.subr.mxu0 0.0
        %2246 = vmatpush1.msra.mxu0 0.0
        %2247 = vmatprep.subr.mxu0 %v273
        %2248 = vmatpush1.msra.mxu0 %v272
        %2249 = vmatprep.subr.mxu0 %v268
        %2250 = vmatpush1.msra.mxu0 %v267
        %2251 = vmatprep.subr.mxu0 0.0
        %2252 = vmatpush2.msra.mxu0 0.0
        %2253 = vmatprep.subr.mxu0 0.0
        %2254 = vmatpush2.msra.mxu0 0.0
        %2255 = vmatprep.subr.mxu0 0.0
        %2256 = vmatpush2.msra.mxu0 0.0
        %2257 = vmatprep.subr.mxu0 0.0
        %2258 = vmatpush2.msra.mxu0 0.0
        %2259 = vmatprep.subr.mxu0 0.0
        %2260 = vmatpush2.msra.mxu0 0.0
        %2261 = vmatprep.subr.mxu0 0.0
        %2262 = vmatpush2.msra.mxu0 0.0
        %2263 = vmatprep.subr.mxu0 0.0
        %2264 = vmatpush2.msra.mxu0 0.0
        %2265 = vmatprep.subr.mxu0 0.0
        %2266 = vmatpush2.msra.mxu0 0.0
        %2267 = vmatprep.subr.mxu0 0.0
        %2268 = vmatpush2.msra.mxu0 0.0
        %2269 = vmatprep.subr.mxu0 0.0
        %2270 = vmatpush2.msra.mxu0 0.0
        %2271 = vmatprep.subr.mxu0 0.0
        %2272 = vmatpush2.msra.mxu0 0.0
        %2273 = vmatprep.subr.mxu0 0.0
        %2274 = vmatpush2.msra.mxu0 0.0
        %2275 = vmatprep.subr.mxu0 0.0
        %2276 = vmatpush2.msra.mxu0 0.0
        %2277 = vmatprep.subr.mxu0 0.0
        %2278 = vmatpush2.msra.mxu0 0.0
        %2279 = vmatprep.subr.mxu0 0.0
        %2280 = vmatpush2.msra.mxu0 0.0
        %2281 = vmatprep.subr.mxu0 0.0
        %2282 = vmatpush2.msra.mxu0 0.0
        %2283 = vmatprep.mubr.f32.mxu0 0.0
        %2284 = vmatmul.mubr.f32.gmra.mxu0 %v2214
        %v2285 = vpop.f32.mrf.mxu0
        %v2286 = vadd.f32 0.0, %v2285
        %v2287 = vpop.f32.mrf.mxu0
        %v2288 = vadd.f32 0.0, %v2287
        %2289 = vmatprep.mubr.f32.mxu0 0.0
        %2290 = vmatmul.mubr.f32.gmra.mxu0 %v2217
        %v2291 = vpop.f32.mrf.mxu0
        %v2292 = vadd.f32 0.0, %v2291
        %v2293 = vpop.f32.mrf.mxu0
        %v2294 = vadd.f32 0.0, %v2293
        %2295 = vdwg.mxu0
        %2296 = vmatprep.subr.mxu0 0.0
        %2297 = vmatpush1.msra.mxu0 0.0
        %2298 = vmatprep.subr.mxu0 0.0
        %2299 = vmatpush1.msra.mxu0 0.0
        %2300 = vmatprep.subr.mxu0 0.0
        %2301 = vmatpush1.msra.mxu0 0.0
        %2302 = vmatprep.subr.mxu0 0.0
        %2303 = vmatpush1.msra.mxu0 0.0
        %2304 = vmatprep.subr.mxu0 0.0
        %2305 = vmatpush1.msra.mxu0 0.0
        %2306 = vmatprep.subr.mxu0 0.0
        %2307 = vmatpush1.msra.mxu0 0.0
        %2308 = vmatprep.subr.mxu0 0.0
        %2309 = vmatpush1.msra.mxu0 0.0
        %2310 = vmatprep.subr.mxu0 0.0
        %2311 = vmatpush1.msra.mxu0 0.0
        %2312 = vmatprep.subr.mxu0 0.0
        %2313 = vmatpush1.msra.mxu0 0.0
        %2314 = vmatprep.subr.mxu0 0.0
        %2315 = vmatpush1.msra.mxu0 0.0
        %2316 = vmatprep.subr.mxu0 0.0
        %2317 = vmatpush1.msra.mxu0 0.0
        %2318 = vmatprep.subr.mxu0 0.0
        %2319 = vmatpush1.msra.mxu0 0.0
        %2320 = vmatprep.subr.mxu0 0.0
        %2321 = vmatpush1.msra.mxu0 0.0
        %2322 = vmatprep.subr.mxu0 0.0
        %2323 = vmatpush1.msra.mxu0 0.0
        %2324 = vmatprep.subr.mxu0 %v275
        %2325 = vmatpush1.msra.mxu0 %v274
        %2326 = vmatprep.subr.mxu0 %v270
        %2327 = vmatpush1.msra.mxu0 %v269
        %2328 = vmatprep.subr.mxu0 0.0
        %2329 = vmatpush2.msra.mxu0 0.0
        %2330 = vmatprep.subr.mxu0 0.0
        %2331 = vmatpush2.msra.mxu0 0.0
        %2332 = vmatprep.subr.mxu0 0.0
        %2333 = vmatpush2.msra.mxu0 0.0
        %2334 = vmatprep.subr.mxu0 0.0
        %2335 = vmatpush2.msra.mxu0 0.0
        %2336 = vmatprep.subr.mxu0 0.0
        %2337 = vmatpush2.msra.mxu0 0.0
        %2338 = vmatprep.subr.mxu0 0.0
        %2339 = vmatpush2.msra.mxu0 0.0
        %2340 = vmatprep.subr.mxu0 0.0
        %2341 = vmatpush2.msra.mxu0 0.0
        %2342 = vmatprep.subr.mxu0 0.0
        %2343 = vmatpush2.msra.mxu0 0.0
        %2344 = vmatprep.subr.mxu0 0.0
        %2345 = vmatpush2.msra.mxu0 0.0
        %2346 = vmatprep.subr.mxu0 0.0
        %2347 = vmatpush2.msra.mxu0 0.0
        %2348 = vmatprep.subr.mxu0 0.0
        %2349 = vmatpush2.msra.mxu0 0.0
        %2350 = vmatprep.subr.mxu0 0.0
        %2351 = vmatpush2.msra.mxu0 0.0
        %2352 = vmatprep.subr.mxu0 0.0
        %2353 = vmatpush2.msra.mxu0 0.0
        %2354 = vmatprep.subr.mxu0 0.0
        %2355 = vmatpush2.msra.mxu0 0.0
        %2356 = vmatprep.subr.mxu0 0.0
        %2357 = vmatpush2.msra.mxu0 0.0
        %2358 = vmatprep.subr.mxu0 0.0
        %2359 = vmatpush2.msra.mxu0 0.0
        %2360 = vmatprep.mubr.f32.mxu0 0.0
        %2361 = vmatmul.mubr.f32.gmra.mxu0 %v2214
        %v2362 = vpop.f32.mrf.mxu0
        %v2363 = vadd.f32 0.0, %v2362
        %v2364 = vpop.f32.mrf.mxu0
        %v2365 = vadd.f32 0.0, %v2364
        %2366 = vmatprep.mubr.f32.mxu0 0.0
        %2367 = vmatmul.mubr.f32.gmra.mxu0 %v2217
        %v2368 = vpop.f32.mrf.mxu0
        %v2369 = vadd.f32 0.0, %v2368
        %v2370 = vpop.f32.mrf.mxu0
        %v2371 = vadd.f32 0.0, %v2370
        %2372 = vdwg.mxu0
        %2373 = vmatprep.subr.mxu0 0.0
        %2374 = vmatpush1.msra.mxu0 0.0
        %2375 = vmatprep.subr.mxu0 0.0
        %2376 = vmatpush1.msra.mxu0 0.0
        %2377 = vmatprep.subr.mxu0 0.0
        %2378 = vmatpush1.msra.mxu0 0.0
        %2379 = vmatprep.subr.mxu0 0.0
        %2380 = vmatpush1.msra.mxu0 0.0
        %2381 = vmatprep.subr.mxu0 0.0
        %2382 = vmatpush1.msra.mxu0 0.0
        %2383 = vmatprep.subr.mxu0 0.0
        %2384 = vmatpush1.msra.mxu0 0.0
        %2385 = vmatprep.subr.mxu0 0.0
        %2386 = vmatpush1.msra.mxu0 0.0
        %2387 = vmatprep.subr.mxu0 0.0
        %2388 = vmatpush1.msra.mxu0 0.0
        %2389 = vmatprep.subr.mxu0 0.0
        %2390 = vmatpush1.msra.mxu0 0.0
        %2391 = vmatprep.subr.mxu0 0.0
        %2392 = vmatpush1.msra.mxu0 0.0
        %2393 = vmatprep.subr.mxu0 0.0
        %2394 = vmatpush1.msra.mxu0 0.0
        %2395 = vmatprep.subr.mxu0 0.0
        %2396 = vmatpush1.msra.mxu0 0.0
        %2397 = vmatprep.subr.mxu0 0.0
        %2398 = vmatpush1.msra.mxu0 0.0
        %2399 = vmatprep.subr.mxu0 0.0
        %2400 = vmatpush1.msra.mxu0 0.0
        %2401 = vmatprep.subr.mxu0 0.0
        %2402 = vmatpush1.msra.mxu0 %v276
        %2403 = vmatprep.subr.mxu0 0.0
        %2404 = vmatpush1.msra.mxu0 %v271
        %2405 = vmatprep.subr.mxu0 0.0
        %2406 = vmatpush2.msra.mxu0 0.0
        %2407 = vmatprep.subr.mxu0 0.0
        %2408 = vmatpush2.msra.mxu0 0.0
        %2409 = vmatprep.subr.mxu0 0.0
        %2410 = vmatpush2.msra.mxu0 0.0
        %2411 = vmatprep.subr.mxu0 0.0
        %2412 = vmatpush2.msra.mxu0 0.0
        %2413 = vmatprep.subr.mxu0 0.0
        %2414 = vmatpush2.msra.mxu0 0.0
        %2415 = vmatprep.subr.mxu0 0.0
        %2416 = vmatpush2.msra.mxu0 0.0
        %2417 = vmatprep.subr.mxu0 0.0
        %2418 = vmatpush2.msra.mxu0 0.0
        %2419 = vmatprep.subr.mxu0 0.0
        %2420 = vmatpush2.msra.mxu0 0.0
        %2421 = vmatprep.subr.mxu0 0.0
        %2422 = vmatpush2.msra.mxu0 0.0
        %2423 = vmatprep.subr.mxu0 0.0
        %2424 = vmatpush2.msra.mxu0 0.0
        %2425 = vmatprep.subr.mxu0 0.0
        %2426 = vmatpush2.msra.mxu0 0.0
        %2427 = vmatprep.subr.mxu0 0.0
        %2428 = vmatpush2.msra.mxu0 0.0
        %2429 = vmatprep.subr.mxu0 0.0
        %2430 = vmatpush2.msra.mxu0 0.0
        %2431 = vmatprep.subr.mxu0 0.0
        %2432 = vmatpush2.msra.mxu0 0.0
        %2433 = vmatprep.subr.mxu0 0.0
        %2434 = vmatpush2.msra.mxu0 0.0
        %2435 = vmatprep.subr.mxu0 0.0
        %2436 = vmatpush2.msra.mxu0 0.0
        %2437 = vmatprep.mubr.f32.mxu0 0.0
        %2438 = vmatmul.mubr.f32.gmra.mxu0 %v2214
        %v2439 = vpop.f32.mrf.mxu0
        %v2440 = vadd.f32 0.0, %v2439
        %v2441 = vpop.f32.mrf.mxu0
        %2442 = vmatprep.mubr.f32.mxu0 0.0
        %2443 = vmatmul.mubr.f32.gmra.mxu0 %v2217
        %v2444 = vpop.f32.mrf.mxu0
        %v2445 = vadd.f32 0.0, %v2444
        %v2446 = vpop.f32.mrf.mxu0
        %2447 = vdwg.mxu0
        %2448 = vmatprep.subr.mxu0 0.0
        %2449 = vmatpush1.msra.mxu0 0.0
        %2450 = vmatprep.subr.mxu0 0.0
        %2451 = vmatpush1.msra.mxu0 0.0
        %2452 = vmatprep.subr.mxu0 0.0
        %2453 = vmatpush1.msra.mxu0 0.0
        %2454 = vmatprep.subr.mxu0 0.0
        %2455 = vmatpush1.msra.mxu0 0.0
        %2456 = vmatprep.subr.mxu0 0.0
        %2457 = vmatpush1.msra.mxu0 0.0
        %2458 = vmatprep.subr.mxu0 0.0
        %2459 = vmatpush1.msra.mxu0 0.0
        %2460 = vmatprep.subr.mxu0 0.0
        %2461 = vmatpush1.msra.mxu0 0.0
        %2462 = vmatprep.subr.mxu0 0.0
        %2463 = vmatpush1.msra.mxu0 0.0
        %2464 = vmatprep.subr.mxu0 0.0
        %2465 = vmatpush1.msra.mxu0 0.0
        %2466 = vmatprep.subr.mxu0 0.0
        %2467 = vmatpush1.msra.mxu0 0.0
        %2468 = vmatprep.subr.mxu0 0.0
        %2469 = vmatpush1.msra.mxu0 0.0
        %2470 = vmatprep.subr.mxu0 0.0
        %2471 = vmatpush1.msra.mxu0 0.0
        %2472 = vmatprep.subr.mxu0 0.0
        %2473 = vmatpush1.msra.mxu0 0.0
        %2474 = vmatprep.subr.mxu0 0.0
        %2475 = vmatpush1.msra.mxu0 0.0
        %2476 = vmatprep.subr.mxu0 %v2294
        %2477 = vmatpush1.msra.mxu0 %v2292
        %2478 = vmatprep.subr.mxu0 %v2288
        %2479 = vmatpush1.msra.mxu0 %v2286
        %2480 = vmatprep.subr.mxu0 0.0
        %2481 = vmatpush2.msra.mxu0 0.0
        %2482 = vmatprep.subr.mxu0 0.0
        %2483 = vmatpush2.msra.mxu0 0.0
        %2484 = vmatprep.subr.mxu0 0.0
        %2485 = vmatpush2.msra.mxu0 0.0
        %2486 = vmatprep.subr.mxu0 0.0
        %2487 = vmatpush2.msra.mxu0 0.0
        %2488 = vmatprep.subr.mxu0 0.0
        %2489 = vmatpush2.msra.mxu0 0.0
        %2490 = vmatprep.subr.mxu0 0.0
        %2491 = vmatpush2.msra.mxu0 0.0
        %2492 = vmatprep.subr.mxu0 0.0
        %2493 = vmatpush2.msra.mxu0 0.0
        %2494 = vmatprep.subr.mxu0 0.0
        %2495 = vmatpush2.msra.mxu0 0.0
        %2496 = vmatprep.subr.mxu0 0.0
        %2497 = vmatpush2.msra.mxu0 0.0
        %2498 = vmatprep.subr.mxu0 0.0
        %2499 = vmatpush2.msra.mxu0 0.0
        %2500 = vmatprep.subr.mxu0 0.0
        %2501 = vmatpush2.msra.mxu0 0.0
        %2502 = vmatprep.subr.mxu0 0.0
        %2503 = vmatpush2.msra.mxu0 0.0
        %2504 = vmatprep.subr.mxu0 0.0
        %2505 = vmatpush2.msra.mxu0 0.0
        %2506 = vmatprep.subr.mxu0 0.0
        %2507 = vmatpush2.msra.mxu0 0.0
        %2508 = vmatprep.subr.mxu0 0.0
        %2509 = vmatpush2.msra.mxu0 0.0
        %2510 = vmatprep.subr.mxu0 0.0
        %2511 = vmatpush2.msra.mxu0 0.0
        %2512 = vmatprep.mubr.f32.mxu0 0.0
        %2513 = vmatmul.mubr.f32.gmra.mxu0 %v516
        %v2514 = vpop.f32.mrf.mxu0
        %v2515 = vadd.f32 0.0, %v2514
        %v2516 = vpop.f32.mrf.mxu0
        %v2517 = vadd.f32 0.0, %v2516
        %2518 = vmatprep.mubr.f32.mxu0 0.0
        %2519 = vmatmul.mubr.f32.gmra.mxu0 %v519
        %v2520 = vpop.f32.mrf.mxu0
        %v2521 = vadd.f32 0.0, %v2520
        %v2522 = vpop.f32.mrf.mxu0
        %v2523 = vadd.f32 0.0, %v2522
        %2524 = vmatprep.mubr.f32.mxu0 0.0
        %2525 = vmatmul.mubr.f32.gmra.mxu0 %v522
        %v2526 = vpop.f32.mrf.mxu0
        %v2527 = vadd.f32 0.0, %v2526
        %v2528 = vpop.f32.mrf.mxu0
        %v2529 = vadd.f32 0.0, %v2528
        %2530 = vmatprep.mubr.f32.mxu0 0.0
        %2531 = vmatmul.mubr.f32.gmra.mxu0 %v525
        %v2532 = vpop.f32.mrf.mxu0
        %v2533 = vadd.f32 0.0, %v2532
        %v2534 = vpop.f32.mrf.mxu0
        %v2535 = vadd.f32 0.0, %v2534
        %2536 = vmatprep.mubr.f32.mxu0 0.0
        %2537 = vmatmul.mubr.f32.gmra.mxu0 %v528
        %v2538 = vpop.f32.mrf.mxu0
        %v2539 = vadd.f32 0.0, %v2538
        %v2540 = vpop.f32.mrf.mxu0
        %v2541 = vadd.f32 0.0, %v2540
        %2542 = vmatprep.mubr.f32.mxu0 0.0
        %2543 = vmatmul.mubr.f32.gmra.mxu0 %v531
        %v2544 = vpop.f32.mrf.mxu0
        %v2545 = vadd.f32 0.0, %v2544
        %v2546 = vpop.f32.mrf.mxu0
        %v2547 = vadd.f32 0.0, %v2546
        %2548 = vmatprep.mubr.f32.mxu0 0.0
        %2549 = vmatmul.mubr.f32.gmra.mxu0 %v534
        %v2550 = vpop.f32.mrf.mxu0
        %v2551 = vadd.f32 0.0, %v2550
        %v2552 = vpop.f32.mrf.mxu0
        %v2553 = vadd.f32 0.0, %v2552
        %2554 = vmatprep.mubr.f32.mxu0 0.0
        %2555 = vmatmul.mubr.f32.gmra.mxu0 %v537
        %v2556 = vpop.f32.mrf.mxu0
        %v2557 = vadd.f32 0.0, %v2556
        %v2558 = vpop.f32.mrf.mxu0
        %v2559 = vadd.f32 0.0, %v2558
        %2560 = vmatprep.mubr.f32.mxu0 0.0
        %2561 = vmatmul.mubr.f32.gmra.mxu0 %v540
        %v2562 = vpop.f32.mrf.mxu0
        %v2563 = vadd.f32 0.0, %v2562
        %v2564 = vpop.f32.mrf.mxu0
        %v2565 = vadd.f32 0.0, %v2564
        %2566 = vmatprep.mubr.f32.mxu0 0.0
        %2567 = vmatmul.mubr.f32.gmra.mxu0 %v543
        %v2568 = vpop.f32.mrf.mxu0
        %v2569 = vadd.f32 0.0, %v2568
        %v2570 = vpop.f32.mrf.mxu0
        %v2571 = vadd.f32 0.0, %v2570
        %2572 = vmatprep.mubr.f32.mxu0 0.0
        %2573 = vmatmul.mubr.f32.gmra.mxu0 %v546
        %v2574 = vpop.f32.mrf.mxu0
        %v2575 = vadd.f32 0.0, %v2574
        %v2576 = vpop.f32.mrf.mxu0
        %v2577 = vadd.f32 0.0, %v2576
        %2578 = vmatprep.mubr.f32.mxu0 0.0
        %2579 = vmatmul.mubr.f32.gmra.mxu0 %v549
        %v2580 = vpop.f32.mrf.mxu0
        %v2581 = vadd.f32 0.0, %v2580
        %v2582 = vpop.f32.mrf.mxu0
        %v2583 = vadd.f32 0.0, %v2582
        %2584 = vmatprep.mubr.f32.mxu0 0.0
        %2585 = vmatmul.mubr.f32.gmra.mxu0 %v552
        %v2586 = vpop.f32.mrf.mxu0
        %v2587 = vadd.f32 0.0, %v2586
        %v2588 = vpop.f32.mrf.mxu0
        %v2589 = vadd.f32 0.0, %v2588
        %2590 = vmatprep.mubr.f32.mxu0 0.0
        %2591 = vmatmul.mubr.f32.gmra.mxu0 %v555
        %v2592 = vpop.f32.mrf.mxu0
        %v2593 = vadd.f32 0.0, %v2592
        %v2594 = vpop.f32.mrf.mxu0
        %v2595 = vadd.f32 0.0, %v2594
        %2596 = vmatprep.mubr.f32.mxu0 0.0
        %2597 = vmatmul.mubr.f32.gmra.mxu0 %v558
        %v2598 = vpop.f32.mrf.mxu0
        %v2599 = vadd.f32 0.0, %v2598
        %v2600 = vpop.f32.mrf.mxu0
        %v2601 = vadd.f32 0.0, %v2600
        %2602 = vmatprep.mubr.f32.mxu0 0.0
        %2603 = vmatmul.mubr.f32.gmra.mxu0 %v561
        %v2604 = vpop.f32.mrf.mxu0
        %v2605 = vadd.f32 0.0, %v2604
        %v2606 = vpop.f32.mrf.mxu0
        %v2607 = vadd.f32 0.0, %v2606
        %2608 = vmatprep.mubr.f32.mxu0 0.0
        %2609 = vmatmul.mubr.f32.gmra.mxu0 %v564
        %v2610 = vpop.f32.mrf.mxu0
        %v2611 = vadd.f32 0.0, %v2610
        %v2612 = vpop.f32.mrf.mxu0
        %v2613 = vadd.f32 0.0, %v2612
        %2614 = vmatprep.mubr.f32.mxu0 0.0
        %2615 = vmatmul.mubr.f32.gmra.mxu0 %v567
        %v2616 = vpop.f32.mrf.mxu0
        %v2617 = vadd.f32 0.0, %v2616
        %v2618 = vpop.f32.mrf.mxu0
        %v2619 = vadd.f32 0.0, %v2618
        %2620 = vmatprep.mubr.f32.mxu0 0.0
        %2621 = vmatmul.mubr.f32.gmra.mxu0 %v570
        %v2622 = vpop.f32.mrf.mxu0
        %v2623 = vadd.f32 0.0, %v2622
        %v2624 = vpop.f32.mrf.mxu0
        %v2625 = vadd.f32 0.0, %v2624
        %2626 = vmatprep.mubr.f32.mxu0 0.0
        %2627 = vmatmul.mubr.f32.gmra.mxu0 %v573
        %v2628 = vpop.f32.mrf.mxu0
        %v2629 = vadd.f32 0.0, %v2628
        %v2630 = vpop.f32.mrf.mxu0
        %v2631 = vadd.f32 0.0, %v2630
        %2632 = vmatprep.mubr.f32.mxu0 0.0
        %2633 = vmatmul.mubr.f32.gmra.mxu0 %v576
        %v2634 = vpop.f32.mrf.mxu0
        %v2635 = vadd.f32 0.0, %v2634
        %v2636 = vpop.f32.mrf.mxu0
        %v2637 = vadd.f32 0.0, %v2636
        %2638 = vmatprep.mubr.f32.mxu0 0.0
        %2639 = vmatmul.mubr.f32.gmra.mxu0 %v579
        %v2640 = vpop.f32.mrf.mxu0
        %v2641 = vadd.f32 0.0, %v2640
        %v2642 = vpop.f32.mrf.mxu0
        %v2643 = vadd.f32 0.0, %v2642
        %2644 = vmatprep.mubr.f32.mxu0 0.0
        %2645 = vmatmul.mubr.f32.gmra.mxu0 %v582
        %v2646 = vpop.f32.mrf.mxu0
        %v2647 = vadd.f32 0.0, %v2646
        %v2648 = vpop.f32.mrf.mxu0
        %v2649 = vadd.f32 0.0, %v2648
        %2650 = vmatprep.mubr.f32.mxu0 0.0
        %2651 = vmatmul.mubr.f32.gmra.mxu0 %v585
        %v2652 = vpop.f32.mrf.mxu0
        %v2653 = vadd.f32 0.0, %v2652
        %v2654 = vpop.f32.mrf.mxu0
        %v2655 = vadd.f32 0.0, %v2654
        %2656 = vmatprep.mubr.f32.mxu0 0.0
        %2657 = vmatmul.mubr.f32.gmra.mxu0 %v588
        %v2658 = vpop.f32.mrf.mxu0
        %v2659 = vadd.f32 0.0, %v2658
        %v2660 = vpop.f32.mrf.mxu0
        %v2661 = vadd.f32 0.0, %v2660
        %2662 = vmatprep.mubr.f32.mxu0 0.0
        %2663 = vmatmul.mubr.f32.gmra.mxu0 %v591
        %v2664 = vpop.f32.mrf.mxu0
        %v2665 = vadd.f32 0.0, %v2664
        %v2666 = vpop.f32.mrf.mxu0
        %v2667 = vadd.f32 0.0, %v2666
        %2668 = vmatprep.mubr.f32.mxu0 0.0
        %2669 = vmatmul.mubr.f32.gmra.mxu0 %v594
        %v2670 = vpop.f32.mrf.mxu0
        %v2671 = vadd.f32 0.0, %v2670
        %v2672 = vpop.f32.mrf.mxu0
        %v2673 = vadd.f32 0.0, %v2672
        %2674 = vmatprep.mubr.f32.mxu0 0.0
        %2675 = vmatmul.mubr.f32.gmra.mxu0 %v597
        %v2676 = vpop.f32.mrf.mxu0
        %v2677 = vadd.f32 0.0, %v2676
        %v2678 = vpop.f32.mrf.mxu0
        %v2679 = vadd.f32 0.0, %v2678
        %2680 = vmatprep.mubr.f32.mxu0 0.0
        %2681 = vmatmul.mubr.f32.gmra.mxu0 %v600
        %v2682 = vpop.f32.mrf.mxu0
        %v2683 = vadd.f32 0.0, %v2682
        %v2684 = vpop.f32.mrf.mxu0
        %v2685 = vadd.f32 0.0, %v2684
        %2686 = vmatprep.mubr.f32.mxu0 0.0
        %2687 = vmatmul.mubr.f32.gmra.mxu0 %v603
        %v2688 = vpop.f32.mrf.mxu0
        %v2689 = vadd.f32 0.0, %v2688
        %v2690 = vpop.f32.mrf.mxu0
        %v2691 = vadd.f32 0.0, %v2690
        %2692 = vmatprep.mubr.f32.mxu0 0.0
        %2693 = vmatmul.mubr.f32.gmra.mxu0 %v606
        %v2694 = vpop.f32.mrf.mxu0
        %v2695 = vadd.f32 0.0, %v2694
        %v2696 = vpop.f32.mrf.mxu0
        %v2697 = vadd.f32 0.0, %v2696
        %2698 = vmatprep.mubr.f32.mxu0 0.0
        %2699 = vmatmul.mubr.f32.gmra.mxu0 %v609
        %v2700 = vpop.f32.mrf.mxu0
        %v2701 = vadd.f32 0.0, %v2700
        %v2702 = vpop.f32.mrf.mxu0
        %v2703 = vadd.f32 0.0, %v2702
        %2704 = vmatprep.mubr.f32.mxu0 0.0
        %2705 = vmatmul.mubr.f32.gmra.mxu0 %v612
        %v2706 = vpop.f32.mrf.mxu0
        %v2707 = vadd.f32 0.0, %v2706
        %v2708 = vpop.f32.mrf.mxu0
        %v2709 = vadd.f32 0.0, %v2708
        %2710 = vmatprep.mubr.f32.mxu0 0.0
        %2711 = vmatmul.mubr.f32.gmra.mxu0 %v615
        %v2712 = vpop.f32.mrf.mxu0
        %v2713 = vadd.f32 0.0, %v2712
        %v2714 = vpop.f32.mrf.mxu0
        %v2715 = vadd.f32 0.0, %v2714
        %2716 = vmatprep.mubr.f32.mxu0 0.0
        %2717 = vmatmul.mubr.f32.gmra.mxu0 %v618
        %v2718 = vpop.f32.mrf.mxu0
        %v2719 = vadd.f32 0.0, %v2718
        %v2720 = vpop.f32.mrf.mxu0
        %v2721 = vadd.f32 0.0, %v2720
        %2722 = vmatprep.mubr.f32.mxu0 0.0
        %2723 = vmatmul.mubr.f32.gmra.mxu0 %v621
        %v2724 = vpop.f32.mrf.mxu0
        %v2725 = vadd.f32 0.0, %v2724
        %v2726 = vpop.f32.mrf.mxu0
        %v2727 = vadd.f32 0.0, %v2726
        %2728 = vmatprep.mubr.f32.mxu0 0.0
        %2729 = vmatmul.mubr.f32.gmra.mxu0 %v624
        %v2730 = vpop.f32.mrf.mxu0
        %v2731 = vadd.f32 0.0, %v2730
        %v2732 = vpop.f32.mrf.mxu0
        %v2733 = vadd.f32 0.0, %v2732
        %2734 = vmatprep.mubr.f32.mxu0 0.0
        %2735 = vmatmul.mubr.f32.gmra.mxu0 %v627
        %v2736 = vpop.f32.mrf.mxu0
        %v2737 = vadd.f32 0.0, %v2736
        %v2738 = vpop.f32.mrf.mxu0
        %v2739 = vadd.f32 0.0, %v2738
        %2740 = vmatprep.mubr.f32.mxu0 0.0
        %2741 = vmatmul.mubr.f32.gmra.mxu0 %v630
        %v2742 = vpop.f32.mrf.mxu0
        %v2743 = vadd.f32 0.0, %v2742
        %v2744 = vpop.f32.mrf.mxu0
        %v2745 = vadd.f32 0.0, %v2744
        %2746 = vmatprep.mubr.f32.mxu0 0.0
        %2747 = vmatmul.mubr.f32.gmra.mxu0 %v633
        %v2748 = vpop.f32.mrf.mxu0
        %v2749 = vadd.f32 0.0, %v2748
        %v2750 = vpop.f32.mrf.mxu0
        %v2751 = vadd.f32 0.0, %v2750
        %2752 = vmatprep.mubr.f32.mxu0 0.0
        %2753 = vmatmul.mubr.f32.gmra.mxu0 %v636
        %v2754 = vpop.f32.mrf.mxu0
        %v2755 = vadd.f32 0.0, %v2754
        %v2756 = vpop.f32.mrf.mxu0
        %v2757 = vadd.f32 0.0, %v2756
        %2758 = vmatprep.mubr.f32.mxu0 0.0
        %2759 = vmatmul.mubr.f32.gmra.mxu0 %v639
        %v2760 = vpop.f32.mrf.mxu0
        %v2761 = vadd.f32 0.0, %v2760
        %v2762 = vpop.f32.mrf.mxu0
        %v2763 = vadd.f32 0.0, %v2762
        %2764 = vmatprep.mubr.f32.mxu0 0.0
        %2765 = vmatmul.mubr.f32.gmra.mxu0 %v642
        %v2766 = vpop.f32.mrf.mxu0
        %v2767 = vadd.f32 0.0, %v2766
        %v2768 = vpop.f32.mrf.mxu0
        %v2769 = vadd.f32 0.0, %v2768
        %2770 = vmatprep.mubr.f32.mxu0 0.0
        %2771 = vmatmul.mubr.f32.gmra.mxu0 %v645
        %v2772 = vpop.f32.mrf.mxu0
        %v2773 = vadd.f32 0.0, %v2772
        %v2774 = vpop.f32.mrf.mxu0
        %v2775 = vadd.f32 0.0, %v2774
        %2776 = vmatprep.mubr.f32.mxu0 0.0
        %2777 = vmatmul.mubr.f32.gmra.mxu0 %v648
        %v2778 = vpop.f32.mrf.mxu0
        %v2779 = vadd.f32 0.0, %v2778
        %v2780 = vpop.f32.mrf.mxu0
        %v2781 = vadd.f32 0.0, %v2780
        %2782 = vmatprep.mubr.f32.mxu0 0.0
        %2783 = vmatmul.mubr.f32.gmra.mxu0 %v651
        %v2784 = vpop.f32.mrf.mxu0
        %v2785 = vadd.f32 0.0, %v2784
        %v2786 = vpop.f32.mrf.mxu0
        %v2787 = vadd.f32 0.0, %v2786
        %2788 = vmatprep.mubr.f32.mxu0 0.0
        %2789 = vmatmul.mubr.f32.gmra.mxu0 %v654
        %v2790 = vpop.f32.mrf.mxu0
        %v2791 = vadd.f32 0.0, %v2790
        %v2792 = vpop.f32.mrf.mxu0
        %v2793 = vadd.f32 0.0, %v2792
        %2794 = vmatprep.mubr.f32.mxu0 0.0
        %2795 = vmatmul.mubr.f32.gmra.mxu0 %v657
        %v2796 = vpop.f32.mrf.mxu0
        %v2797 = vadd.f32 0.0, %v2796
        %v2798 = vpop.f32.mrf.mxu0
        %v2799 = vadd.f32 0.0, %v2798
        %2800 = vmatprep.mubr.f32.mxu0 0.0
        %2801 = vmatmul.mubr.f32.gmra.mxu0 %v660
        %v2802 = vpop.f32.mrf.mxu0
        %v2803 = vadd.f32 0.0, %v2802
        %v2804 = vpop.f32.mrf.mxu0
        %v2805 = vadd.f32 0.0, %v2804
        %2806 = vmatprep.mubr.f32.mxu0 0.0
        %2807 = vmatmul.mubr.f32.gmra.mxu0 %v663
        %v2808 = vpop.f32.mrf.mxu0
        %v2809 = vadd.f32 0.0, %v2808
        %v2810 = vpop.f32.mrf.mxu0
        %v2811 = vadd.f32 0.0, %v2810
        %2812 = vmatprep.mubr.f32.mxu0 0.0
        %2813 = vmatmul.mubr.f32.gmra.mxu0 %v666
        %v2814 = vpop.f32.mrf.mxu0
        %v2815 = vadd.f32 0.0, %v2814
        %v2816 = vpop.f32.mrf.mxu0
        %v2817 = vadd.f32 0.0, %v2816
        %2818 = vmatprep.mubr.f32.mxu0 0.0
        %2819 = vmatmul.mubr.f32.gmra.mxu0 %v669
        %v2820 = vpop.f32.mrf.mxu0
        %v2821 = vadd.f32 0.0, %v2820
        %v2822 = vpop.f32.mrf.mxu0
        %v2823 = vadd.f32 0.0, %v2822
        %2824 = vmatprep.mubr.f32.mxu0 0.0
        %2825 = vmatmul.mubr.f32.gmra.mxu0 %v672
        %v2826 = vpop.f32.mrf.mxu0
        %v2827 = vadd.f32 0.0, %v2826
        %v2828 = vpop.f32.mrf.mxu0
        %v2829 = vadd.f32 0.0, %v2828
        %2830 = vmatprep.mubr.f32.mxu0 0.0
        %2831 = vmatmul.mubr.f32.gmra.mxu0 %v675
        %v2832 = vpop.f32.mrf.mxu0
        %v2833 = vadd.f32 0.0, %v2832
        %v2834 = vpop.f32.mrf.mxu0
        %v2835 = vadd.f32 0.0, %v2834
        %2836 = vmatprep.mubr.f32.mxu0 0.0
        %2837 = vmatmul.mubr.f32.gmra.mxu0 %v678
        %v2838 = vpop.f32.mrf.mxu0
        %v2839 = vadd.f32 0.0, %v2838
        %v2840 = vpop.f32.mrf.mxu0
        %v2841 = vadd.f32 0.0, %v2840
        %2842 = vmatprep.mubr.f32.mxu0 0.0
        %2843 = vmatmul.mubr.f32.gmra.mxu0 %v681
        %v2844 = vpop.f32.mrf.mxu0
        %v2845 = vadd.f32 0.0, %v2844
        %v2846 = vpop.f32.mrf.mxu0
        %v2847 = vadd.f32 0.0, %v2846
        %2848 = vmatprep.mubr.f32.mxu0 0.0
        %2849 = vmatmul.mubr.f32.gmra.mxu0 %v684
        %v2850 = vpop.f32.mrf.mxu0
        %v2851 = vadd.f32 0.0, %v2850
        %v2852 = vpop.f32.mrf.mxu0
        %v2853 = vadd.f32 0.0, %v2852
        %2854 = vmatprep.mubr.f32.mxu0 0.0
        %2855 = vmatmul.mubr.f32.gmra.mxu0 %v687
        %v2856 = vpop.f32.mrf.mxu0
        %v2857 = vadd.f32 0.0, %v2856
        %v2858 = vpop.f32.mrf.mxu0
        %v2859 = vadd.f32 0.0, %v2858
        %2860 = vmatprep.mubr.f32.mxu0 0.0
        %2861 = vmatmul.mubr.f32.gmra.mxu0 %v690
        %v2862 = vpop.f32.mrf.mxu0
        %v2863 = vadd.f32 0.0, %v2862
        %v2864 = vpop.f32.mrf.mxu0
        %v2865 = vadd.f32 0.0, %v2864
        %2866 = vmatprep.mubr.f32.mxu0 0.0
        %2867 = vmatmul.mubr.f32.gmra.mxu0 %v693
        %v2868 = vpop.f32.mrf.mxu0
        %v2869 = vadd.f32 0.0, %v2868
        %v2870 = vpop.f32.mrf.mxu0
        %v2871 = vadd.f32 0.0, %v2870
        %2872 = vdwg.mxu0
        %2873 = vmatprep.subr.mxu0 0.0
        %2874 = vmatpush1.msra.mxu0 0.0
        %2875 = vmatprep.subr.mxu0 0.0
        %2876 = vmatpush1.msra.mxu0 0.0
        %2877 = vmatprep.subr.mxu0 0.0
        %2878 = vmatpush1.msra.mxu0 0.0
        %2879 = vmatprep.subr.mxu0 0.0
        %2880 = vmatpush1.msra.mxu0 0.0
        %2881 = vmatprep.subr.mxu0 0.0
        %2882 = vmatpush1.msra.mxu0 0.0
        %2883 = vmatprep.subr.mxu0 0.0
        %2884 = vmatpush1.msra.mxu0 0.0
        %2885 = vmatprep.subr.mxu0 0.0
        %2886 = vmatpush1.msra.mxu0 0.0
        %2887 = vmatprep.subr.mxu0 0.0
        %2888 = vmatpush1.msra.mxu0 0.0
        %2889 = vmatprep.subr.mxu0 0.0
        %2890 = vmatpush1.msra.mxu0 0.0
        %2891 = vmatprep.subr.mxu0 0.0
        %2892 = vmatpush1.msra.mxu0 0.0
        %2893 = vmatprep.subr.mxu0 0.0
        %2894 = vmatpush1.msra.mxu0 0.0
        %2895 = vmatprep.subr.mxu0 0.0
        %2896 = vmatpush1.msra.mxu0 0.0
        %2897 = vmatprep.subr.mxu0 0.0
        %2898 = vmatpush1.msra.mxu0 0.0
        %2899 = vmatprep.subr.mxu0 0.0
        %2900 = vmatpush1.msra.mxu0 0.0
        %2901 = vmatprep.subr.mxu0 %v2371
        %2902 = vmatpush1.msra.mxu0 %v2369
        %2903 = vmatprep.subr.mxu0 %v2365
        %2904 = vmatpush1.msra.mxu0 %v2363
        %2905 = vmatprep.subr.mxu0 0.0
        %2906 = vmatpush2.msra.mxu0 0.0
        %2907 = vmatprep.subr.mxu0 0.0
        %2908 = vmatpush2.msra.mxu0 0.0
        %2909 = vmatprep.subr.mxu0 0.0
        %2910 = vmatpush2.msra.mxu0 0.0
        %2911 = vmatprep.subr.mxu0 0.0
        %2912 = vmatpush2.msra.mxu0 0.0
        %2913 = vmatprep.subr.mxu0 0.0
        %2914 = vmatpush2.msra.mxu0 0.0
        %2915 = vmatprep.subr.mxu0 0.0
        %2916 = vmatpush2.msra.mxu0 0.0
        %2917 = vmatprep.subr.mxu0 0.0
        %2918 = vmatpush2.msra.mxu0 0.0
        %2919 = vmatprep.subr.mxu0 0.0
        %2920 = vmatpush2.msra.mxu0 0.0
        %2921 = vmatprep.subr.mxu0 0.0
        %2922 = vmatpush2.msra.mxu0 0.0
        %2923 = vmatprep.subr.mxu0 0.0
        %2924 = vmatpush2.msra.mxu0 0.0
        %2925 = vmatprep.subr.mxu0 0.0
        %2926 = vmatpush2.msra.mxu0 0.0
        %2927 = vmatprep.subr.mxu0 0.0
        %2928 = vmatpush2.msra.mxu0 0.0
        %2929 = vmatprep.subr.mxu0 0.0
        %2930 = vmatpush2.msra.mxu0 0.0
        %2931 = vmatprep.subr.mxu0 0.0
        %2932 = vmatpush2.msra.mxu0 0.0
        %2933 = vmatprep.subr.mxu0 0.0
        %2934 = vmatpush2.msra.mxu0 0.0
        %2935 = vmatprep.subr.mxu0 0.0
        %2936 = vmatpush2.msra.mxu0 0.0
        %2937 = vmatprep.mubr.f32.mxu0 0.0
        %2938 = vmatmul.mubr.f32.gmra.mxu0 %v516
        %v2939 = vpop.f32.mrf.mxu0
        %v2940 = vadd.f32 0.0, %v2939
        %v2941 = vpop.f32.mrf.mxu0
        %v2942 = vadd.f32 0.0, %v2941
        %2943 = vmatprep.mubr.f32.mxu0 0.0
        %2944 = vmatmul.mubr.f32.gmra.mxu0 %v519
        %v2945 = vpop.f32.mrf.mxu0
        %v2946 = vadd.f32 0.0, %v2945
        %v2947 = vpop.f32.mrf.mxu0
        %v2948 = vadd.f32 0.0, %v2947
        %2949 = vmatprep.mubr.f32.mxu0 0.0
        %2950 = vmatmul.mubr.f32.gmra.mxu0 %v522
        %v2951 = vpop.f32.mrf.mxu0
        %v2952 = vadd.f32 0.0, %v2951
        %v2953 = vpop.f32.mrf.mxu0
        %v2954 = vadd.f32 0.0, %v2953
        %2955 = vmatprep.mubr.f32.mxu0 0.0
        %2956 = vmatmul.mubr.f32.gmra.mxu0 %v525
        %v2957 = vpop.f32.mrf.mxu0
        %v2958 = vadd.f32 0.0, %v2957
        %v2959 = vpop.f32.mrf.mxu0
        %v2960 = vadd.f32 0.0, %v2959
        %2961 = vmatprep.mubr.f32.mxu0 0.0
        %2962 = vmatmul.mubr.f32.gmra.mxu0 %v528
        %v2963 = vpop.f32.mrf.mxu0
        %v2964 = vadd.f32 0.0, %v2963
        %v2965 = vpop.f32.mrf.mxu0
        %v2966 = vadd.f32 0.0, %v2965
        %2967 = vmatprep.mubr.f32.mxu0 0.0
        %2968 = vmatmul.mubr.f32.gmra.mxu0 %v531
        %v2969 = vpop.f32.mrf.mxu0
        %v2970 = vadd.f32 0.0, %v2969
        %v2971 = vpop.f32.mrf.mxu0
        %v2972 = vadd.f32 0.0, %v2971
        %2973 = vmatprep.mubr.f32.mxu0 0.0
        %2974 = vmatmul.mubr.f32.gmra.mxu0 %v534
        %v2975 = vpop.f32.mrf.mxu0
        %v2976 = vadd.f32 0.0, %v2975
        %v2977 = vpop.f32.mrf.mxu0
        %v2978 = vadd.f32 0.0, %v2977
        %2979 = vmatprep.mubr.f32.mxu0 0.0
        %2980 = vmatmul.mubr.f32.gmra.mxu0 %v537
        %v2981 = vpop.f32.mrf.mxu0
        %v2982 = vadd.f32 0.0, %v2981
        %v2983 = vpop.f32.mrf.mxu0
        %v2984 = vadd.f32 0.0, %v2983
        %2985 = vmatprep.mubr.f32.mxu0 0.0
        %2986 = vmatmul.mubr.f32.gmra.mxu0 %v540
        %v2987 = vpop.f32.mrf.mxu0
        %v2988 = vadd.f32 0.0, %v2987
        %v2989 = vpop.f32.mrf.mxu0
        %v2990 = vadd.f32 0.0, %v2989
        %2991 = vmatprep.mubr.f32.mxu0 0.0
        %2992 = vmatmul.mubr.f32.gmra.mxu0 %v543
        %v2993 = vpop.f32.mrf.mxu0
        %v2994 = vadd.f32 0.0, %v2993
        %v2995 = vpop.f32.mrf.mxu0
        %v2996 = vadd.f32 0.0, %v2995
        %2997 = vmatprep.mubr.f32.mxu0 0.0
        %2998 = vmatmul.mubr.f32.gmra.mxu0 %v546
        %v2999 = vpop.f32.mrf.mxu0
        %v3000 = vadd.f32 0.0, %v2999
        %v3001 = vpop.f32.mrf.mxu0
        %v3002 = vadd.f32 0.0, %v3001
        %3003 = vmatprep.mubr.f32.mxu0 0.0
        %3004 = vmatmul.mubr.f32.gmra.mxu0 %v549
        %v3005 = vpop.f32.mrf.mxu0
        %v3006 = vadd.f32 0.0, %v3005
        %v3007 = vpop.f32.mrf.mxu0
        %v3008 = vadd.f32 0.0, %v3007
        %3009 = vmatprep.mubr.f32.mxu0 0.0
        %3010 = vmatmul.mubr.f32.gmra.mxu0 %v552
        %v3011 = vpop.f32.mrf.mxu0
        %v3012 = vadd.f32 0.0, %v3011
        %v3013 = vpop.f32.mrf.mxu0
        %v3014 = vadd.f32 0.0, %v3013
        %3015 = vmatprep.mubr.f32.mxu0 0.0
        %3016 = vmatmul.mubr.f32.gmra.mxu0 %v555
        %v3017 = vpop.f32.mrf.mxu0
        %v3018 = vadd.f32 0.0, %v3017
        %v3019 = vpop.f32.mrf.mxu0
        %v3020 = vadd.f32 0.0, %v3019
        %3021 = vmatprep.mubr.f32.mxu0 0.0
        %3022 = vmatmul.mubr.f32.gmra.mxu0 %v558
        %v3023 = vpop.f32.mrf.mxu0
        %v3024 = vadd.f32 0.0, %v3023
        %v3025 = vpop.f32.mrf.mxu0
        %v3026 = vadd.f32 0.0, %v3025
        %3027 = vmatprep.mubr.f32.mxu0 0.0
        %3028 = vmatmul.mubr.f32.gmra.mxu0 %v561
        %v3029 = vpop.f32.mrf.mxu0
        %v3030 = vadd.f32 0.0, %v3029
        %v3031 = vpop.f32.mrf.mxu0
        %v3032 = vadd.f32 0.0, %v3031
        %3033 = vmatprep.mubr.f32.mxu0 0.0
        %3034 = vmatmul.mubr.f32.gmra.mxu0 %v564
        %v3035 = vpop.f32.mrf.mxu0
        %v3036 = vadd.f32 0.0, %v3035
        %v3037 = vpop.f32.mrf.mxu0
        %v3038 = vadd.f32 0.0, %v3037
        %3039 = vmatprep.mubr.f32.mxu0 0.0
        %3040 = vmatmul.mubr.f32.gmra.mxu0 %v567
        %v3041 = vpop.f32.mrf.mxu0
        %v3042 = vadd.f32 0.0, %v3041
        %v3043 = vpop.f32.mrf.mxu0
        %v3044 = vadd.f32 0.0, %v3043
        %3045 = vmatprep.mubr.f32.mxu0 0.0
        %3046 = vmatmul.mubr.f32.gmra.mxu0 %v570
        %v3047 = vpop.f32.mrf.mxu0
        %v3048 = vadd.f32 0.0, %v3047
        %v3049 = vpop.f32.mrf.mxu0
        %v3050 = vadd.f32 0.0, %v3049
        %3051 = vmatprep.mubr.f32.mxu0 0.0
        %3052 = vmatmul.mubr.f32.gmra.mxu0 %v573
        %v3053 = vpop.f32.mrf.mxu0
        %v3054 = vadd.f32 0.0, %v3053
        %v3055 = vpop.f32.mrf.mxu0
        %v3056 = vadd.f32 0.0, %v3055
        %3057 = vmatprep.mubr.f32.mxu0 0.0
        %3058 = vmatmul.mubr.f32.gmra.mxu0 %v576
        %v3059 = vpop.f32.mrf.mxu0
        %v3060 = vadd.f32 0.0, %v3059
        %v3061 = vpop.f32.mrf.mxu0
        %v3062 = vadd.f32 0.0, %v3061
        %3063 = vmatprep.mubr.f32.mxu0 0.0
        %3064 = vmatmul.mubr.f32.gmra.mxu0 %v579
        %v3065 = vpop.f32.mrf.mxu0
        %v3066 = vadd.f32 0.0, %v3065
        %v3067 = vpop.f32.mrf.mxu0
        %v3068 = vadd.f32 0.0, %v3067
        %3069 = vmatprep.mubr.f32.mxu0 0.0
        %3070 = vmatmul.mubr.f32.gmra.mxu0 %v582
        %v3071 = vpop.f32.mrf.mxu0
        %v3072 = vadd.f32 0.0, %v3071
        %v3073 = vpop.f32.mrf.mxu0
        %v3074 = vadd.f32 0.0, %v3073
        %3075 = vmatprep.mubr.f32.mxu0 0.0
        %3076 = vmatmul.mubr.f32.gmra.mxu0 %v585
        %v3077 = vpop.f32.mrf.mxu0
        %v3078 = vadd.f32 0.0, %v3077
        %v3079 = vpop.f32.mrf.mxu0
        %v3080 = vadd.f32 0.0, %v3079
        %3081 = vmatprep.mubr.f32.mxu0 0.0
        %3082 = vmatmul.mubr.f32.gmra.mxu0 %v588
        %v3083 = vpop.f32.mrf.mxu0
        %v3084 = vadd.f32 0.0, %v3083
        %v3085 = vpop.f32.mrf.mxu0
        %v3086 = vadd.f32 0.0, %v3085
        %3087 = vmatprep.mubr.f32.mxu0 0.0
        %3088 = vmatmul.mubr.f32.gmra.mxu0 %v591
        %v3089 = vpop.f32.mrf.mxu0
        %v3090 = vadd.f32 0.0, %v3089
        %v3091 = vpop.f32.mrf.mxu0
        %v3092 = vadd.f32 0.0, %v3091
        %3093 = vmatprep.mubr.f32.mxu0 0.0
        %3094 = vmatmul.mubr.f32.gmra.mxu0 %v594
        %v3095 = vpop.f32.mrf.mxu0
        %v3096 = vadd.f32 0.0, %v3095
        %v3097 = vpop.f32.mrf.mxu0
        %v3098 = vadd.f32 0.0, %v3097
        %3099 = vmatprep.mubr.f32.mxu0 0.0
        %3100 = vmatmul.mubr.f32.gmra.mxu0 %v597
        %v3101 = vpop.f32.mrf.mxu0
        %v3102 = vadd.f32 0.0, %v3101
        %v3103 = vpop.f32.mrf.mxu0
        %v3104 = vadd.f32 0.0, %v3103
        %3105 = vmatprep.mubr.f32.mxu0 0.0
        %3106 = vmatmul.mubr.f32.gmra.mxu0 %v600
        %v3107 = vpop.f32.mrf.mxu0
        %v3108 = vadd.f32 0.0, %v3107
        %v3109 = vpop.f32.mrf.mxu0
        %v3110 = vadd.f32 0.0, %v3109
        %3111 = vmatprep.mubr.f32.mxu0 0.0
        %3112 = vmatmul.mubr.f32.gmra.mxu0 %v603
        %v3113 = vpop.f32.mrf.mxu0
        %v3114 = vadd.f32 0.0, %v3113
        %v3115 = vpop.f32.mrf.mxu0
        %v3116 = vadd.f32 0.0, %v3115
        %3117 = vmatprep.mubr.f32.mxu0 0.0
        %3118 = vmatmul.mubr.f32.gmra.mxu0 %v606
        %v3119 = vpop.f32.mrf.mxu0
        %v3120 = vadd.f32 0.0, %v3119
        %v3121 = vpop.f32.mrf.mxu0
        %v3122 = vadd.f32 0.0, %v3121
        %3123 = vmatprep.mubr.f32.mxu0 0.0
        %3124 = vmatmul.mubr.f32.gmra.mxu0 %v609
        %v3125 = vpop.f32.mrf.mxu0
        %v3126 = vadd.f32 0.0, %v3125
        %v3127 = vpop.f32.mrf.mxu0
        %v3128 = vadd.f32 0.0, %v3127
        %3129 = vmatprep.mubr.f32.mxu0 0.0
        %3130 = vmatmul.mubr.f32.gmra.mxu0 %v612
        %v3131 = vpop.f32.mrf.mxu0
        %v3132 = vadd.f32 0.0, %v3131
        %v3133 = vpop.f32.mrf.mxu0
        %v3134 = vadd.f32 0.0, %v3133
        %3135 = vmatprep.mubr.f32.mxu0 0.0
        %3136 = vmatmul.mubr.f32.gmra.mxu0 %v615
        %v3137 = vpop.f32.mrf.mxu0
        %v3138 = vadd.f32 0.0, %v3137
        %v3139 = vpop.f32.mrf.mxu0
        %v3140 = vadd.f32 0.0, %v3139
        %3141 = vmatprep.mubr.f32.mxu0 0.0
        %3142 = vmatmul.mubr.f32.gmra.mxu0 %v618
        %v3143 = vpop.f32.mrf.mxu0
        %v3144 = vadd.f32 0.0, %v3143
        %v3145 = vpop.f32.mrf.mxu0
        %v3146 = vadd.f32 0.0, %v3145
        %3147 = vmatprep.mubr.f32.mxu0 0.0
        %3148 = vmatmul.mubr.f32.gmra.mxu0 %v621
        %v3149 = vpop.f32.mrf.mxu0
        %v3150 = vadd.f32 0.0, %v3149
        %v3151 = vpop.f32.mrf.mxu0
        %v3152 = vadd.f32 0.0, %v3151
        %3153 = vmatprep.mubr.f32.mxu0 0.0
        %3154 = vmatmul.mubr.f32.gmra.mxu0 %v624
        %v3155 = vpop.f32.mrf.mxu0
        %v3156 = vadd.f32 0.0, %v3155
        %v3157 = vpop.f32.mrf.mxu0
        %v3158 = vadd.f32 0.0, %v3157
        %3159 = vmatprep.mubr.f32.mxu0 0.0
        %3160 = vmatmul.mubr.f32.gmra.mxu0 %v627
        %v3161 = vpop.f32.mrf.mxu0
        %v3162 = vadd.f32 0.0, %v3161
        %v3163 = vpop.f32.mrf.mxu0
        %v3164 = vadd.f32 0.0, %v3163
        %3165 = vmatprep.mubr.f32.mxu0 0.0
        %3166 = vmatmul.mubr.f32.gmra.mxu0 %v630
        %v3167 = vpop.f32.mrf.mxu0
        %v3168 = vadd.f32 0.0, %v3167
        %v3169 = vpop.f32.mrf.mxu0
        %v3170 = vadd.f32 0.0, %v3169
        %3171 = vmatprep.mubr.f32.mxu0 0.0
        %3172 = vmatmul.mubr.f32.gmra.mxu0 %v633
        %v3173 = vpop.f32.mrf.mxu0
        %v3174 = vadd.f32 0.0, %v3173
        %v3175 = vpop.f32.mrf.mxu0
        %v3176 = vadd.f32 0.0, %v3175
        %3177 = vmatprep.mubr.f32.mxu0 0.0
        %3178 = vmatmul.mubr.f32.gmra.mxu0 %v636
        %v3179 = vpop.f32.mrf.mxu0
        %v3180 = vadd.f32 0.0, %v3179
        %v3181 = vpop.f32.mrf.mxu0
        %v3182 = vadd.f32 0.0, %v3181
        %3183 = vmatprep.mubr.f32.mxu0 0.0
        %3184 = vmatmul.mubr.f32.gmra.mxu0 %v639
        %v3185 = vpop.f32.mrf.mxu0
        %v3186 = vadd.f32 0.0, %v3185
        %v3187 = vpop.f32.mrf.mxu0
        %v3188 = vadd.f32 0.0, %v3187
        %3189 = vmatprep.mubr.f32.mxu0 0.0
        %3190 = vmatmul.mubr.f32.gmra.mxu0 %v642
        %v3191 = vpop.f32.mrf.mxu0
        %v3192 = vadd.f32 0.0, %v3191
        %v3193 = vpop.f32.mrf.mxu0
        %v3194 = vadd.f32 0.0, %v3193
        %3195 = vmatprep.mubr.f32.mxu0 0.0
        %3196 = vmatmul.mubr.f32.gmra.mxu0 %v645
        %v3197 = vpop.f32.mrf.mxu0
        %v3198 = vadd.f32 0.0, %v3197
        %v3199 = vpop.f32.mrf.mxu0
        %v3200 = vadd.f32 0.0, %v3199
        %3201 = vmatprep.mubr.f32.mxu0 0.0
        %3202 = vmatmul.mubr.f32.gmra.mxu0 %v648
        %v3203 = vpop.f32.mrf.mxu0
        %v3204 = vadd.f32 0.0, %v3203
        %v3205 = vpop.f32.mrf.mxu0
        %v3206 = vadd.f32 0.0, %v3205
        %3207 = vmatprep.mubr.f32.mxu0 0.0
        %3208 = vmatmul.mubr.f32.gmra.mxu0 %v651
        %v3209 = vpop.f32.mrf.mxu0
        %v3210 = vadd.f32 0.0, %v3209
        %v3211 = vpop.f32.mrf.mxu0
        %v3212 = vadd.f32 0.0, %v3211
        %3213 = vmatprep.mubr.f32.mxu0 0.0
        %3214 = vmatmul.mubr.f32.gmra.mxu0 %v654
        %v3215 = vpop.f32.mrf.mxu0
        %v3216 = vadd.f32 0.0, %v3215
        %v3217 = vpop.f32.mrf.mxu0
        %v3218 = vadd.f32 0.0, %v3217
        %3219 = vmatprep.mubr.f32.mxu0 0.0
        %3220 = vmatmul.mubr.f32.gmra.mxu0 %v657
        %v3221 = vpop.f32.mrf.mxu0
        %v3222 = vadd.f32 0.0, %v3221
        %v3223 = vpop.f32.mrf.mxu0
        %v3224 = vadd.f32 0.0, %v3223
        %3225 = vmatprep.mubr.f32.mxu0 0.0
        %3226 = vmatmul.mubr.f32.gmra.mxu0 %v660
        %v3227 = vpop.f32.mrf.mxu0
        %v3228 = vadd.f32 0.0, %v3227
        %v3229 = vpop.f32.mrf.mxu0
        %v3230 = vadd.f32 0.0, %v3229
        %3231 = vmatprep.mubr.f32.mxu0 0.0
        %3232 = vmatmul.mubr.f32.gmra.mxu0 %v663
        %v3233 = vpop.f32.mrf.mxu0
        %v3234 = vadd.f32 0.0, %v3233
        %v3235 = vpop.f32.mrf.mxu0
        %v3236 = vadd.f32 0.0, %v3235
        %3237 = vmatprep.mubr.f32.mxu0 0.0
        %3238 = vmatmul.mubr.f32.gmra.mxu0 %v666
        %v3239 = vpop.f32.mrf.mxu0
        %v3240 = vadd.f32 0.0, %v3239
        %v3241 = vpop.f32.mrf.mxu0
        %v3242 = vadd.f32 0.0, %v3241
        %3243 = vmatprep.mubr.f32.mxu0 0.0
        %3244 = vmatmul.mubr.f32.gmra.mxu0 %v669
        %v3245 = vpop.f32.mrf.mxu0
        %v3246 = vadd.f32 0.0, %v3245
        %v3247 = vpop.f32.mrf.mxu0
        %v3248 = vadd.f32 0.0, %v3247
        %3249 = vmatprep.mubr.f32.mxu0 0.0
        %3250 = vmatmul.mubr.f32.gmra.mxu0 %v672
        %v3251 = vpop.f32.mrf.mxu0
        %v3252 = vadd.f32 0.0, %v3251
        %v3253 = vpop.f32.mrf.mxu0
        %v3254 = vadd.f32 0.0, %v3253
        %3255 = vmatprep.mubr.f32.mxu0 0.0
        %3256 = vmatmul.mubr.f32.gmra.mxu0 %v675
        %v3257 = vpop.f32.mrf.mxu0
        %v3258 = vadd.f32 0.0, %v3257
        %v3259 = vpop.f32.mrf.mxu0
        %v3260 = vadd.f32 0.0, %v3259
        %3261 = vmatprep.mubr.f32.mxu0 0.0
        %3262 = vmatmul.mubr.f32.gmra.mxu0 %v678
        %v3263 = vpop.f32.mrf.mxu0
        %v3264 = vadd.f32 0.0, %v3263
        %v3265 = vpop.f32.mrf.mxu0
        %v3266 = vadd.f32 0.0, %v3265
        %3267 = vmatprep.mubr.f32.mxu0 0.0
        %3268 = vmatmul.mubr.f32.gmra.mxu0 %v681
        %v3269 = vpop.f32.mrf.mxu0
        %v3270 = vadd.f32 0.0, %v3269
        %v3271 = vpop.f32.mrf.mxu0
        %v3272 = vadd.f32 0.0, %v3271
        %3273 = vmatprep.mubr.f32.mxu0 0.0
        %3274 = vmatmul.mubr.f32.gmra.mxu0 %v684
        %v3275 = vpop.f32.mrf.mxu0
        %v3276 = vadd.f32 0.0, %v3275
        %v3277 = vpop.f32.mrf.mxu0
        %v3278 = vadd.f32 0.0, %v3277
        %3279 = vmatprep.mubr.f32.mxu0 0.0
        %3280 = vmatmul.mubr.f32.gmra.mxu0 %v687
        %v3281 = vpop.f32.mrf.mxu0
        %v3282 = vadd.f32 0.0, %v3281
        %v3283 = vpop.f32.mrf.mxu0
        %v3284 = vadd.f32 0.0, %v3283
        %3285 = vmatprep.mubr.f32.mxu0 0.0
        %3286 = vmatmul.mubr.f32.gmra.mxu0 %v690
        %v3287 = vpop.f32.mrf.mxu0
        %v3288 = vadd.f32 0.0, %v3287
        %v3289 = vpop.f32.mrf.mxu0
        %v3290 = vadd.f32 0.0, %v3289
        %3291 = vmatprep.mubr.f32.mxu0 0.0
        %3292 = vmatmul.mubr.f32.gmra.mxu0 %v693
        %v3293 = vpop.f32.mrf.mxu0
        %v3294 = vadd.f32 0.0, %v3293
        %v3295 = vpop.f32.mrf.mxu0
        %v3296 = vadd.f32 0.0, %v3295
        %3297 = vdwg.mxu0
        %3298 = vmatprep.subr.mxu0 0.0
        %3299 = vmatpush1.msra.mxu0 0.0
        %3300 = vmatprep.subr.mxu0 0.0
        %3301 = vmatpush1.msra.mxu0 0.0
        %3302 = vmatprep.subr.mxu0 0.0
        %3303 = vmatpush1.msra.mxu0 0.0
        %3304 = vmatprep.subr.mxu0 0.0
        %3305 = vmatpush1.msra.mxu0 0.0
        %3306 = vmatprep.subr.mxu0 0.0
        %3307 = vmatpush1.msra.mxu0 0.0
        %3308 = vmatprep.subr.mxu0 0.0
        %3309 = vmatpush1.msra.mxu0 0.0
        %3310 = vmatprep.subr.mxu0 0.0
        %3311 = vmatpush1.msra.mxu0 0.0
        %3312 = vmatprep.subr.mxu0 0.0
        %3313 = vmatpush1.msra.mxu0 0.0
        %3314 = vmatprep.subr.mxu0 0.0
        %3315 = vmatpush1.msra.mxu0 0.0
        %3316 = vmatprep.subr.mxu0 0.0
        %3317 = vmatpush1.msra.mxu0 0.0
        %3318 = vmatprep.subr.mxu0 0.0
        %3319 = vmatpush1.msra.mxu0 0.0
        %3320 = vmatprep.subr.mxu0 0.0
        %3321 = vmatpush1.msra.mxu0 0.0
        %3322 = vmatprep.subr.mxu0 0.0
        %3323 = vmatpush1.msra.mxu0 0.0
        %3324 = vmatprep.subr.mxu0 0.0
        %3325 = vmatpush1.msra.mxu0 0.0
        %3326 = vmatprep.subr.mxu0 0.0
        %3327 = vmatpush1.msra.mxu0 %v2445
        %3328 = vmatprep.subr.mxu0 0.0
        %3329 = vmatpush1.msra.mxu0 %v2440
        %3330 = vmatprep.subr.mxu0 0.0
        %3331 = vmatpush2.msra.mxu0 0.0
        %3332 = vmatprep.subr.mxu0 0.0
        %3333 = vmatpush2.msra.mxu0 0.0
        %3334 = vmatprep.subr.mxu0 0.0
        %3335 = vmatpush2.msra.mxu0 0.0
        %3336 = vmatprep.subr.mxu0 0.0
        %3337 = vmatpush2.msra.mxu0 0.0
        %3338 = vmatprep.subr.mxu0 0.0
        %3339 = vmatpush2.msra.mxu0 0.0
        %3340 = vmatprep.subr.mxu0 0.0
        %3341 = vmatpush2.msra.mxu0 0.0
        %3342 = vmatprep.subr.mxu0 0.0
        %3343 = vmatpush2.msra.mxu0 0.0
        %3344 = vmatprep.subr.mxu0 0.0
        %3345 = vmatpush2.msra.mxu0 0.0
        %3346 = vmatprep.subr.mxu0 0.0
        %3347 = vmatpush2.msra.mxu0 0.0
        %3348 = vmatprep.subr.mxu0 0.0
        %3349 = vmatpush2.msra.mxu0 0.0
        %3350 = vmatprep.subr.mxu0 0.0
        %3351 = vmatpush2.msra.mxu0 0.0
        %3352 = vmatprep.subr.mxu0 0.0
        %3353 = vmatpush2.msra.mxu0 0.0
        %3354 = vmatprep.subr.mxu0 0.0
        %3355 = vmatpush2.msra.mxu0 0.0
        %3356 = vmatprep.subr.mxu0 0.0
        %3357 = vmatpush2.msra.mxu0 0.0
        %3358 = vmatprep.subr.mxu0 0.0
        %3359 = vmatpush2.msra.mxu0 0.0
        %3360 = vmatprep.subr.mxu0 0.0
        %3361 = vmatpush2.msra.mxu0 0.0
        %3362 = vmatprep.mubr.f32.mxu0 0.0
        %3363 = vmatmul.mubr.f32.gmra.mxu0 %v516
        %v3364 = vpop.f32.mrf.mxu0
        %v3365 = vadd.f32 0.0, %v3364
        %v3366 = vpop.f32.mrf.mxu0
        %3367 = vmatprep.mubr.f32.mxu0 0.0
        %3368 = vmatmul.mubr.f32.gmra.mxu0 %v519
        %v3369 = vpop.f32.mrf.mxu0
        %v3370 = vadd.f32 0.0, %v3369
        %v3371 = vpop.f32.mrf.mxu0
        %3372 = vmatprep.mubr.f32.mxu0 0.0
        %3373 = vmatmul.mubr.f32.gmra.mxu0 %v522
        %v3374 = vpop.f32.mrf.mxu0
        %v3375 = vadd.f32 0.0, %v3374
        %v3376 = vpop.f32.mrf.mxu0
        %3377 = vmatprep.mubr.f32.mxu0 0.0
        %3378 = vmatmul.mubr.f32.gmra.mxu0 %v525
        %v3379 = vpop.f32.mrf.mxu0
        %v3380 = vadd.f32 0.0, %v3379
        %v3381 = vpop.f32.mrf.mxu0
        %3382 = vmatprep.mubr.f32.mxu0 0.0
        %3383 = vmatmul.mubr.f32.gmra.mxu0 %v528
        %v3384 = vpop.f32.mrf.mxu0
        %v3385 = vadd.f32 0.0, %v3384
        %v3386 = vpop.f32.mrf.mxu0
        %3387 = vmatprep.mubr.f32.mxu0 0.0
        %3388 = vmatmul.mubr.f32.gmra.mxu0 %v531
        %v3389 = vpop.f32.mrf.mxu0
        %v3390 = vadd.f32 0.0, %v3389
        %v3391 = vpop.f32.mrf.mxu0
        %3392 = vmatprep.mubr.f32.mxu0 0.0
        %3393 = vmatmul.mubr.f32.gmra.mxu0 %v534
        %v3394 = vpop.f32.mrf.mxu0
        %v3395 = vadd.f32 0.0, %v3394
        %v3396 = vpop.f32.mrf.mxu0
        %3397 = vmatprep.mubr.f32.mxu0 0.0
        %3398 = vmatmul.mubr.f32.gmra.mxu0 %v537
        %v3399 = vpop.f32.mrf.mxu0
        %v3400 = vadd.f32 0.0, %v3399
        %v3401 = vpop.f32.mrf.mxu0
        %3402 = vmatprep.mubr.f32.mxu0 0.0
        %3403 = vmatmul.mubr.f32.gmra.mxu0 %v540
        %v3404 = vpop.f32.mrf.mxu0
        %v3405 = vadd.f32 0.0, %v3404
        %v3406 = vpop.f32.mrf.mxu0
        %3407 = vmatprep.mubr.f32.mxu0 0.0
        %3408 = vmatmul.mubr.f32.gmra.mxu0 %v543
        %v3409 = vpop.f32.mrf.mxu0
        %v3410 = vadd.f32 0.0, %v3409
        %v3411 = vpop.f32.mrf.mxu0
        %3412 = vmatprep.mubr.f32.mxu0 0.0
        %3413 = vmatmul.mubr.f32.gmra.mxu0 %v546
        %v3414 = vpop.f32.mrf.mxu0
        %v3415 = vadd.f32 0.0, %v3414
        %v3416 = vpop.f32.mrf.mxu0
        %3417 = vmatprep.mubr.f32.mxu0 0.0
        %3418 = vmatmul.mubr.f32.gmra.mxu0 %v549
        %v3419 = vpop.f32.mrf.mxu0
        %v3420 = vadd.f32 0.0, %v3419
        %v3421 = vpop.f32.mrf.mxu0
        %3422 = vmatprep.mubr.f32.mxu0 0.0
        %3423 = vmatmul.mubr.f32.gmra.mxu0 %v552
        %v3424 = vpop.f32.mrf.mxu0
        %v3425 = vadd.f32 0.0, %v3424
        %v3426 = vpop.f32.mrf.mxu0
        %3427 = vmatprep.mubr.f32.mxu0 0.0
        %3428 = vmatmul.mubr.f32.gmra.mxu0 %v555
        %v3429 = vpop.f32.mrf.mxu0
        %v3430 = vadd.f32 0.0, %v3429
        %v3431 = vpop.f32.mrf.mxu0
        %3432 = vmatprep.mubr.f32.mxu0 0.0
        %3433 = vmatmul.mubr.f32.gmra.mxu0 %v558
        %v3434 = vpop.f32.mrf.mxu0
        %v3435 = vadd.f32 0.0, %v3434
        %v3436 = vpop.f32.mrf.mxu0
        %3437 = vmatprep.mubr.f32.mxu0 0.0
        %3438 = vmatmul.mubr.f32.gmra.mxu0 %v561
        %v3439 = vpop.f32.mrf.mxu0
        %v3440 = vadd.f32 0.0, %v3439
        %v3441 = vpop.f32.mrf.mxu0
        %3442 = vmatprep.mubr.f32.mxu0 0.0
        %3443 = vmatmul.mubr.f32.gmra.mxu0 %v564
        %v3444 = vpop.f32.mrf.mxu0
        %v3445 = vadd.f32 0.0, %v3444
        %v3446 = vpop.f32.mrf.mxu0
        %3447 = vmatprep.mubr.f32.mxu0 0.0
        %3448 = vmatmul.mubr.f32.gmra.mxu0 %v567
        %v3449 = vpop.f32.mrf.mxu0
        %v3450 = vadd.f32 0.0, %v3449
        %v3451 = vpop.f32.mrf.mxu0
        %3452 = vmatprep.mubr.f32.mxu0 0.0
        %3453 = vmatmul.mubr.f32.gmra.mxu0 %v570
        %v3454 = vpop.f32.mrf.mxu0
        %v3455 = vadd.f32 0.0, %v3454
        %v3456 = vpop.f32.mrf.mxu0
        %3457 = vmatprep.mubr.f32.mxu0 0.0
        %3458 = vmatmul.mubr.f32.gmra.mxu0 %v573
        %v3459 = vpop.f32.mrf.mxu0
        %v3460 = vadd.f32 0.0, %v3459
        %v3461 = vpop.f32.mrf.mxu0
        %3462 = vmatprep.mubr.f32.mxu0 0.0
        %3463 = vmatmul.mubr.f32.gmra.mxu0 %v576
        %v3464 = vpop.f32.mrf.mxu0
        %v3465 = vadd.f32 0.0, %v3464
        %v3466 = vpop.f32.mrf.mxu0
        %3467 = vmatprep.mubr.f32.mxu0 0.0
        %3468 = vmatmul.mubr.f32.gmra.mxu0 %v579
        %v3469 = vpop.f32.mrf.mxu0
        %v3470 = vadd.f32 0.0, %v3469
        %v3471 = vpop.f32.mrf.mxu0
        %3472 = vmatprep.mubr.f32.mxu0 0.0
        %3473 = vmatmul.mubr.f32.gmra.mxu0 %v582
        %v3474 = vpop.f32.mrf.mxu0
        %v3475 = vadd.f32 0.0, %v3474
        %v3476 = vpop.f32.mrf.mxu0
        %3477 = vmatprep.mubr.f32.mxu0 0.0
        %3478 = vmatmul.mubr.f32.gmra.mxu0 %v585
        %v3479 = vpop.f32.mrf.mxu0
        %v3480 = vadd.f32 0.0, %v3479
        %v3481 = vpop.f32.mrf.mxu0
        %3482 = vmatprep.mubr.f32.mxu0 0.0
        %3483 = vmatmul.mubr.f32.gmra.mxu0 %v588
        %v3484 = vpop.f32.mrf.mxu0
        %v3485 = vadd.f32 0.0, %v3484
        %v3486 = vpop.f32.mrf.mxu0
        %3487 = vmatprep.mubr.f32.mxu0 0.0
        %3488 = vmatmul.mubr.f32.gmra.mxu0 %v591
        %v3489 = vpop.f32.mrf.mxu0
        %v3490 = vadd.f32 0.0, %v3489
        %v3491 = vpop.f32.mrf.mxu0
        %3492 = vmatprep.mubr.f32.mxu0 0.0
        %3493 = vmatmul.mubr.f32.gmra.mxu0 %v594
        %v3494 = vpop.f32.mrf.mxu0
        %v3495 = vadd.f32 0.0, %v3494
        %v3496 = vpop.f32.mrf.mxu0
        %3497 = vmatprep.mubr.f32.mxu0 0.0
        %3498 = vmatmul.mubr.f32.gmra.mxu0 %v597
        %v3499 = vpop.f32.mrf.mxu0
        %v3500 = vadd.f32 0.0, %v3499
        %v3501 = vpop.f32.mrf.mxu0
        %3502 = vmatprep.mubr.f32.mxu0 0.0
        %3503 = vmatmul.mubr.f32.gmra.mxu0 %v600
        %v3504 = vpop.f32.mrf.mxu0
        %v3505 = vadd.f32 0.0, %v3504
        %v3506 = vpop.f32.mrf.mxu0
        %3507 = vmatprep.mubr.f32.mxu0 0.0
        %3508 = vmatmul.mubr.f32.gmra.mxu0 %v603
        %v3509 = vpop.f32.mrf.mxu0
        %v3510 = vadd.f32 0.0, %v3509
        %v3511 = vpop.f32.mrf.mxu0
        %3512 = vmatprep.mubr.f32.mxu0 0.0
        %3513 = vmatmul.mubr.f32.gmra.mxu0 %v606
        %v3514 = vpop.f32.mrf.mxu0
        %v3515 = vadd.f32 0.0, %v3514
        %v3516 = vpop.f32.mrf.mxu0
        %3517 = vmatprep.mubr.f32.mxu0 0.0
        %3518 = vmatmul.mubr.f32.gmra.mxu0 %v609
        %v3519 = vpop.f32.mrf.mxu0
        %v3520 = vadd.f32 0.0, %v3519
        %v3521 = vpop.f32.mrf.mxu0
        %3522 = vmatprep.mubr.f32.mxu0 0.0
        %3523 = vmatmul.mubr.f32.gmra.mxu0 %v612
        %v3524 = vpop.f32.mrf.mxu0
        %v3525 = vadd.f32 0.0, %v3524
        %v3526 = vpop.f32.mrf.mxu0
        %3527 = vmatprep.mubr.f32.mxu0 0.0
        %3528 = vmatmul.mubr.f32.gmra.mxu0 %v615
        %v3529 = vpop.f32.mrf.mxu0
        %v3530 = vadd.f32 0.0, %v3529
        %v3531 = vpop.f32.mrf.mxu0
        %3532 = vmatprep.mubr.f32.mxu0 0.0
        %3533 = vmatmul.mubr.f32.gmra.mxu0 %v618
        %v3534 = vpop.f32.mrf.mxu0
        %v3535 = vadd.f32 0.0, %v3534
        %v3536 = vpop.f32.mrf.mxu0
        %3537 = vmatprep.mubr.f32.mxu0 0.0
        %3538 = vmatmul.mubr.f32.gmra.mxu0 %v621
        %v3539 = vpop.f32.mrf.mxu0
        %v3540 = vadd.f32 0.0, %v3539
        %v3541 = vpop.f32.mrf.mxu0
        %3542 = vmatprep.mubr.f32.mxu0 0.0
        %3543 = vmatmul.mubr.f32.gmra.mxu0 %v624
        %v3544 = vpop.f32.mrf.mxu0
        %v3545 = vadd.f32 0.0, %v3544
        %v3546 = vpop.f32.mrf.mxu0
        %3547 = vmatprep.mubr.f32.mxu0 0.0
        %3548 = vmatmul.mubr.f32.gmra.mxu0 %v627
        %v3549 = vpop.f32.mrf.mxu0
        %v3550 = vadd.f32 0.0, %v3549
        %v3551 = vpop.f32.mrf.mxu0
        %3552 = vmatprep.mubr.f32.mxu0 0.0
        %3553 = vmatmul.mubr.f32.gmra.mxu0 %v630
        %v3554 = vpop.f32.mrf.mxu0
        %v3555 = vadd.f32 0.0, %v3554
        %v3556 = vpop.f32.mrf.mxu0
        %3557 = vmatprep.mubr.f32.mxu0 0.0
        %3558 = vmatmul.mubr.f32.gmra.mxu0 %v633
        %v3559 = vpop.f32.mrf.mxu0
        %v3560 = vadd.f32 0.0, %v3559
        %v3561 = vpop.f32.mrf.mxu0
        %3562 = vmatprep.mubr.f32.mxu0 0.0
        %3563 = vmatmul.mubr.f32.gmra.mxu0 %v636
        %v3564 = vpop.f32.mrf.mxu0
        %v3565 = vadd.f32 0.0, %v3564
        %v3566 = vpop.f32.mrf.mxu0
        %3567 = vmatprep.mubr.f32.mxu0 0.0
        %3568 = vmatmul.mubr.f32.gmra.mxu0 %v639
        %v3569 = vpop.f32.mrf.mxu0
        %v3570 = vadd.f32 0.0, %v3569
        %v3571 = vpop.f32.mrf.mxu0
        %3572 = vmatprep.mubr.f32.mxu0 0.0
        %3573 = vmatmul.mubr.f32.gmra.mxu0 %v642
        %v3574 = vpop.f32.mrf.mxu0
        %v3575 = vadd.f32 0.0, %v3574
        %v3576 = vpop.f32.mrf.mxu0
        %3577 = vmatprep.mubr.f32.mxu0 0.0
        %3578 = vmatmul.mubr.f32.gmra.mxu0 %v645
        %v3579 = vpop.f32.mrf.mxu0
        %v3580 = vadd.f32 0.0, %v3579
        %v3581 = vpop.f32.mrf.mxu0
        %3582 = vmatprep.mubr.f32.mxu0 0.0
        %3583 = vmatmul.mubr.f32.gmra.mxu0 %v648
        %v3584 = vpop.f32.mrf.mxu0
        %v3585 = vadd.f32 0.0, %v3584
        %v3586 = vpop.f32.mrf.mxu0
        %3587 = vmatprep.mubr.f32.mxu0 0.0
        %3588 = vmatmul.mubr.f32.gmra.mxu0 %v651
        %v3589 = vpop.f32.mrf.mxu0
        %v3590 = vadd.f32 0.0, %v3589
        %v3591 = vpop.f32.mrf.mxu0
        %3592 = vmatprep.mubr.f32.mxu0 0.0
        %3593 = vmatmul.mubr.f32.gmra.mxu0 %v654
        %v3594 = vpop.f32.mrf.mxu0
        %v3595 = vadd.f32 0.0, %v3594
        %v3596 = vpop.f32.mrf.mxu0
        %3597 = vmatprep.mubr.f32.mxu0 0.0
        %3598 = vmatmul.mubr.f32.gmra.mxu0 %v657
        %v3599 = vpop.f32.mrf.mxu0
        %v3600 = vadd.f32 0.0, %v3599
        %v3601 = vpop.f32.mrf.mxu0
        %3602 = vmatprep.mubr.f32.mxu0 0.0
        %3603 = vmatmul.mubr.f32.gmra.mxu0 %v660
        %v3604 = vpop.f32.mrf.mxu0
        %v3605 = vadd.f32 0.0, %v3604
        %v3606 = vpop.f32.mrf.mxu0
        %3607 = vmatprep.mubr.f32.mxu0 0.0
        %3608 = vmatmul.mubr.f32.gmra.mxu0 %v663
        %v3609 = vpop.f32.mrf.mxu0
        %v3610 = vadd.f32 0.0, %v3609
        %v3611 = vpop.f32.mrf.mxu0
        %3612 = vmatprep.mubr.f32.mxu0 0.0
        %3613 = vmatmul.mubr.f32.gmra.mxu0 %v666
        %v3614 = vpop.f32.mrf.mxu0
        %v3615 = vadd.f32 0.0, %v3614
        %v3616 = vpop.f32.mrf.mxu0
        %3617 = vmatprep.mubr.f32.mxu0 0.0
        %3618 = vmatmul.mubr.f32.gmra.mxu0 %v669
        %v3619 = vpop.f32.mrf.mxu0
        %v3620 = vadd.f32 0.0, %v3619
        %v3621 = vpop.f32.mrf.mxu0
        %3622 = vmatprep.mubr.f32.mxu0 0.0
        %3623 = vmatmul.mubr.f32.gmra.mxu0 %v672
        %v3624 = vpop.f32.mrf.mxu0
        %v3625 = vadd.f32 0.0, %v3624
        %v3626 = vpop.f32.mrf.mxu0
        %3627 = vmatprep.mubr.f32.mxu0 0.0
        %3628 = vmatmul.mubr.f32.gmra.mxu0 %v675
        %v3629 = vpop.f32.mrf.mxu0
        %v3630 = vadd.f32 0.0, %v3629
        %v3631 = vpop.f32.mrf.mxu0
        %3632 = vmatprep.mubr.f32.mxu0 0.0
        %3633 = vmatmul.mubr.f32.gmra.mxu0 %v678
        %v3634 = vpop.f32.mrf.mxu0
        %v3635 = vadd.f32 0.0, %v3634
        %v3636 = vpop.f32.mrf.mxu0
        %3637 = vmatprep.mubr.f32.mxu0 0.0
        %3638 = vmatmul.mubr.f32.gmra.mxu0 %v681
        %v3639 = vpop.f32.mrf.mxu0
        %v3640 = vadd.f32 0.0, %v3639
        %v3641 = vpop.f32.mrf.mxu0
        %3642 = vmatprep.mubr.f32.mxu0 0.0
        %3643 = vmatmul.mubr.f32.gmra.mxu0 %v684
        %v3644 = vpop.f32.mrf.mxu0
        %v3645 = vadd.f32 0.0, %v3644
        %v3646 = vpop.f32.mrf.mxu0
        %3647 = vmatprep.mubr.f32.mxu0 0.0
        %3648 = vmatmul.mubr.f32.gmra.mxu0 %v687
        %v3649 = vpop.f32.mrf.mxu0
        %v3650 = vadd.f32 0.0, %v3649
        %v3651 = vpop.f32.mrf.mxu0
        %3652 = vmatprep.mubr.f32.mxu0 0.0
        %3653 = vmatmul.mubr.f32.gmra.mxu0 %v690
        %v3654 = vpop.f32.mrf.mxu0
        %v3655 = vadd.f32 0.0, %v3654
        %v3656 = vpop.f32.mrf.mxu0
        %3657 = vmatprep.mubr.f32.mxu0 0.0
        %3658 = vmatmul.mubr.f32.gmra.mxu0 %v693
        %v3659 = vpop.f32.mrf.mxu0
        %v3660 = vadd.f32 0.0, %v3659
        %v3661 = vpop.f32.mrf.mxu0
        %3662 = vdwg.mxu0
        %s3663 = scalar_lea.vmem %s204, 2400 [#allocation7]
        %3664 = vst [vmem:[%s3663] sm:$0xff] %v2515
        %3665 = vst [vmem:[%s3663 + $0x8] sm:$0xff] %v2517
        %3666 = vst [vmem:[%s3663 + $0x10] sm:$0xff] %v2940
        %3667 = vst [vmem:[%s3663 + $0x18] sm:$0xff] %v2942
        %3668 = vst [vmem:[%s3663 + $0x20] sm:$0xff] %v3365
        %3669 = vst [vmem:[%s3663 + $0x28] sm:$0xff] %v2521
        %3670 = vst [vmem:[%s3663 + $0x30] sm:$0xff] %v2523
        %3671 = vst [vmem:[%s3663 + $0x38] sm:$0xff] %v2946
        %3672 = vst [vmem:[%s3663 + $0x40] sm:$0xff] %v2948
        %3673 = vst [vmem:[%s3663 + $0x48] sm:$0xff] %v3370
        %3674 = vst [vmem:[%s3663 + $0x50] sm:$0xff] %v2527
        %3675 = vst [vmem:[%s3663 + $0x58] sm:$0xff] %v2529
        %3676 = vst [vmem:[%s3663 + $0x60] sm:$0xff] %v2952
        %3677 = vst [vmem:[%s3663 + $0x68] sm:$0xff] %v2954
        %3678 = vst [vmem:[%s3663 + $0x70] sm:$0xff] %v3375
        %3679 = vst [vmem:[%s3663 + $0x78] sm:$0xff] %v2533
        %3680 = vst [vmem:[%s3663 + $0x80] sm:$0xff] %v2535
        %3681 = vst [vmem:[%s3663 + $0x88] sm:$0xff] %v2958
        %3682 = vst [vmem:[%s3663 + $0x90] sm:$0xff] %v2960
        %3683 = vst [vmem:[%s3663 + $0x98] sm:$0xff] %v3380
        %3684 = vst [vmem:[%s3663 + $0xa0] sm:$0xff] %v2539
        %3685 = vst [vmem:[%s3663 + $0xa8] sm:$0xff] %v2541
        %3686 = vst [vmem:[%s3663 + $0xb0] sm:$0xff] %v2964
        %3687 = vst [vmem:[%s3663 + $0xb8] sm:$0xff] %v2966
        %3688 = vst [vmem:[%s3663 + $0xc0] sm:$0xff] %v3385
        %3689 = vst [vmem:[%s3663 + $0xc8] sm:$0xff] %v2545
        %3690 = vst [vmem:[%s3663 + $0xd0] sm:$0xff] %v2547
        %3691 = vst [vmem:[%s3663 + $0xd8] sm:$0xff] %v2970
        %3692 = vst [vmem:[%s3663 + $0xe0] sm:$0xff] %v2972
        %3693 = vst [vmem:[%s3663 + $0xe8] sm:$0xff] %v3390
        %3694 = vst [vmem:[%s3663 + $0xf0] sm:$0xff] %v2551
        %3695 = vst [vmem:[%s3663 + $0xf8] sm:$0xff] %v2553
        %3696 = vst [vmem:[%s3663 + $0x100] sm:$0xff] %v2976
        %3697 = vst [vmem:[%s3663 + $0x108] sm:$0xff] %v2978
        %3698 = vst [vmem:[%s3663 + $0x110] sm:$0xff] %v3395
        %3699 = vst [vmem:[%s3663 + $0x118] sm:$0xff] %v2557
        %3700 = vst [vmem:[%s3663 + $0x120] sm:$0xff] %v2559
        %3701 = vst [vmem:[%s3663 + $0x128] sm:$0xff] %v2982
        %3702 = vst [vmem:[%s3663 + $0x130] sm:$0xff] %v2984
        %3703 = vst [vmem:[%s3663 + $0x138] sm:$0xff] %v3400
        %3704 = vst [vmem:[%s3663 + $0x140] sm:$0xff] %v2563
        %3705 = vst [vmem:[%s3663 + $0x148] sm:$0xff] %v2565
        %3706 = vst [vmem:[%s3663 + $0x150] sm:$0xff] %v2988
        %3707 = vst [vmem:[%s3663 + $0x158] sm:$0xff] %v2990
        %3708 = vst [vmem:[%s3663 + $0x160] sm:$0xff] %v3405
        %3709 = vst [vmem:[%s3663 + $0x168] sm:$0xff] %v2569
        %3710 = vst [vmem:[%s3663 + $0x170] sm:$0xff] %v2571
        %3711 = vst [vmem:[%s3663 + $0x178] sm:$0xff] %v2994
        %3712 = vst [vmem:[%s3663 + $0x180] sm:$0xff] %v2996
        %3713 = vst [vmem:[%s3663 + $0x188] sm:$0xff] %v3410
        %3714 = vst [vmem:[%s3663 + $0x190] sm:$0xff] %v2575
        %3715 = vst [vmem:[%s3663 + $0x198] sm:$0xff] %v2577
        %3716 = vst [vmem:[%s3663 + $0x1a0] sm:$0xff] %v3000
        %3717 = vst [vmem:[%s3663 + $0x1a8] sm:$0xff] %v3002
        %3718 = vst [vmem:[%s3663 + $0x1b0] sm:$0xff] %v3415
        %3719 = vst [vmem:[%s3663 + $0x1b8] sm:$0xff] %v2581
        %3720 = vst [vmem:[%s3663 + $0x1c0] sm:$0xff] %v2583
        %3721 = vst [vmem:[%s3663 + $0x1c8] sm:$0xff] %v3006
        %3722 = vst [vmem:[%s3663 + $0x1d0] sm:$0xff] %v3008
        %3723 = vst [vmem:[%s3663 + $0x1d8] sm:$0xff] %v3420
        %3724 = vst [vmem:[%s3663 + $0x1e0] sm:$0xff] %v2587
        %3725 = vst [vmem:[%s3663 + $0x1e8] sm:$0xff] %v2589
        %3726 = vst [vmem:[%s3663 + $0x1f0] sm:$0xff] %v3012
        %3727 = vst [vmem:[%s3663 + $0x1f8] sm:$0xff] %v3014
        %3728 = vst [vmem:[%s3663 + $0x200] sm:$0xff] %v3425
        %3729 = vst [vmem:[%s3663 + $0x208] sm:$0xff] %v2593
        %3730 = vst [vmem:[%s3663 + $0x210] sm:$0xff] %v2595
        %3731 = vst [vmem:[%s3663 + $0x218] sm:$0xff] %v3018
        %3732 = vst [vmem:[%s3663 + $0x220] sm:$0xff] %v3020
        %3733 = vst [vmem:[%s3663 + $0x228] sm:$0xff] %v3430
        %3734 = vst [vmem:[%s3663 + $0x230] sm:$0xff] %v2599
        %3735 = vst [vmem:[%s3663 + $0x238] sm:$0xff] %v2601
        %3736 = vst [vmem:[%s3663 + $0x240] sm:$0xff] %v3024
        %3737 = vst [vmem:[%s3663 + $0x248] sm:$0xff] %v3026
        %3738 = vst [vmem:[%s3663 + $0x250] sm:$0xff] %v3435
        %3739 = vst [vmem:[%s3663 + $0x258] sm:$0xff] %v2605
        %3740 = vst [vmem:[%s3663 + $0x260] sm:$0xff] %v2607
        %3741 = vst [vmem:[%s3663 + $0x268] sm:$0xff] %v3030
        %3742 = vst [vmem:[%s3663 + $0x270] sm:$0xff] %v3032
        %3743 = vst [vmem:[%s3663 + $0x278] sm:$0xff] %v3440
        %3744 = vst [vmem:[%s3663 + $0x280] sm:$0xff] %v2611
        %3745 = vst [vmem:[%s3663 + $0x288] sm:$0xff] %v2613
        %3746 = vst [vmem:[%s3663 + $0x290] sm:$0xff] %v3036
        %3747 = vst [vmem:[%s3663 + $0x298] sm:$0xff] %v3038
        %3748 = vst [vmem:[%s3663 + $0x2a0] sm:$0xff] %v3445
        %3749 = vst [vmem:[%s3663 + $0x2a8] sm:$0xff] %v2617
        %3750 = vst [vmem:[%s3663 + $0x2b0] sm:$0xff] %v2619
        %3751 = vst [vmem:[%s3663 + $0x2b8] sm:$0xff] %v3042
        %3752 = vst [vmem:[%s3663 + $0x2c0] sm:$0xff] %v3044
        %3753 = vst [vmem:[%s3663 + $0x2c8] sm:$0xff] %v3450
        %3754 = vst [vmem:[%s3663 + $0x2d0] sm:$0xff] %v2623
        %3755 = vst [vmem:[%s3663 + $0x2d8] sm:$0xff] %v2625
        %3756 = vst [vmem:[%s3663 + $0x2e0] sm:$0xff] %v3048
        %3757 = vst [vmem:[%s3663 + $0x2e8] sm:$0xff] %v3050
        %3758 = vst [vmem:[%s3663 + $0x2f0] sm:$0xff] %v3455
        %3759 = vst [vmem:[%s3663 + $0x2f8] sm:$0xff] %v2629
        %3760 = vst [vmem:[%s3663 + $0x300] sm:$0xff] %v2631
        %3761 = vst [vmem:[%s3663 + $0x308] sm:$0xff] %v3054
        %3762 = vst [vmem:[%s3663 + $0x310] sm:$0xff] %v3056
        %3763 = vst [vmem:[%s3663 + $0x318] sm:$0xff] %v3460
        %3764 = vst [vmem:[%s3663 + $0x320] sm:$0xff] %v2635
        %3765 = vst [vmem:[%s3663 + $0x328] sm:$0xff] %v2637
        %3766 = vst [vmem:[%s3663 + $0x330] sm:$0xff] %v3060
        %3767 = vst [vmem:[%s3663 + $0x338] sm:$0xff] %v3062
        %3768 = vst [vmem:[%s3663 + $0x340] sm:$0xff] %v3465
        %3769 = vst [vmem:[%s3663 + $0x348] sm:$0xff] %v2641
        %3770 = vst [vmem:[%s3663 + $0x350] sm:$0xff] %v2643
        %3771 = vst [vmem:[%s3663 + $0x358] sm:$0xff] %v3066
        %3772 = vst [vmem:[%s3663 + $0x360] sm:$0xff] %v3068
        %3773 = vst [vmem:[%s3663 + $0x368] sm:$0xff] %v3470
        %3774 = vst [vmem:[%s3663 + $0x370] sm:$0xff] %v2647
        %3775 = vst [vmem:[%s3663 + $0x378] sm:$0xff] %v2649
        %3776 = vst [vmem:[%s3663 + $0x380] sm:$0xff] %v3072
        %3777 = vst [vmem:[%s3663 + $0x388] sm:$0xff] %v3074
        %3778 = vst [vmem:[%s3663 + $0x390] sm:$0xff] %v3475
        %3779 = vst [vmem:[%s3663 + $0x398] sm:$0xff] %v2653
        %3780 = vst [vmem:[%s3663 + $0x3a0] sm:$0xff] %v2655
        %3781 = vst [vmem:[%s3663 + $0x3a8] sm:$0xff] %v3078
        %3782 = vst [vmem:[%s3663 + $0x3b0] sm:$0xff] %v3080
        %3783 = vst [vmem:[%s3663 + $0x3b8] sm:$0xff] %v3480
        %3784 = vst [vmem:[%s3663 + $0x3c0] sm:$0xff] %v2659
        %3785 = vst [vmem:[%s3663 + $0x3c8] sm:$0xff] %v2661
        %3786 = vst [vmem:[%s3663 + $0x3d0] sm:$0xff] %v3084
        %3787 = vst [vmem:[%s3663 + $0x3d8] sm:$0xff] %v3086
        %3788 = vst [vmem:[%s3663 + $0x3e0] sm:$0xff] %v3485
        %3789 = vst [vmem:[%s3663 + $0x3e8] sm:$0xff] %v2665
        %3790 = vst [vmem:[%s3663 + $0x3f0] sm:$0xff] %v2667
        %3791 = vst [vmem:[%s3663 + $0x3f8] sm:$0xff] %v3090
        %3792 = vst [vmem:[%s3663 + $0x400] sm:$0xff] %v3092
        %3793 = vst [vmem:[%s3663 + $0x408] sm:$0xff] %v3490
        %3794 = vst [vmem:[%s3663 + $0x410] sm:$0xff] %v2671
        %3795 = vst [vmem:[%s3663 + $0x418] sm:$0xff] %v2673
        %3796 = vst [vmem:[%s3663 + $0x420] sm:$0xff] %v3096
        %3797 = vst [vmem:[%s3663 + $0x428] sm:$0xff] %v3098
        %3798 = vst [vmem:[%s3663 + $0x430] sm:$0xff] %v3495
        %3799 = vst [vmem:[%s3663 + $0x438] sm:$0xff] %v2677
        %3800 = vst [vmem:[%s3663 + $0x440] sm:$0xff] %v2679
        %3801 = vst [vmem:[%s3663 + $0x448] sm:$0xff] %v3102
        %3802 = vst [vmem:[%s3663 + $0x450] sm:$0xff] %v3104
        %3803 = vst [vmem:[%s3663 + $0x458] sm:$0xff] %v3500
        %3804 = vst [vmem:[%s3663 + $0x460] sm:$0xff] %v2683
        %3805 = vst [vmem:[%s3663 + $0x468] sm:$0xff] %v2685
        %3806 = vst [vmem:[%s3663 + $0x470] sm:$0xff] %v3108
        %3807 = vst [vmem:[%s3663 + $0x478] sm:$0xff] %v3110
        %3808 = vst [vmem:[%s3663 + $0x480] sm:$0xff] %v3505
        %3809 = vst [vmem:[%s3663 + $0x488] sm:$0xff] %v2689
        %3810 = vst [vmem:[%s3663 + $0x490] sm:$0xff] %v2691
        %3811 = vst [vmem:[%s3663 + $0x498] sm:$0xff] %v3114
        %3812 = vst [vmem:[%s3663 + $0x4a0] sm:$0xff] %v3116
        %3813 = vst [vmem:[%s3663 + $0x4a8] sm:$0xff] %v3510
        %3814 = vst [vmem:[%s3663 + $0x4b0] sm:$0xff] %v2695
        %3815 = vst [vmem:[%s3663 + $0x4b8] sm:$0xff] %v2697
        %3816 = vst [vmem:[%s3663 + $0x4c0] sm:$0xff] %v3120
        %3817 = vst [vmem:[%s3663 + $0x4c8] sm:$0xff] %v3122
        %3818 = vst [vmem:[%s3663 + $0x4d0] sm:$0xff] %v3515
        %3819 = vst [vmem:[%s3663 + $0x4d8] sm:$0xff] %v2701
        %3820 = vst [vmem:[%s3663 + $0x4e0] sm:$0xff] %v2703
        %3821 = vst [vmem:[%s3663 + $0x4e8] sm:$0xff] %v3126
        %3822 = vst [vmem:[%s3663 + $0x4f0] sm:$0xff] %v3128
        %3823 = vst [vmem:[%s3663 + $0x4f8] sm:$0xff] %v3520
        %3824 = vst [vmem:[%s3663 + $0x500] sm:$0xff] %v2707
        %3825 = vst [vmem:[%s3663 + $0x508] sm:$0xff] %v2709
        %3826 = vst [vmem:[%s3663 + $0x510] sm:$0xff] %v3132
        %3827 = vst [vmem:[%s3663 + $0x518] sm:$0xff] %v3134
        %3828 = vst [vmem:[%s3663 + $0x520] sm:$0xff] %v3525
        %3829 = vst [vmem:[%s3663 + $0x528] sm:$0xff] %v2713
        %3830 = vst [vmem:[%s3663 + $0x530] sm:$0xff] %v2715
        %3831 = vst [vmem:[%s3663 + $0x538] sm:$0xff] %v3138
        %3832 = vst [vmem:[%s3663 + $0x540] sm:$0xff] %v3140
        %3833 = vst [vmem:[%s3663 + $0x548] sm:$0xff] %v3530
        %3834 = vst [vmem:[%s3663 + $0x550] sm:$0xff] %v2719
        %3835 = vst [vmem:[%s3663 + $0x558] sm:$0xff] %v2721
        %3836 = vst [vmem:[%s3663 + $0x560] sm:$0xff] %v3144
        %3837 = vst [vmem:[%s3663 + $0x568] sm:$0xff] %v3146
        %3838 = vst [vmem:[%s3663 + $0x570] sm:$0xff] %v3535
        %3839 = vst [vmem:[%s3663 + $0x578] sm:$0xff] %v2725
        %3840 = vst [vmem:[%s3663 + $0x580] sm:$0xff] %v2727
        %3841 = vst [vmem:[%s3663 + $0x588] sm:$0xff] %v3150
        %3842 = vst [vmem:[%s3663 + $0x590] sm:$0xff] %v3152
        %3843 = vst [vmem:[%s3663 + $0x598] sm:$0xff] %v3540
        %3844 = vst [vmem:[%s3663 + $0x5a0] sm:$0xff] %v2731
        %3845 = vst [vmem:[%s3663 + $0x5a8] sm:$0xff] %v2733
        %3846 = vst [vmem:[%s3663 + $0x5b0] sm:$0xff] %v3156
        %3847 = vst [vmem:[%s3663 + $0x5b8] sm:$0xff] %v3158
        %3848 = vst [vmem:[%s3663 + $0x5c0] sm:$0xff] %v3545
        %3849 = vst [vmem:[%s3663 + $0x5c8] sm:$0xff] %v2737
        %3850 = vst [vmem:[%s3663 + $0x5d0] sm:$0xff] %v2739
        %3851 = vst [vmem:[%s3663 + $0x5d8] sm:$0xff] %v3162
        %3852 = vst [vmem:[%s3663 + $0x5e0] sm:$0xff] %v3164
        %3853 = vst [vmem:[%s3663 + $0x5e8] sm:$0xff] %v3550
        %3854 = vst [vmem:[%s3663 + $0x5f0] sm:$0xff] %v2743
        %3855 = vst [vmem:[%s3663 + $0x5f8] sm:$0xff] %v2745
        %3856 = vst [vmem:[%s3663 + $0x600] sm:$0xff] %v3168
        %3857 = vst [vmem:[%s3663 + $0x608] sm:$0xff] %v3170
        %3858 = vst [vmem:[%s3663 + $0x610] sm:$0xff] %v3555
        %3859 = vst [vmem:[%s3663 + $0x618] sm:$0xff] %v2749
        %3860 = vst [vmem:[%s3663 + $0x620] sm:$0xff] %v2751
        %3861 = vst [vmem:[%s3663 + $0x628] sm:$0xff] %v3174
        %3862 = vst [vmem:[%s3663 + $0x630] sm:$0xff] %v3176
        %3863 = vst [vmem:[%s3663 + $0x638] sm:$0xff] %v3560
        %3864 = vst [vmem:[%s3663 + $0x640] sm:$0xff] %v2755
        %3865 = vst [vmem:[%s3663 + $0x648] sm:$0xff] %v2757
        %3866 = vst [vmem:[%s3663 + $0x650] sm:$0xff] %v3180
        %3867 = vst [vmem:[%s3663 + $0x658] sm:$0xff] %v3182
        %3868 = vst [vmem:[%s3663 + $0x660] sm:$0xff] %v3565
        %3869 = vst [vmem:[%s3663 + $0x668] sm:$0xff] %v2761
        %3870 = vst [vmem:[%s3663 + $0x670] sm:$0xff] %v2763
        %3871 = vst [vmem:[%s3663 + $0x678] sm:$0xff] %v3186
        %3872 = vst [vmem:[%s3663 + $0x680] sm:$0xff] %v3188
        %3873 = vst [vmem:[%s3663 + $0x688] sm:$0xff] %v3570
        %3874 = vst [vmem:[%s3663 + $0x690] sm:$0xff] %v2767
        %3875 = vst [vmem:[%s3663 + $0x698] sm:$0xff] %v2769
        %3876 = vst [vmem:[%s3663 + $0x6a0] sm:$0xff] %v3192
        %3877 = vst [vmem:[%s3663 + $0x6a8] sm:$0xff] %v3194
        %3878 = vst [vmem:[%s3663 + $0x6b0] sm:$0xff] %v3575
        %3879 = vst [vmem:[%s3663 + $0x6b8] sm:$0xff] %v2773
        %3880 = vst [vmem:[%s3663 + $0x6c0] sm:$0xff] %v2775
        %3881 = vst [vmem:[%s3663 + $0x6c8] sm:$0xff] %v3198
        %3882 = vst [vmem:[%s3663 + $0x6d0] sm:$0xff] %v3200
        %3883 = vst [vmem:[%s3663 + $0x6d8] sm:$0xff] %v3580
        %3884 = vst [vmem:[%s3663 + $0x6e0] sm:$0xff] %v2779
        %3885 = vst [vmem:[%s3663 + $0x6e8] sm:$0xff] %v2781
        %3886 = vst [vmem:[%s3663 + $0x6f0] sm:$0xff] %v3204
        %3887 = vst [vmem:[%s3663 + $0x6f8] sm:$0xff] %v3206
        %3888 = vst [vmem:[%s3663 + $0x700] sm:$0xff] %v3585
        %3889 = vst [vmem:[%s3663 + $0x708] sm:$0xff] %v2785
        %3890 = vst [vmem:[%s3663 + $0x710] sm:$0xff] %v2787
        %3891 = vst [vmem:[%s3663 + $0x718] sm:$0xff] %v3210
        %3892 = vst [vmem:[%s3663 + $0x720] sm:$0xff] %v3212
        %3893 = vst [vmem:[%s3663 + $0x728] sm:$0xff] %v3590
        %3894 = vst [vmem:[%s3663 + $0x730] sm:$0xff] %v2791
        %3895 = vst [vmem:[%s3663 + $0x738] sm:$0xff] %v2793
        %3896 = vst [vmem:[%s3663 + $0x740] sm:$0xff] %v3216
        %3897 = vst [vmem:[%s3663 + $0x748] sm:$0xff] %v3218
        %3898 = vst [vmem:[%s3663 + $0x750] sm:$0xff] %v3595
        %3899 = vst [vmem:[%s3663 + $0x758] sm:$0xff] %v2797
        %3900 = vst [vmem:[%s3663 + $0x760] sm:$0xff] %v2799
        %3901 = vst [vmem:[%s3663 + $0x768] sm:$0xff] %v3222
        %3902 = vst [vmem:[%s3663 + $0x770] sm:$0xff] %v3224
        %3903 = vst [vmem:[%s3663 + $0x778] sm:$0xff] %v3600
        %3904 = vst [vmem:[%s3663 + $0x780] sm:$0xff] %v2803
        %3905 = vst [vmem:[%s3663 + $0x788] sm:$0xff] %v2805
        %3906 = vst [vmem:[%s3663 + $0x790] sm:$0xff] %v3228
        %3907 = vst [vmem:[%s3663 + $0x798] sm:$0xff] %v3230
        %3908 = vst [vmem:[%s3663 + $0x7a0] sm:$0xff] %v3605
        %3909 = vst [vmem:[%s3663 + $0x7a8] sm:$0xff] %v2809
        %3910 = vst [vmem:[%s3663 + $0x7b0] sm:$0xff] %v2811
        %3911 = vst [vmem:[%s3663 + $0x7b8] sm:$0xff] %v3234
        %3912 = vst [vmem:[%s3663 + $0x7c0] sm:$0xff] %v3236
        %3913 = vst [vmem:[%s3663 + $0x7c8] sm:$0xff] %v3610
        %3914 = vst [vmem:[%s3663 + $0x7d0] sm:$0xff] %v2815
        %3915 = vst [vmem:[%s3663 + $0x7d8] sm:$0xff] %v2817
        %3916 = vst [vmem:[%s3663 + $0x7e0] sm:$0xff] %v3240
        %3917 = vst [vmem:[%s3663 + $0x7e8] sm:$0xff] %v3242
        %3918 = vst [vmem:[%s3663 + $0x7f0] sm:$0xff] %v3615
        %3919 = vst [vmem:[%s3663 + $0x7f8] sm:$0xff] %v2821
        %3920 = vst [vmem:[%s3663 + $0x800] sm:$0xff] %v2823
        %3921 = vst [vmem:[%s3663 + $0x808] sm:$0xff] %v3246
        %3922 = vst [vmem:[%s3663 + $0x810] sm:$0xff] %v3248
        %3923 = vst [vmem:[%s3663 + $0x818] sm:$0xff] %v3620
        %3924 = vst [vmem:[%s3663 + $0x820] sm:$0xff] %v2827
        %3925 = vst [vmem:[%s3663 + $0x828] sm:$0xff] %v2829
        %3926 = vst [vmem:[%s3663 + $0x830] sm:$0xff] %v3252
        %3927 = vst [vmem:[%s3663 + $0x838] sm:$0xff] %v3254
        %3928 = vst [vmem:[%s3663 + $0x840] sm:$0xff] %v3625
        %3929 = vst [vmem:[%s3663 + $0x848] sm:$0xff] %v2833
        %3930 = vst [vmem:[%s3663 + $0x850] sm:$0xff] %v2835
        %3931 = vst [vmem:[%s3663 + $0x858] sm:$0xff] %v3258
        %3932 = vst [vmem:[%s3663 + $0x860] sm:$0xff] %v3260
        %3933 = vst [vmem:[%s3663 + $0x868] sm:$0xff] %v3630
        %3934 = vst [vmem:[%s3663 + $0x870] sm:$0xff] %v2839
        %3935 = vst [vmem:[%s3663 + $0x878] sm:$0xff] %v2841
        %3936 = vst [vmem:[%s3663 + $0x880] sm:$0xff] %v3264
        %3937 = vst [vmem:[%s3663 + $0x888] sm:$0xff] %v3266
        %3938 = vst [vmem:[%s3663 + $0x890] sm:$0xff] %v3635
        %3939 = vst [vmem:[%s3663 + $0x898] sm:$0xff] %v2845
        %3940 = vst [vmem:[%s3663 + $0x8a0] sm:$0xff] %v2847
        %3941 = vst [vmem:[%s3663 + $0x8a8] sm:$0xff] %v3270
        %3942 = vst [vmem:[%s3663 + $0x8b0] sm:$0xff] %v3272
        %3943 = vst [vmem:[%s3663 + $0x8b8] sm:$0xff] %v3640
        %3944 = vst [vmem:[%s3663 + $0x8c0] sm:$0xff] %v2851
        %3945 = vst [vmem:[%s3663 + $0x8c8] sm:$0xff] %v2853
        %3946 = vst [vmem:[%s3663 + $0x8d0] sm:$0xff] %v3276
        %3947 = vst [vmem:[%s3663 + $0x8d8] sm:$0xff] %v3278
        %3948 = vst [vmem:[%s3663 + $0x8e0] sm:$0xff] %v3645
        %3949 = vst [vmem:[%s3663 + $0x8e8] sm:$0xff] %v2857
        %3950 = vst [vmem:[%s3663 + $0x8f0] sm:$0xff] %v2859
        %3951 = vst [vmem:[%s3663 + $0x8f8] sm:$0xff] %v3282
        %3952 = vst [vmem:[%s3663 + $0x900] sm:$0xff] %v3284
        %3953 = vst [vmem:[%s3663 + $0x908] sm:$0xff] %v3650
        %3954 = vst [vmem:[%s3663 + $0x910] sm:$0xff] %v2863
        %3955 = vst [vmem:[%s3663 + $0x918] sm:$0xff] %v2865
        %3956 = vst [vmem:[%s3663 + $0x920] sm:$0xff] %v3288
        %3957 = vst [vmem:[%s3663 + $0x928] sm:$0xff] %v3290
        %3958 = vst [vmem:[%s3663 + $0x930] sm:$0xff] %v3655
        %3959 = vst [vmem:[%s3663 + $0x938] sm:$0xff] %v2869
        %3960 = vst [vmem:[%s3663 + $0x940] sm:$0xff] %v2871
        %3961 = vst [vmem:[%s3663 + $0x948] sm:$0xff] %v3294
        %3962 = vst [vmem:[%s3663 + $0x950] sm:$0xff] %v3296
        %3963 = vst [vmem:[%s3663 + $0x958] sm:$0xff] %v3660
        %s3964 = sand.u32 %s97, 1
        %s3965 = scalar_lea.sflag [#allocation4], %s3964
        %s3966 = sand.u32 %s97, 1
        %s3967 = smul.addr %s3966, 4800
        %s3968 = scalar_lea.vmem [#allocation7], %s3967
        // Predicated region
        $region41: #{tpu_custom_call.1} parent=31 // pred_check
          %p3969 = pneg %p107
        $region42: #{tpu_custom_call.1} parent=31 // pred_check_branch
          %3971 = sbr.rel (%p3969) target = $region44
        $region43: #{tpu_custom_call.1} parent=31 // pred_region
          %s3972 = smul.u32 2, %s21
          %s3974 = ssub.s32 76800, 76800
          %3975 = vsyncadd %s3965, %s3974
          %s3976 = smul.addr %s3972, 300
          %s3977 = smul.addr %s3976, 128
          %s3978 = scalar_lea.hbm %s3, %s3977
          %s3979 = sshll.u32 %s3968, 4
          %s3980 = int_to_ptr.vmem [resolvable:$true] %s3979
          %3985 = dma.vmem_to_hbm [thread:$0]  %s3980, 76800, %s3978, %s3965, 640, 640, 40
        $region44: #{tpu_custom_call.1} parent=31 // pred_fallthru
          _
      $region32: #{tpu_custom_call.1} parent=5 // pred_fallthru
        _
      %p3986 = scmp.le.s32.totalorder 2, %s16
      // Predicated region
      $region45: #{tpu_custom_call.1} parent=5 // pred_check
        %p3987 = pneg %p3986
      $region46: #{tpu_custom_call.1} parent=5 // pred_check_branch
        %3989 = sbr.rel (%p3987) target = $region48
      $region47: #{tpu_custom_call.1} parent=5 // pred_region
        %s3990 = ssub.s32 %s16, 2
        // Predicated region
        $region49: #{tpu_custom_call.1} parent=47 // pred_check
          %p3991 = pneg %p113
        $region50: #{tpu_custom_call.1} parent=47 // pred_check_branch
          %3993 = sbr.rel (%p3991) target = $region52
        $region51: #{tpu_custom_call.1} parent=47 // pred_region
          %s3994 = sand.u32 %s98, 1
          %s3995 = scalar_lea.sflag [#allocation4], %s3994
          %s3996 = sand.u32 %s98, 1
          %s3997 = smul.addr %s3996, 4800
          %s3998 = scalar_lea.vmem [#allocation7], %s3997
          %3999 = dma.done %s3995, 76800
        $region52: #{tpu_custom_call.1} parent=47 // pred_fallthru
          _
      $region48: #{tpu_custom_call.1} parent=5 // pred_fallthru
        _
    $region6: #{tpu_custom_call.1} parent=1 // loop_footer
      %s20 = sadd.s32 1, %s16
    $region7: #{tpu_custom_call.1} parent=1 // loop_footer_branch
      %15 = sbr.rel target = $region3
    $region8: #{tpu_custom_call.1} parent=1 // loop_exit
      _
    %4000 = vsyncpa [#allocation3], 1
    %s4001 = scalar_lea.sflag [#allocation3], 1
    %4002 = vsyncpa %s4001, 1
    %4003 = vsyncpa [#allocation6], 1
    %4004 = vsyncpa [#allocation4], 1
    %s4005 = scalar_lea.sflag [#allocation4], 1
    %4006 = vsyncpa %s4005, 1

</llo_original>
